<compile_context>
chip_gen: v7x
topology: tpu7x:2x2x1
jax: 0.10.0
libtpu: 0.0.40
codegen_flags: <defaults>
</compile_context>

<pallas_src>
import functools

import jax
import jax.numpy as jnp
import numpy as np
from jax import lax
from jax.experimental import pallas as pl
from jax.experimental.pallas import tpu as pltpu

DT = 0.01      # module default dt
GAMMA = 0.9    # BRF refractory decay
THETA = 1.0    # BRF base threshold


def _round_up(x, m):
    return ((x + m - 1) // m) * m


def _cdiv(a, b):
    return -(-a // b)


def _pad_to(a, shape):
    return jnp.pad(a, [(0, s - d) for d, s in zip(a.shape, shape)])


def _vmem_capacity_bytes():
    try:
        return int(pltpu.get_tpu_info().vmem_capacity_bytes)
    except Exception:
        return 64 << 20  # conservative (v7x); v5e/v6e have 128 MiB physical


def _pick_time_chunk(T, bblk, I, HP, OP, budget_bytes, z_item, w_item,
                     requested, weight_buffers):
    """Largest time chunk whose VMEM residency fits the budget."""
    weights = 4 * I * HP + w_item * HP * HP + w_item * HP * OP + 8 * HP + 4 * OP
    fixed = weight_buffers * weights                      # weight residency
    fixed += bblk * (z_item * HP + 16 * HP + 4 * OP)      # z,u,v,q,spk,ou scratch
    fixed += 2 * bblk * (12 * HP + 4 * OP)                # final-state out blocks (x2 buffers)
    # per-Tc: xw (f32) + zh (z dtype) scratch + double-buffered x / out chunks
    per_tc = bblk * (4 * HP + z_item * HP + 8 * I + 8 * OP)
    tc = (budget_bytes - fixed) // per_tc
    return int(max(1, min(tc, requested, T)))


def _brf_rsnn_kernel(x_ref, wx_ref, wz_ref, wo_ref, omega_ref, pb_ref, alpha_ref,
                     outs_ref, zf_ref, uf_ref, ouf_ref, spk_ref,
                     z_sc, u_sc, v_sc, q_sc, ou_sc, spk_sc, xw_sc, zh_sc,
                     *, tc, rem, bblk, unroll, precision):
    c = pl.program_id(1)
    z_dtype = z_sc.dtype

    @pl.when(c == 0)
    def _init():
        z_sc[...] = jnp.zeros_like(z_sc)
        u_sc[...] = jnp.zeros_like(u_sc)
        v_sc[...] = jnp.zeros_like(v_sc)
        q_sc[...] = jnp.zeros_like(q_sc)
        ou_sc[...] = jnp.zeros_like(ou_sc)
        spk_sc[...] = jnp.zeros_like(spk_sc)

    omega = omega_ref[...]        # (1, HP)  == |omega|
    pb = pb_ref[...]              # (1, HP)  == p(omega) - |b_offset|
    wz = wz_ref[...]              # (HP, HP)
    alpha = alpha_ref[...]        # (1, OP)  == exp(-dt / tau)
    one_m_alpha = 1.0 - alpha

    def process_chunk(n_steps):
        rows = n_steps * bblk
        n_unroll = max(1, min(unroll, n_steps))

        # ---- hoisted, chunk-level input projection: one (rows, I) @ (I, H) matmul.
        xw_sc[pl.ds(0, rows), :] = jnp.dot(
            x_ref[pl.ds(0, rows), :], wx_ref[...],
            precision=precision, preferred_element_type=jnp.float32)

        # ---- sequential BRF recurrence (only z @ Wz stays in the loop).
        def brf_step(s, carry):
            z, u, v, q = carry
            row = pl.multiple_of(s * bblk, bblk)
            i_t = xw_sc[pl.ds(row, bblk), :] + jnp.dot(
                z, wz, precision=precision, preferred_element_type=jnp.float32)
            b = pb - q
            u_new = u + DT * (b * u - omega * v + i_t)
            v_new = v + DT * (omega * u + b * v)
            z_new = (u_new - (THETA + q) > 0.0).astype(jnp.float32)
            q_new = GAMMA * q + z_new
            z_out = z_new.astype(z_dtype)
            zh_sc[pl.ds(row, bblk), :] = z_out
            return z_out, u_new, v_new, q_new

        z, u, v, q = lax.fori_loop(
            0, n_steps, brf_step,
            (z_sc[...], u_sc[...], v_sc[...], q_sc[...]),
            unroll=n_unroll)
        z_sc[...] = z
        u_sc[...] = u
        v_sc[...] = v
        q_sc[...] = q

        # ---- batched output projection, written straight into the lane-dense
        #      output block (no oc_sc scratch / extra VMEM copy).
        outs_ref[pl.ds(0, rows), :] = jnp.dot(
            zh_sc[pl.ds(0, rows), :], wo_ref[...],
            precision=precision, preferred_element_type=jnp.float32)

        # ---- cheap in-place LI scan + per-chunk spike reduction (off the
        #      recurrent critical path).
        def post_step(s, carry):
            ou, spk = carry
            row = pl.multiple_of(s * bblk, bblk)
            ou_new = alpha * ou + one_m_alpha * outs_ref[pl.ds(row, bblk), :]
            outs_ref[pl.ds(row, bblk), :] = ou_new
            spk_new = spk + zh_sc[pl.ds(row, bblk), :].astype(jnp.float32)
            return ou_new, spk_new

        ou, spk = lax.fori_loop(
            0, n_steps, post_step, (ou_sc[...], spk_sc[...]), unroll=n_unroll)
        ou_sc[...] = ou
        spk_sc[...] = spk

    if rem == tc:
        process_chunk(tc)
    else:
        @pl.when(c < pl.num_programs(1) - 1)
        def _full():
            process_chunk(tc)

        @pl.when(c == pl.num_programs(1) - 1)
        def _partial():
            process_chunk(rem)   # statically-sized partial last chunk

    @pl.when(c == pl.num_programs(1) - 1)
    def _finalize():
        zf_ref[...] = z_sc[...].astype(jnp.float32)
        uf_ref[...] = u_sc[...]
        ouf_ref[...] = ou_sc[...]
        spk_ref[...] = spk_sc[...]


def brf_rsnn_forward(x, params, *, spike_del_p=0.0, time_chunk=64,
                     batch_blocks=1, compute_dtype=jnp.bfloat16):
    """x: (T, B, I) float32.  Returns (outputs, ((hidden_z, hidden_u), out_u), num_spikes).

    batch_blocks > 1 adds a leading "parallel" grid axis over batch blocks
    (useful on v7x's 2 TensorCores).  compute_dtype=float32 keeps z/Wz/Wo in
    f32 and uses Precision.HIGHEST dots for exact parity with an f32 model.
    """
    if spike_del_p > 0.0:
        # TODO(synk): stochastic spike deletion (mask_prob > 0) not implemented.
        raise NotImplementedError("spike_del_p > 0 (mask_prob) is not supported")

    T, B, I = x.shape
    wx, wz, wo, omega_p, boff_p, tau = params
    H = wz.shape[0]
    O = wo.shape[1]

    HP = _round_up(H, 128)    # lane alignment
    OP = _round_up(O, 128)
    # bf16 z-history packs 16 sublanes per vreg -> keep batch blocks 16-aligned.
    Bblk = _round_up(_cdiv(B, max(1, batch_blocks)), 16)
    n_bb = _cdiv(B, Bblk)
    BPtot = n_bb * Bblk

    use_bf16 = jnp.dtype(compute_dtype) == jnp.dtype(jnp.bfloat16)
    z_dtype = jnp.bfloat16 if use_bf16 else jnp.float32
    precision = None if use_bf16 else lax.Precision.HIGHEST

    # ---- loop-invariant parameter precomputation (done once, in XLA).
    omega = jnp.abs(omega_p)
    boff = jnp.abs(boff_p)
    p_om = (-1.0 + jnp.sqrt(jnp.maximum(1.0 - jnp.square(DT * omega), 0.0))) / DT
    pb = p_om - boff                    # (1, H)
    alpha = jnp.exp(-DT / tau)          # (1, O)

    cap = _vmem_capacity_bytes()
    budget = int(cap * 0.6)
    vmem_limit = int(min(cap * 0.9, budget + (8 << 20)))

    # unroll capped by hidden width to bound vreg pressure inside the serial loop.
    if HP <= 512:
        base_unroll = 8
    elif HP <= 1024:
        base_unroll = 4
    else:
        base_unroll = 2

    def _run(single_buffer_weights):
        weight_buffers = 1 if single_buffer_weights else 2
        Tc = _pick_time_chunk(T, Bblk, I, HP, OP, budget,
                              z_item=jnp.dtype(z_dtype).itemsize,
                              w_item=jnp.dtype(z_dtype).itemsize,
                              requested=time_chunk,
                              weight_buffers=weight_buffers)
        n_chunks = _cdiv(T, Tc)
        Tpad = n_chunks * Tc
        rem = T - (n_chunks - 1) * Tc          # steps in the (possibly partial) last chunk
        unroll = max(1, min(base_unroll, Tc))

        # ---- pad + reorder: rows are (batch_block, time, batch_in_block)-major.
        xp = jnp.pad(x, ((0, Tpad - T), (0, BPtot - B), (0, 0)))
        x2d = jnp.transpose(xp.reshape(Tpad, n_bb, Bblk, I),
                            (1, 0, 2, 3)).reshape(n_bb * Tpad * Bblk, I)
        wx_p = _pad_to(wx, (I, HP))
        wz_p = _pad_to(wz, (HP, HP)).astype(z_dtype)
        wo_p = _pad_to(wo, (HP, OP)).astype(z_dtype)
        omega_pd = _pad_to(omega, (1, HP))
        pb_pd = _pad_to(pb, (1, HP))
        alpha_pd = _pad_to(alpha, (1, OP))

        kernel = functools.partial(_brf_rsnn_kernel, tc=Tc, rem=rem, bblk=Bblk,
                                   unroll=unroll, precision=precision)

        # single-buffer the loop-invariant operands (never re-fetched across chunks)
        wmode = {"pipeline_mode": pl.Buffered(1)} if single_buffer_weights else {}

        def x_map(b, c):
            return (b * n_chunks + c, 0)

        def w_map(b, c):
            return (0, 0)

        def s_map(b, c):
            return (b, 0)

        grid_spec = pltpu.PrefetchScalarGridSpec(
            num_scalar_prefetch=0,
            grid=(n_bb, n_chunks),
            in_specs=[
                pl.BlockSpec((Tc * Bblk, I), x_map),             # x chunk (flattened)
                pl.BlockSpec((I, HP), w_map, **wmode),           # Wx
                pl.BlockSpec((HP, HP), w_map, **wmode),          # Wz
                pl.BlockSpec((HP, OP), w_map, **wmode),          # Wo
                pl.BlockSpec((1, HP), w_map, **wmode),           # |omega|
                pl.BlockSpec((1, HP), w_map, **wmode),           # p(omega) - |b_off|
                pl.BlockSpec((1, OP), w_map, **wmode),           # alpha
            ],
            out_specs=[
                pl.BlockSpec((Tc * Bblk, OP), x_map),            # stacked out_u
                pl.BlockSpec((Bblk, HP), s_map),                 # final hidden_z
                pl.BlockSpec((Bblk, HP), s_map),                 # final hidden_u
                pl.BlockSpec((Bblk, OP), s_map),                 # final out_u
                pl.BlockSpec((Bblk, HP), s_map),                 # per-neuron spike count
            ],
            scratch_shapes=[
                pltpu.VMEM((Bblk, HP), z_dtype),          # z
                pltpu.VMEM((Bblk, HP), jnp.float32),      # u
                pltpu.VMEM((Bblk, HP), jnp.float32),      # v
                pltpu.VMEM((Bblk, HP), jnp.float32),      # q
                pltpu.VMEM((Bblk, OP), jnp.float32),      # out_u
                pltpu.VMEM((Bblk, HP), jnp.float32),      # spike accumulator
                pltpu.VMEM((Tc * Bblk, HP), jnp.float32), # x @ Wx for the chunk
                pltpu.VMEM((Tc * Bblk, HP), z_dtype),     # z history for the chunk
            ],
        )

        out_shapes = (
            jax.ShapeDtypeStruct((n_bb * Tpad * Bblk, OP), jnp.float32),
            jax.ShapeDtypeStruct((n_bb * Bblk, HP), jnp.float32),
            jax.ShapeDtypeStruct((n_bb * Bblk, HP), jnp.float32),
            jax.ShapeDtypeStruct((n_bb * Bblk, OP), jnp.float32),
            jax.ShapeDtypeStruct((n_bb * Bblk, HP), jnp.float32),
        )

        outs2d, zf, uf, ouf, spk = pl.pallas_call(
            kernel,
            grid_spec=grid_spec,
            out_shape=out_shapes,
            compiler_params=pltpu.CompilerParams(
                dimension_semantics=("parallel", "arbitrary"),
                vmem_limit_bytes=vmem_limit),
        )(x2d, wx_p, wz_p, wo_p, omega_pd, pb_pd, alpha_pd)

        outputs = jnp.transpose(
            outs2d.reshape(n_bb, Tpad, Bblk, OP),
            (1, 0, 2, 3)).reshape(Tpad, BPtot, OP)[:T, :B, :O]
        hz = zf[:B, :H]
        hu = uf[:B, :H]
        ou = ouf[:B, :O]
        num_spikes = jnp.sum(spk[:B, :H])
        return outputs, ((hz, hu), ou), num_spikes

    try:
        return _run(True)
    except Exception:
        # pl.Buffered(1) unavailable on this version: fall back to the default
        # double-buffered specs (Tc is re-derived with the larger footprint).
        return _run(False)


def init_params(key, input_size, hidden_size, output_size):
    """Deterministic synthetic parameters matching the module's __init__ shapes."""
    k1, k2, k3, k4, k5 = jax.random.split(key, 5)
    fan_in_h = input_size + hidden_size
    bound_h = 1.0 / np.sqrt(fan_in_h)
    # hidden Linear weight: (H, I+H), no bias (hidden_bias=False default)
    w_hidden = jax.random.uniform(k1, (hidden_size, fan_in_h), jnp.float32,
                                  -bound_h, bound_h)
    wx = jnp.transpose(w_hidden[:, :input_size])   # (I, H)
    wz = jnp.transpose(w_hidden[:, input_size:])   # (H, H)
    # adaptive omega ~ U(5, 10), adaptive b_offset ~ U(0, 1)
    omega = jax.random.uniform(k2, (1, hidden_size), jnp.float32, 5.0, 10.0)
    boff = jax.random.uniform(k3, (1, hidden_size), jnp.float32, 0.0, 1.0)
    # output Linear weight: (O, H), no bias (output_bias=False default)
    bound_o = 1.0 / np.sqrt(hidden_size)
    wo = jnp.transpose(jax.random.uniform(k4, (output_size, hidden_size),
                                          jnp.float32, -bound_o, bound_o))  # (H, O)
    # adaptive tau_mem ~ N(20, 5)
    tau = 20.0 + 5.0 * jax.random.normal(k5, (1, output_size), jnp.float32)
    return wx, wz, wo, omega, boff, tau


def reference_forward(x, params):
    """Pure-JAX reference (plain per-step loop, full-f32 HIGHEST matmuls)."""
    wx, wz, wo, omega_p, boff_p, tau = params
    T, B, _ = x.shape
    H = wz.shape[0]
    O = wo.shape[1]
    omega = jnp.abs(omega_p)
    boff = jnp.abs(boff_p)
    p_om = (-1.0 + jnp.sqrt(jnp.maximum(1.0 - jnp.square(DT * omega), 0.0))) / DT
    pb = p_om - boff
    alpha = jnp.exp(-DT / tau)
    hp = jax.lax.Precision.HIGHEST
    z = jnp.zeros((B, H), jnp.float32)
    u = jnp.zeros((B, H), jnp.float32)
    v = jnp.zeros((B, H), jnp.float32)
    q = jnp.zeros((B, H), jnp.float32)
    ou = jnp.zeros((B, O), jnp.float32)
    outs = []
    ns = 0.0
    for t in range(T):
        i_t = (jnp.dot(x[t], wx, precision=hp) + jnp.dot(z, wz, precision=hp))
        b = pb - q
        u_new = u + DT * (b * u - omega * v + i_t)
        v_new = v + DT * (omega * u + b * v)
        z_new = (u_new - (THETA + q) > 0.0).astype(jnp.float32)
        q = GAMMA * q + z_new
        z, u, v = z_new, u_new, v_new
        ns = ns + jnp.sum(z_new)
        ou = alpha * ou + (1.0 - alpha) * jnp.dot(z_new, wo, precision=hp)
        outs.append(ou)
    return jnp.stack(outs), ((z, u), ou), ns


if __name__ == "__main__":
    I, H, O = 16, 32, 10

    def _quantize(a, scale):
        # keep test data exactly representable in bf16 so MXU passes are exact
        # and the hard spike threshold is numerically robust.
        return jnp.round(a * scale) / scale

    def _make_case(seed, T, B):
        kx, kp = jax.random.split(jax.random.PRNGKey(seed))
        # integer-valued inputs (|x| <= 120) so every matmul partial sum is exact
        x = jnp.round(jnp.clip(100.0 * jax.random.normal(kx, (T, B, I), jnp.float32),
                               -120.0, 120.0))
        wx, wz, wo, omega, boff, tau = init_params(kp, I, H, O)
        params = (_quantize(wx, 64.0), _quantize(wz, 64.0), _quantize(wo, 64.0),
                  omega, boff, tau)
        return x, params

    def _check(out, ref):
        o, ((hz, hu), ou), ns = out
        ro, ((rhz, rhu), rou), rns = ref
        np.testing.assert_allclose(np.asarray(o), np.asarray(ro),
                                   rtol=1e-4, atol=1e-5)
        np.testing.assert_allclose(np.asarray(hz), np.asarray(rhz), atol=1e-5)
        np.testing.assert_allclose(np.asarray(hu), np.asarray(rhu),
                                   rtol=1e-4, atol=1e-4)
        np.testing.assert_allclose(np.asarray(ou), np.asarray(rou),
                                   rtol=1e-4, atol=1e-5)
        np.testing.assert_allclose(float(ns), float(rns), atol=0.5)

    # case 1: bf16 compute path, T divisible by the chunk (2 chunks), 1 batch block
    x1, p1 = _make_case(0, T=8, B=2)
    out1 = brf_rsnn_forward(x1, p1, spike_del_p=0.0, time_chunk=4)
    jax.block_until_ready(out1[0])
    _check(out1, reference_forward(x1, p1))

    # case 2: f32/HIGHEST path, non-divisible T (partial last chunk), 2 batch
    # blocks (parallel grid axis -> v7x megacore)
    x2, p2 = _make_case(1, T=7, B=20)
    out2 = brf_rsnn_forward(x2, p2, spike_del_p=0.0, time_chunk=4,
                            batch_blocks=2, compute_dtype=jnp.float32)
    jax.block_until_ready(out2[0])
    _check(out2, reference_forward(x2, p2))

    print("KERNEL_OK")
</pallas_src>

<mosaic_0001>
module attributes {stable_mosaic.version = 11 : i64} {
  func.func @_brf_rsnn_kernel(%arg0: i32, %arg1: i32, %arg2: memref<64x16xf32, #tpu.memory_space<vmem>>, %arg3: memref<16x128xf32, #tpu.memory_space<vmem>>, %arg4: memref<128x128xbf16, #tpu.memory_space<vmem>>, %arg5: memref<128x128xbf16, #tpu.memory_space<vmem>>, %arg6: memref<1x128xf32, #tpu.memory_space<vmem>>, %arg7: memref<1x128xf32, #tpu.memory_space<vmem>>, %arg8: memref<1x128xf32, #tpu.memory_space<vmem>>, %arg9: memref<64x128xf32, #tpu.memory_space<vmem>>, %arg10: memref<16x128xf32, #tpu.memory_space<vmem>>, %arg11: memref<16x128xf32, #tpu.memory_space<vmem>>, %arg12: memref<16x128xf32, #tpu.memory_space<vmem>>, %arg13: memref<16x128xf32, #tpu.memory_space<vmem>>, %arg14: memref<16x128xbf16, #tpu.memory_space<vmem>>, %arg15: memref<16x128xf32, #tpu.memory_space<vmem>>, %arg16: memref<16x128xf32, #tpu.memory_space<vmem>>, %arg17: memref<16x128xf32, #tpu.memory_space<vmem>>, %arg18: memref<16x128xf32, #tpu.memory_space<vmem>>, %arg19: memref<16x128xf32, #tpu.memory_space<vmem>>, %arg20: memref<64x128xf32, #tpu.memory_space<vmem>>, %arg21: memref<64x128xbf16, #tpu.memory_space<vmem>>) attributes {dimension_semantics = [#tpu.dimension_semantics<parallel>, #tpu.dimension_semantics<arbitrary>], iteration_bounds = array<i64: 1, 2>, scalar_prefetch = 0 : i64, scratch_operands = 8 : i64, tpu.core_type = #tpu.core_type<tc>, window_params = [{transform_indices = @transform_0, window_bounds = array<i64: 64, 16>}, {pipeline_mode = #tpu.pipeline_mode<synchronous>, transform_indices = @transform_1, window_bounds = array<i64: 16, 128>}, {pipeline_mode = #tpu.pipeline_mode<synchronous>, transform_indices = @transform_2, window_bounds = array<i64: 128, 128>}, {pipeline_mode = #tpu.pipeline_mode<synchronous>, transform_indices = @transform_3, window_bounds = array<i64: 128, 128>}, {pipeline_mode = #tpu.pipeline_mode<synchronous>, transform_indices = @transform_4, window_bounds = array<i64: 1, 128>}, {pipeline_mode = #tpu.pipeline_mode<synchronous>, transform_indices = @transform_5, window_bounds = array<i64: 1, 128>}, {pipeline_mode = #tpu.pipeline_mode<synchronous>, transform_indices = @transform_6, window_bounds = array<i64: 1, 128>}, {transform_indices = @transform_7, window_bounds = array<i64: 64, 128>}, {transform_indices = @transform_8, window_bounds = array<i64: 16, 128>}, {transform_indices = @transform_9, window_bounds = array<i64: 16, 128>}, {transform_indices = @transform_10, window_bounds = array<i64: 16, 128>}, {transform_indices = @transform_11, window_bounds = array<i64: 16, 128>}]} {
    %c0_i32 = arith.constant 0 : i32
    %0 = arith.cmpi eq, %arg1, %c0_i32 : i32
    %1 = arith.extui %0 : i1 to i32
    %c0_i32_0 = arith.constant 0 : i32
    %2 = arith.cmpi ne, %1, %c0_i32_0 : i32
    scf.if %2 {
      %cst_105 = arith.constant 0.000000e+00 : bf16
      %236 = vector.broadcast %cst_105 : bf16 to vector<16x128xbf16>
      %c0_106 = arith.constant 0 : index
      %c0_107 = arith.constant 0 : index
      %237 = vector.load %arg14[%c0_106, %c0_107] : memref<16x128xbf16, #tpu.memory_space<vmem>>, vector<16x128xbf16>
      tpu.vector_store %arg14[%c0_106, %c0_107], %236 {strides = array<i32>} : memref<16x128xbf16, #tpu.memory_space<vmem>>, vector<16x128xbf16>,
      %cst_108 = arith.constant 0.000000e+00 : f32
      %238 = vector.broadcast %cst_108 : f32 to vector<16x128xf32>
      %c0_109 = arith.constant 0 : index
      %c0_110 = arith.constant 0 : index
      %239 = vector.load %arg15[%c0_109, %c0_110] : memref<16x128xf32, #tpu.memory_space<vmem>>, vector<16x128xf32>
      tpu.vector_store %arg15[%c0_109, %c0_110], %238 {strides = array<i32>} : memref<16x128xf32, #tpu.memory_space<vmem>>, vector<16x128xf32>,
      %cst_111 = arith.constant 0.000000e+00 : f32
      %240 = vector.broadcast %cst_111 : f32 to vector<16x128xf32>
      %c0_112 = arith.constant 0 : index
      %c0_113 = arith.constant 0 : index
      %241 = vector.load %arg16[%c0_112, %c0_113] : memref<16x128xf32, #tpu.memory_space<vmem>>, vector<16x128xf32>
      tpu.vector_store %arg16[%c0_112, %c0_113], %240 {strides = array<i32>} : memref<16x128xf32, #tpu.memory_space<vmem>>, vector<16x128xf32>,
      %cst_114 = arith.constant 0.000000e+00 : f32
      %242 = vector.broadcast %cst_114 : f32 to vector<16x128xf32>
      %c0_115 = arith.constant 0 : index
      %c0_116 = arith.constant 0 : index
      %243 = vector.load %arg17[%c0_115, %c0_116] : memref<16x128xf32, #tpu.memory_space<vmem>>, vector<16x128xf32>
      tpu.vector_store %arg17[%c0_115, %c0_116], %242 {strides = array<i32>} : memref<16x128xf32, #tpu.memory_space<vmem>>, vector<16x128xf32>,
      %cst_117 = arith.constant 0.000000e+00 : f32
      %244 = vector.broadcast %cst_117 : f32 to vector<16x128xf32>
      %c0_118 = arith.constant 0 : index
      %c0_119 = arith.constant 0 : index
      %245 = vector.load %arg18[%c0_118, %c0_119] : memref<16x128xf32, #tpu.memory_space<vmem>>, vector<16x128xf32>
      tpu.vector_store %arg18[%c0_118, %c0_119], %244 {strides = array<i32>} : memref<16x128xf32, #tpu.memory_space<vmem>>, vector<16x128xf32>,
      %cst_120 = arith.constant 0.000000e+00 : f32
      %246 = vector.broadcast %cst_120 : f32 to vector<16x128xf32>
      %c0_121 = arith.constant 0 : index
      %c0_122 = arith.constant 0 : index
      %247 = vector.load %arg19[%c0_121, %c0_122] : memref<16x128xf32, #tpu.memory_space<vmem>>, vector<16x128xf32>
      tpu.vector_store %arg19[%c0_121, %c0_122], %246 {strides = array<i32>} : memref<16x128xf32, #tpu.memory_space<vmem>>, vector<16x128xf32>,
    } else {
    }
    %c0 = arith.constant 0 : index
    %c0_1 = arith.constant 0 : index
    %3 = vector.load %arg6[%c0, %c0_1] : memref<1x128xf32, #tpu.memory_space<vmem>>, vector<1x128xf32>
    %c0_2 = arith.constant 0 : index
    %c0_3 = arith.constant 0 : index
    %4 = vector.load %arg7[%c0_2, %c0_3] : memref<1x128xf32, #tpu.memory_space<vmem>>, vector<1x128xf32>
    %c0_4 = arith.constant 0 : index
    %c0_5 = arith.constant 0 : index
    %5 = vector.load %arg4[%c0_4, %c0_5] : memref<128x128xbf16, #tpu.memory_space<vmem>>, vector<128x128xbf16>
    %c0_6 = arith.constant 0 : index
    %c0_7 = arith.constant 0 : index
    %6 = vector.load %arg8[%c0_6, %c0_7] : memref<1x128xf32, #tpu.memory_space<vmem>>, vector<1x128xf32>
    %cst = arith.constant 1.000000e+00 : f32
    %7 = vector.broadcast %cst : f32 to vector<1x128xf32>
    %8 = arith.subf %7, %6 : vector<1x128xf32>
    %c0_8 = arith.constant 0 : index
    %c0_9 = arith.constant 0 : index
    %9 = vector.load %arg2[%c0_8, %c0_9] : memref<64x16xf32, #tpu.memory_space<vmem>>, vector<64x16xf32>
    %c0_10 = arith.constant 0 : index
    %c0_11 = arith.constant 0 : index
    %10 = vector.load %arg3[%c0_10, %c0_11] : memref<16x128xf32, #tpu.memory_space<vmem>>, vector<16x128xf32>
    %cst_12 = arith.constant dense<0.000000e+00> : vector<64x128xf32>
    %11 = tpu.matmul %9, %10, %cst_12 {dimension_numbers = #tpu.dot_dimension_numbers<[1], [0], [0], [1], [0, 0, 1, 1], [], []>} : vector<64x16xf32>, vector<16x128xf32>, vector<64x128xf32> -> vector<64x128xf32>
    %c0_13 = arith.constant 0 : index
    %c0_14 = arith.constant 0 : index
    %12 = vector.load %arg20[%c0_13, %c0_14] : memref<64x128xf32, #tpu.memory_space<vmem>>, vector<64x128xf32>
    tpu.vector_store %arg20[%c0_13, %c0_14], %11 {strides = array<i32>} : memref<64x128xf32, #tpu.memory_space<vmem>>, vector<64x128xf32>,
    %c0_15 = arith.constant 0 : index
    %c0_16 = arith.constant 0 : index
    %13 = vector.load %arg14[%c0_15, %c0_16] : memref<16x128xbf16, #tpu.memory_space<vmem>>, vector<16x128xbf16>
    %c0_17 = arith.constant 0 : index
    %c0_18 = arith.constant 0 : index
    %14 = vector.load %arg15[%c0_17, %c0_18] : memref<16x128xf32, #tpu.memory_space<vmem>>, vector<16x128xf32>
    %c0_19 = arith.constant 0 : index
    %c0_20 = arith.constant 0 : index
    %15 = vector.load %arg16[%c0_19, %c0_20] : memref<16x128xf32, #tpu.memory_space<vmem>>, vector<16x128xf32>
    %c0_21 = arith.constant 0 : index
    %c0_22 = arith.constant 0 : index
    %16 = vector.load %arg17[%c0_21, %c0_22] : memref<16x128xf32, #tpu.memory_space<vmem>>, vector<16x128xf32>
    %c0_i32_23 = arith.constant 0 : i32
    %c16_i32 = arith.constant 16 : i32
    %17 = arith.muli %c0_i32_23, %c16_i32 : i32
    %18 = tpu.assume_multiple %17, 16 : i32
    %19 = arith.index_cast %18 : i32 to index
    %c0_24 = arith.constant 0 : index
    %20 = vector.load %arg20[%19, %c0_24] : memref<64x128xf32, #tpu.memory_space<vmem>>, vector<16x128xf32>
    %cst_25 = arith.constant dense<0.000000e+00> : vector<16x128xf32>
    %21 = tpu.matmul %13, %5, %cst_25 {dimension_numbers = #tpu.dot_dimension_numbers<[1], [0], [0], [1], [0, 0, 1, 1], [], []>} : vector<16x128xbf16>, vector<128x128xbf16>, vector<16x128xf32> -> vector<16x128xf32>
    %22 = arith.addf %20, %21 : vector<16x128xf32>
    %23 = vector.broadcast %4 : vector<1x128xf32> to vector<16x128xf32>
    %24 = arith.subf %23, %16 : vector<16x128xf32>
    %25 = arith.mulf %24, %14 : vector<16x128xf32>
    %26 = vector.broadcast %3 : vector<1x128xf32> to vector<16x128xf32>
    %27 = arith.mulf %26, %15 : vector<16x128xf32>
    %28 = arith.subf %25, %27 : vector<16x128xf32>
    %29 = arith.addf %28, %22 : vector<16x128xf32>
    %cst_26 = arith.constant 0.00999999977 : f32
    %30 = vector.broadcast %cst_26 : f32 to vector<16x128xf32>
    %31 = arith.mulf %30, %29 : vector<16x128xf32>
    %32 = arith.addf %14, %31 : vector<16x128xf32>
    %33 = vector.broadcast %3 : vector<1x128xf32> to vector<16x128xf32>
    %34 = arith.mulf %33, %14 : vector<16x128xf32>
    %35 = arith.mulf %24, %15 : vector<16x128xf32>
    %36 = arith.addf %34, %35 : vector<16x128xf32>
    %cst_27 = arith.constant 0.00999999977 : f32
    %37 = vector.broadcast %cst_27 : f32 to vector<16x128xf32>
    %38 = arith.mulf %37, %36 : vector<16x128xf32>
    %39 = arith.addf %15, %38 : vector<16x128xf32>
    %cst_28 = arith.constant 1.000000e+00 : f32
    %40 = vector.broadcast %cst_28 : f32 to vector<16x128xf32>
    %41 = arith.addf %40, %16 : vector<16x128xf32>
    %42 = arith.subf %32, %41 : vector<16x128xf32>
    %cst_29 = arith.constant 0.000000e+00 : f32
    %43 = vector.broadcast %cst_29 : f32 to vector<16x128xf32>
    %44 = arith.cmpf ogt, %42, %43 : vector<16x128xf32>
    %45 = arith.extui %44 : vector<16x128xi1> to vector<16x128xi32>
    %46 = arith.sitofp %45 : vector<16x128xi32> to vector<16x128xf32>
    %cst_30 = arith.constant 0.899999976 : f32
    %47 = vector.broadcast %cst_30 : f32 to vector<16x128xf32>
    %48 = arith.mulf %47, %16 : vector<16x128xf32>
    %49 = arith.addf %48, %46 : vector<16x128xf32>
    %50 = arith.truncf %46 : vector<16x128xf32> to vector<16x128xbf16>
    %51 = arith.index_cast %18 : i32 to index
    %c0_31 = arith.constant 0 : index
    %52 = vector.load %arg21[%51, %c0_31] : memref<64x128xbf16, #tpu.memory_space<vmem>>, vector<16x128xbf16>
    tpu.vector_store %arg21[%51, %c0_31], %50 {strides = array<i32>} : memref<64x128xbf16, #tpu.memory_space<vmem>>, vector<16x128xbf16>,
    %c1_i32 = arith.constant 1 : i32
    %c16_i32_32 = arith.constant 16 : i32
    %53 = arith.muli %c1_i32, %c16_i32_32 : i32
    %54 = tpu.assume_multiple %53, 16 : i32
    %55 = arith.index_cast %54 : i32 to index
    %c0_33 = arith.constant 0 : index
    %56 = vector.load %arg20[%55, %c0_33] : memref<64x128xf32, #tpu.memory_space<vmem>>, vector<16x128xf32>
    %cst_34 = arith.constant dense<0.000000e+00> : vector<16x128xf32>
    %57 = tpu.matmul %50, %5, %cst_34 {dimension_numbers = #tpu.dot_dimension_numbers<[1], [0], [0], [1], [0, 0, 1, 1], [], []>} : vector<16x128xbf16>, vector<128x128xbf16>, vector<16x128xf32> -> vector<16x128xf32>
    %58 = arith.addf %56, %57 : vector<16x128xf32>
    %59 = vector.broadcast %4 : vector<1x128xf32> to vector<16x128xf32>
    %60 = arith.subf %59, %49 : vector<16x128xf32>
    %61 = arith.mulf %60, %32 : vector<16x128xf32>
    %62 = vector.broadcast %3 : vector<1x128xf32> to vector<16x128xf32>
    %63 = arith.mulf %62, %39 : vector<16x128xf32>
    %64 = arith.subf %61, %63 : vector<16x128xf32>
    %65 = arith.addf %64, %58 : vector<16x128xf32>
    %cst_35 = arith.constant 0.00999999977 : f32
    %66 = vector.broadcast %cst_35 : f32 to vector<16x128xf32>
    %67 = arith.mulf %66, %65 : vector<16x128xf32>
    %68 = arith.addf %32, %67 : vector<16x128xf32>
    %69 = vector.broadcast %3 : vector<1x128xf32> to vector<16x128xf32>
    %70 = arith.mulf %69, %32 : vector<16x128xf32>
    %71 = arith.mulf %60, %39 : vector<16x128xf32>
    %72 = arith.addf %70, %71 : vector<16x128xf32>
    %cst_36 = arith.constant 0.00999999977 : f32
    %73 = vector.broadcast %cst_36 : f32 to vector<16x128xf32>
    %74 = arith.mulf %73, %72 : vector<16x128xf32>
    %75 = arith.addf %39, %74 : vector<16x128xf32>
    %cst_37 = arith.constant 1.000000e+00 : f32
    %76 = vector.broadcast %cst_37 : f32 to vector<16x128xf32>
    %77 = arith.addf %76, %49 : vector<16x128xf32>
    %78 = arith.subf %68, %77 : vector<16x128xf32>
    %cst_38 = arith.constant 0.000000e+00 : f32
    %79 = vector.broadcast %cst_38 : f32 to vector<16x128xf32>
    %80 = arith.cmpf ogt, %78, %79 : vector<16x128xf32>
    %81 = arith.extui %80 : vector<16x128xi1> to vector<16x128xi32>
    %82 = arith.sitofp %81 : vector<16x128xi32> to vector<16x128xf32>
    %cst_39 = arith.constant 0.899999976 : f32
    %83 = vector.broadcast %cst_39 : f32 to vector<16x128xf32>
    %84 = arith.mulf %83, %49 : vector<16x128xf32>
    %85 = arith.addf %84, %82 : vector<16x128xf32>
    %86 = arith.truncf %82 : vector<16x128xf32> to vector<16x128xbf16>
    %87 = arith.index_cast %54 : i32 to index
    %c0_40 = arith.constant 0 : index
    %88 = vector.load %arg21[%87, %c0_40] : memref<64x128xbf16, #tpu.memory_space<vmem>>, vector<16x128xbf16>
    tpu.vector_store %arg21[%87, %c0_40], %86 {strides = array<i32>} : memref<64x128xbf16, #tpu.memory_space<vmem>>, vector<16x128xbf16>,
    %c2_i32 = arith.constant 2 : i32
    %c16_i32_41 = arith.constant 16 : i32
    %89 = arith.muli %c2_i32, %c16_i32_41 : i32
    %90 = tpu.assume_multiple %89, 16 : i32
    %91 = arith.index_cast %90 : i32 to index
    %c0_42 = arith.constant 0 : index
    %92 = vector.load %arg20[%91, %c0_42] : memref<64x128xf32, #tpu.memory_space<vmem>>, vector<16x128xf32>
    %cst_43 = arith.constant dense<0.000000e+00> : vector<16x128xf32>
    %93 = tpu.matmul %86, %5, %cst_43 {dimension_numbers = #tpu.dot_dimension_numbers<[1], [0], [0], [1], [0, 0, 1, 1], [], []>} : vector<16x128xbf16>, vector<128x128xbf16>, vector<16x128xf32> -> vector<16x128xf32>
    %94 = arith.addf %92, %93 : vector<16x128xf32>
    %95 = vector.broadcast %4 : vector<1x128xf32> to vector<16x128xf32>
    %96 = arith.subf %95, %85 : vector<16x128xf32>
    %97 = arith.mulf %96, %68 : vector<16x128xf32>
    %98 = vector.broadcast %3 : vector<1x128xf32> to vector<16x128xf32>
    %99 = arith.mulf %98, %75 : vector<16x128xf32>
    %100 = arith.subf %97, %99 : vector<16x128xf32>
    %101 = arith.addf %100, %94 : vector<16x128xf32>
    %cst_44 = arith.constant 0.00999999977 : f32
    %102 = vector.broadcast %cst_44 : f32 to vector<16x128xf32>
    %103 = arith.mulf %102, %101 : vector<16x128xf32>
    %104 = arith.addf %68, %103 : vector<16x128xf32>
    %105 = vector.broadcast %3 : vector<1x128xf32> to vector<16x128xf32>
    %106 = arith.mulf %105, %68 : vector<16x128xf32>
    %107 = arith.mulf %96, %75 : vector<16x128xf32>
    %108 = arith.addf %106, %107 : vector<16x128xf32>
    %cst_45 = arith.constant 0.00999999977 : f32
    %109 = vector.broadcast %cst_45 : f32 to vector<16x128xf32>
    %110 = arith.mulf %109, %108 : vector<16x128xf32>
    %111 = arith.addf %75, %110 : vector<16x128xf32>
    %cst_46 = arith.constant 1.000000e+00 : f32
    %112 = vector.broadcast %cst_46 : f32 to vector<16x128xf32>
    %113 = arith.addf %112, %85 : vector<16x128xf32>
    %114 = arith.subf %104, %113 : vector<16x128xf32>
    %cst_47 = arith.constant 0.000000e+00 : f32
    %115 = vector.broadcast %cst_47 : f32 to vector<16x128xf32>
    %116 = arith.cmpf ogt, %114, %115 : vector<16x128xf32>
    %117 = arith.extui %116 : vector<16x128xi1> to vector<16x128xi32>
    %118 = arith.sitofp %117 : vector<16x128xi32> to vector<16x128xf32>
    %cst_48 = arith.constant 0.899999976 : f32
    %119 = vector.broadcast %cst_48 : f32 to vector<16x128xf32>
    %120 = arith.mulf %119, %85 : vector<16x128xf32>
    %121 = arith.addf %120, %118 : vector<16x128xf32>
    %122 = arith.truncf %118 : vector<16x128xf32> to vector<16x128xbf16>
    %123 = arith.index_cast %90 : i32 to index
    %c0_49 = arith.constant 0 : index
    %124 = vector.load %arg21[%123, %c0_49] : memref<64x128xbf16, #tpu.memory_space<vmem>>, vector<16x128xbf16>
    tpu.vector_store %arg21[%123, %c0_49], %122 {strides = array<i32>} : memref<64x128xbf16, #tpu.memory_space<vmem>>, vector<16x128xbf16>,
    %c3_i32 = arith.constant 3 : i32
    %c16_i32_50 = arith.constant 16 : i32
    %125 = arith.muli %c3_i32, %c16_i32_50 : i32
    %126 = tpu.assume_multiple %125, 16 : i32
    %127 = arith.index_cast %126 : i32 to index
    %c0_51 = arith.constant 0 : index
    %128 = vector.load %arg20[%127, %c0_51] : memref<64x128xf32, #tpu.memory_space<vmem>>, vector<16x128xf32>
    %cst_52 = arith.constant dense<0.000000e+00> : vector<16x128xf32>
    %129 = tpu.matmul %122, %5, %cst_52 {dimension_numbers = #tpu.dot_dimension_numbers<[1], [0], [0], [1], [0, 0, 1, 1], [], []>} : vector<16x128xbf16>, vector<128x128xbf16>, vector<16x128xf32> -> vector<16x128xf32>
    %130 = arith.addf %128, %129 : vector<16x128xf32>
    %131 = vector.broadcast %4 : vector<1x128xf32> to vector<16x128xf32>
    %132 = arith.subf %131, %121 : vector<16x128xf32>
    %133 = arith.mulf %132, %104 : vector<16x128xf32>
    %134 = vector.broadcast %3 : vector<1x128xf32> to vector<16x128xf32>
    %135 = arith.mulf %134, %111 : vector<16x128xf32>
    %136 = arith.subf %133, %135 : vector<16x128xf32>
    %137 = arith.addf %136, %130 : vector<16x128xf32>
    %cst_53 = arith.constant 0.00999999977 : f32
    %138 = vector.broadcast %cst_53 : f32 to vector<16x128xf32>
    %139 = arith.mulf %138, %137 : vector<16x128xf32>
    %140 = arith.addf %104, %139 : vector<16x128xf32>
    %141 = vector.broadcast %3 : vector<1x128xf32> to vector<16x128xf32>
    %142 = arith.mulf %141, %104 : vector<16x128xf32>
    %143 = arith.mulf %132, %111 : vector<16x128xf32>
    %144 = arith.addf %142, %143 : vector<16x128xf32>
    %cst_54 = arith.constant 0.00999999977 : f32
    %145 = vector.broadcast %cst_54 : f32 to vector<16x128xf32>
    %146 = arith.mulf %145, %144 : vector<16x128xf32>
    %147 = arith.addf %111, %146 : vector<16x128xf32>
    %cst_55 = arith.constant 1.000000e+00 : f32
    %148 = vector.broadcast %cst_55 : f32 to vector<16x128xf32>
    %149 = arith.addf %148, %121 : vector<16x128xf32>
    %150 = arith.subf %140, %149 : vector<16x128xf32>
    %cst_56 = arith.constant 0.000000e+00 : f32
    %151 = vector.broadcast %cst_56 : f32 to vector<16x128xf32>
    %152 = arith.cmpf ogt, %150, %151 : vector<16x128xf32>
    %153 = arith.extui %152 : vector<16x128xi1> to vector<16x128xi32>
    %154 = arith.sitofp %153 : vector<16x128xi32> to vector<16x128xf32>
    %cst_57 = arith.constant 0.899999976 : f32
    %155 = vector.broadcast %cst_57 : f32 to vector<16x128xf32>
    %156 = arith.mulf %155, %121 : vector<16x128xf32>
    %157 = arith.addf %156, %154 : vector<16x128xf32>
    %158 = arith.truncf %154 : vector<16x128xf32> to vector<16x128xbf16>
    %159 = arith.index_cast %126 : i32 to index
    %c0_58 = arith.constant 0 : index
    %160 = vector.load %arg21[%159, %c0_58] : memref<64x128xbf16, #tpu.memory_space<vmem>>, vector<16x128xbf16>
    tpu.vector_store %arg21[%159, %c0_58], %158 {strides = array<i32>} : memref<64x128xbf16, #tpu.memory_space<vmem>>, vector<16x128xbf16>,
    %c4_i32 = arith.constant 4 : i32
    %c0_59 = arith.constant 0 : index
    %c0_60 = arith.constant 0 : index
    %161 = vector.load %arg14[%c0_59, %c0_60] : memref<16x128xbf16, #tpu.memory_space<vmem>>, vector<16x128xbf16>
    tpu.vector_store %arg14[%c0_59, %c0_60], %158 {strides = array<i32>} : memref<16x128xbf16, #tpu.memory_space<vmem>>, vector<16x128xbf16>,
    %c0_61 = arith.constant 0 : index
    %c0_62 = arith.constant 0 : index
    %162 = vector.load %arg15[%c0_61, %c0_62] : memref<16x128xf32, #tpu.memory_space<vmem>>, vector<16x128xf32>
    tpu.vector_store %arg15[%c0_61, %c0_62], %140 {strides = array<i32>} : memref<16x128xf32, #tpu.memory_space<vmem>>, vector<16x128xf32>,
    %c0_63 = arith.constant 0 : index
    %c0_64 = arith.constant 0 : index
    %163 = vector.load %arg16[%c0_63, %c0_64] : memref<16x128xf32, #tpu.memory_space<vmem>>, vector<16x128xf32>
    tpu.vector_store %arg16[%c0_63, %c0_64], %147 {strides = array<i32>} : memref<16x128xf32, #tpu.memory_space<vmem>>, vector<16x128xf32>,
    %c0_65 = arith.constant 0 : index
    %c0_66 = arith.constant 0 : index
    %164 = vector.load %arg17[%c0_65, %c0_66] : memref<16x128xf32, #tpu.memory_space<vmem>>, vector<16x128xf32>
    tpu.vector_store %arg17[%c0_65, %c0_66], %157 {strides = array<i32>} : memref<16x128xf32, #tpu.memory_space<vmem>>, vector<16x128xf32>,
    %c0_67 = arith.constant 0 : index
    %c0_68 = arith.constant 0 : index
    %165 = vector.load %arg21[%c0_67, %c0_68] : memref<64x128xbf16, #tpu.memory_space<vmem>>, vector<64x128xbf16>
    %c0_69 = arith.constant 0 : index
    %c0_70 = arith.constant 0 : index
    %166 = vector.load %arg5[%c0_69, %c0_70] : memref<128x128xbf16, #tpu.memory_space<vmem>>, vector<128x128xbf16>
    %cst_71 = arith.constant dense<0.000000e+00> : vector<64x128xf32>
    %167 = tpu.matmul %165, %166, %cst_71 {dimension_numbers = #tpu.dot_dimension_numbers<[1], [0], [0], [1], [0, 0, 1, 1], [], []>} : vector<64x128xbf16>, vector<128x128xbf16>, vector<64x128xf32> -> vector<64x128xf32>
    %c0_72 = arith.constant 0 : index
    %c0_73 = arith.constant 0 : index
    %168 = vector.load %arg9[%c0_72, %c0_73] : memref<64x128xf32, #tpu.memory_space<vmem>>, vector<64x128xf32>
    tpu.vector_store %arg9[%c0_72, %c0_73], %167 {strides = array<i32>} : memref<64x128xf32, #tpu.memory_space<vmem>>, vector<64x128xf32>,
    %c0_74 = arith.constant 0 : index
    %c0_75 = arith.constant 0 : index
    %169 = vector.load %arg18[%c0_74, %c0_75] : memref<16x128xf32, #tpu.memory_space<vmem>>, vector<16x128xf32>
    %c0_76 = arith.constant 0 : index
    %c0_77 = arith.constant 0 : index
    %170 = vector.load %arg19[%c0_76, %c0_77] : memref<16x128xf32, #tpu.memory_space<vmem>>, vector<16x128xf32>
    %c0_i32_78 = arith.constant 0 : i32
    %c16_i32_79 = arith.constant 16 : i32
    %171 = arith.muli %c0_i32_78, %c16_i32_79 : i32
    %172 = tpu.assume_multiple %171, 16 : i32
    %173 = vector.broadcast %6 : vector<1x128xf32> to vector<16x128xf32>
    %174 = arith.mulf %173, %169 : vector<16x128xf32>
    %175 = arith.index_cast %172 : i32 to index
    %c0_80 = arith.constant 0 : index
    %176 = vector.load %arg9[%175, %c0_80] : memref<64x128xf32, #tpu.memory_space<vmem>>, vector<16x128xf32>
    %177 = vector.broadcast %8 : vector<1x128xf32> to vector<16x128xf32>
    %178 = arith.mulf %177, %176 : vector<16x128xf32>
    %179 = arith.addf %174, %178 : vector<16x128xf32>
    %180 = arith.index_cast %172 : i32 to index
    %c0_81 = arith.constant 0 : index
    %181 = vector.load %arg9[%180, %c0_81] : memref<64x128xf32, #tpu.memory_space<vmem>>, vector<16x128xf32>
    tpu.vector_store %arg9[%180, %c0_81], %179 {strides = array<i32>} : memref<64x128xf32, #tpu.memory_space<vmem>>, vector<16x128xf32>,
    %182 = arith.index_cast %172 : i32 to index
    %c0_82 = arith.constant 0 : index
    %183 = vector.load %arg21[%182, %c0_82] : memref<64x128xbf16, #tpu.memory_space<vmem>>, vector<16x128xbf16>
    %184 = arith.extf %183 : vector<16x128xbf16> to vector<16x128xf32>
    %185 = arith.addf %170, %184 : vector<16x128xf32>
    %c1_i32_83 = arith.constant 1 : i32
    %c16_i32_84 = arith.constant 16 : i32
    %186 = arith.muli %c1_i32_83, %c16_i32_84 : i32
    %187 = tpu.assume_multiple %186, 16 : i32
    %188 = vector.broadcast %6 : vector<1x128xf32> to vector<16x128xf32>
    %189 = arith.mulf %188, %179 : vector<16x128xf32>
    %190 = arith.index_cast %187 : i32 to index
    %c0_85 = arith.constant 0 : index
    %191 = vector.load %arg9[%190, %c0_85] : memref<64x128xf32, #tpu.memory_space<vmem>>, vector<16x128xf32>
    %192 = vector.broadcast %8 : vector<1x128xf32> to vector<16x128xf32>
    %193 = arith.mulf %192, %191 : vector<16x128xf32>
    %194 = arith.addf %189, %193 : vector<16x128xf32>
    %195 = arith.index_cast %187 : i32 to index
    %c0_86 = arith.constant 0 : index
    %196 = vector.load %arg9[%195, %c0_86] : memref<64x128xf32, #tpu.memory_space<vmem>>, vector<16x128xf32>
    tpu.vector_store %arg9[%195, %c0_86], %194 {strides = array<i32>} : memref<64x128xf32, #tpu.memory_space<vmem>>, vector<16x128xf32>,
    %197 = arith.index_cast %187 : i32 to index
    %c0_87 = arith.constant 0 : index
    %198 = vector.load %arg21[%197, %c0_87] : memref<64x128xbf16, #tpu.memory_space<vmem>>, vector<16x128xbf16>
    %199 = arith.extf %198 : vector<16x128xbf16> to vector<16x128xf32>
    %200 = arith.addf %185, %199 : vector<16x128xf32>
    %c2_i32_88 = arith.constant 2 : i32
    %c16_i32_89 = arith.constant 16 : i32
    %201 = arith.muli %c2_i32_88, %c16_i32_89 : i32
    %202 = tpu.assume_multiple %201, 16 : i32
    %203 = vector.broadcast %6 : vector<1x128xf32> to vector<16x128xf32>
    %204 = arith.mulf %203, %194 : vector<16x128xf32>
    %205 = arith.index_cast %202 : i32 to index
    %c0_90 = arith.constant 0 : index
    %206 = vector.load %arg9[%205, %c0_90] : memref<64x128xf32, #tpu.memory_space<vmem>>, vector<16x128xf32>
    %207 = vector.broadcast %8 : vector<1x128xf32> to vector<16x128xf32>
    %208 = arith.mulf %207, %206 : vector<16x128xf32>
    %209 = arith.addf %204, %208 : vector<16x128xf32>
    %210 = arith.index_cast %202 : i32 to index
    %c0_91 = arith.constant 0 : index
    %211 = vector.load %arg9[%210, %c0_91] : memref<64x128xf32, #tpu.memory_space<vmem>>, vector<16x128xf32>
    tpu.vector_store %arg9[%210, %c0_91], %209 {strides = array<i32>} : memref<64x128xf32, #tpu.memory_space<vmem>>, vector<16x128xf32>,
    %212 = arith.index_cast %202 : i32 to index
    %c0_92 = arith.constant 0 : index
    %213 = vector.load %arg21[%212, %c0_92] : memref<64x128xbf16, #tpu.memory_space<vmem>>, vector<16x128xbf16>
    %214 = arith.extf %213 : vector<16x128xbf16> to vector<16x128xf32>
    %215 = arith.addf %200, %214 : vector<16x128xf32>
    %c3_i32_93 = arith.constant 3 : i32
    %c16_i32_94 = arith.constant 16 : i32
    %216 = arith.muli %c3_i32_93, %c16_i32_94 : i32
    %217 = tpu.assume_multiple %216, 16 : i32
    %218 = vector.broadcast %6 : vector<1x128xf32> to vector<16x128xf32>
    %219 = arith.mulf %218, %209 : vector<16x128xf32>
    %220 = arith.index_cast %217 : i32 to index
    %c0_95 = arith.constant 0 : index
    %221 = vector.load %arg9[%220, %c0_95] : memref<64x128xf32, #tpu.memory_space<vmem>>, vector<16x128xf32>
    %222 = vector.broadcast %8 : vector<1x128xf32> to vector<16x128xf32>
    %223 = arith.mulf %222, %221 : vector<16x128xf32>
    %224 = arith.addf %219, %223 : vector<16x128xf32>
    %225 = arith.index_cast %217 : i32 to index
    %c0_96 = arith.constant 0 : index
    %226 = vector.load %arg9[%225, %c0_96] : memref<64x128xf32, #tpu.memory_space<vmem>>, vector<16x128xf32>
    tpu.vector_store %arg9[%225, %c0_96], %224 {strides = array<i32>} : memref<64x128xf32, #tpu.memory_space<vmem>>, vector<16x128xf32>,
    %227 = arith.index_cast %217 : i32 to index
    %c0_97 = arith.constant 0 : index
    %228 = vector.load %arg21[%227, %c0_97] : memref<64x128xbf16, #tpu.memory_space<vmem>>, vector<16x128xbf16>
    %229 = arith.extf %228 : vector<16x128xbf16> to vector<16x128xf32>
    %230 = arith.addf %215, %229 : vector<16x128xf32>
    %c4_i32_98 = arith.constant 4 : i32
    %c0_99 = arith.constant 0 : index
    %c0_100 = arith.constant 0 : index
    %231 = vector.load %arg18[%c0_99, %c0_100] : memref<16x128xf32, #tpu.memory_space<vmem>>, vector<16x128xf32>
    tpu.vector_store %arg18[%c0_99, %c0_100], %224 {strides = array<i32>} : memref<16x128xf32, #tpu.memory_space<vmem>>, vector<16x128xf32>,
    %c0_101 = arith.constant 0 : index
    %c0_102 = arith.constant 0 : index
    %232 = vector.load %arg19[%c0_101, %c0_102] : memref<16x128xf32, #tpu.memory_space<vmem>>, vector<16x128xf32>
    tpu.vector_store %arg19[%c0_101, %c0_102], %230 {strides = array<i32>} : memref<16x128xf32, #tpu.memory_space<vmem>>, vector<16x128xf32>,
    %c1_i32_103 = arith.constant 1 : i32
    %233 = arith.cmpi eq, %arg1, %c1_i32_103 : i32
    %234 = arith.extui %233 : i1 to i32
    %c0_i32_104 = arith.constant 0 : i32
    %235 = arith.cmpi ne, %234, %c0_i32_104 : i32
    scf.if %235 {
      %c0_105 = arith.constant 0 : index
      %c0_106 = arith.constant 0 : index
      %236 = vector.load %arg14[%c0_105, %c0_106] : memref<16x128xbf16, #tpu.memory_space<vmem>>, vector<16x128xbf16>
      %237 = arith.extf %236 : vector<16x128xbf16> to vector<16x128xf32>
      %c0_107 = arith.constant 0 : index
      %c0_108 = arith.constant 0 : index
      %238 = vector.load %arg10[%c0_107, %c0_108] : memref<16x128xf32, #tpu.memory_space<vmem>>, vector<16x128xf32>
      tpu.vector_store %arg10[%c0_107, %c0_108], %237 {strides = array<i32>} : memref<16x128xf32, #tpu.memory_space<vmem>>, vector<16x128xf32>,
      %c0_109 = arith.constant 0 : index
      %c0_110 = arith.constant 0 : index
      %239 = vector.load %arg15[%c0_109, %c0_110] : memref<16x128xf32, #tpu.memory_space<vmem>>, vector<16x128xf32>
      %c0_111 = arith.constant 0 : index
      %c0_112 = arith.constant 0 : index
      %240 = vector.load %arg11[%c0_111, %c0_112] : memref<16x128xf32, #tpu.memory_space<vmem>>, vector<16x128xf32>
      tpu.vector_store %arg11[%c0_111, %c0_112], %239 {strides = array<i32>} : memref<16x128xf32, #tpu.memory_space<vmem>>, vector<16x128xf32>,
      %c0_113 = arith.constant 0 : index
      %c0_114 = arith.constant 0 : index
      %241 = vector.load %arg18[%c0_113, %c0_114] : memref<16x128xf32, #tpu.memory_space<vmem>>, vector<16x128xf32>
      %c0_115 = arith.constant 0 : index
      %c0_116 = arith.constant 0 : index
      %242 = vector.load %arg12[%c0_115, %c0_116] : memref<16x128xf32, #tpu.memory_space<vmem>>, vector<16x128xf32>
      tpu.vector_store %arg12[%c0_115, %c0_116], %241 {strides = array<i32>} : memref<16x128xf32, #tpu.memory_space<vmem>>, vector<16x128xf32>,
      %c0_117 = arith.constant 0 : index
      %c0_118 = arith.constant 0 : index
      %243 = vector.load %arg19[%c0_117, %c0_118] : memref<16x128xf32, #tpu.memory_space<vmem>>, vector<16x128xf32>
      %c0_119 = arith.constant 0 : index
      %c0_120 = arith.constant 0 : index
      %244 = vector.load %arg13[%c0_119, %c0_120] : memref<16x128xf32, #tpu.memory_space<vmem>>, vector<16x128xf32>
      tpu.vector_store %arg13[%c0_119, %c0_120], %243 {strides = array<i32>} : memref<16x128xf32, #tpu.memory_space<vmem>>, vector<16x128xf32>,
    } else {
    }
    return
  }
  func.func @transform_0(%arg0: i32, %arg1: i32) -> (i32, i32) {
    %c2_i32 = arith.constant 2 : i32
    %0 = arith.muli %arg0, %c2_i32 : i32
    %1 = arith.addi %0, %arg1 : i32
    %c0_i32 = arith.constant 0 : i32
    %c0_i32_0 = arith.constant 0 : i32
    return %1, %c0_i32 : i32, i32
  }
  func.func @transform_1(%arg0: i32, %arg1: i32) -> (i32, i32) {
    %c0_i32 = arith.constant 0 : i32
    %c0_i32_0 = arith.constant 0 : i32
    %c0_i32_1 = arith.constant 0 : i32
    return %c0_i32, %c0_i32_0 : i32, i32
  }
  func.func @transform_2(%arg0: i32, %arg1: i32) -> (i32, i32) {
    %c0_i32 = arith.constant 0 : i32
    %c0_i32_0 = arith.constant 0 : i32
    %c0_i32_1 = arith.constant 0 : i32
    return %c0_i32, %c0_i32_0 : i32, i32
  }
  func.func @transform_3(%arg0: i32, %arg1: i32) -> (i32, i32) {
    %c0_i32 = arith.constant 0 : i32
    %c0_i32_0 = arith.constant 0 : i32
    %c0_i32_1 = arith.constant 0 : i32
    return %c0_i32, %c0_i32_0 : i32, i32
  }
  func.func @transform_4(%arg0: i32, %arg1: i32) -> (i32, i32) {
    %c0_i32 = arith.constant 0 : i32
    %c0_i32_0 = arith.constant 0 : i32
    %c0_i32_1 = arith.constant 0 : i32
    return %c0_i32, %c0_i32_0 : i32, i32
  }
  func.func @transform_5(%arg0: i32, %arg1: i32) -> (i32, i32) {
    %c0_i32 = arith.constant 0 : i32
    %c0_i32_0 = arith.constant 0 : i32
    %c0_i32_1 = arith.constant 0 : i32
    return %c0_i32, %c0_i32_0 : i32, i32
  }
  func.func @transform_6(%arg0: i32, %arg1: i32) -> (i32, i32) {
    %c0_i32 = arith.constant 0 : i32
    %c0_i32_0 = arith.constant 0 : i32
    %c0_i32_1 = arith.constant 0 : i32
    return %c0_i32, %c0_i32_0 : i32, i32
  }
  func.func @transform_7(%arg0: i32, %arg1: i32) -> (i32, i32) {
    %c2_i32 = arith.constant 2 : i32
    %0 = arith.muli %arg0, %c2_i32 : i32
    %1 = arith.addi %0, %arg1 : i32
    %c0_i32 = arith.constant 0 : i32
    %c0_i32_0 = arith.constant 0 : i32
    return %1, %c0_i32 : i32, i32
  }
  func.func @transform_8(%arg0: i32, %arg1: i32) -> (i32, i32) {
    %c0_i32 = arith.constant 0 : i32
    %c0_i32_0 = arith.constant 0 : i32
    return %arg0, %c0_i32 : i32, i32
  }
  func.func @transform_9(%arg0: i32, %arg1: i32) -> (i32, i32) {
    %c0_i32 = arith.constant 0 : i32
    %c0_i32_0 = arith.constant 0 : i32
    return %arg0, %c0_i32 : i32, i32
  }
  func.func @transform_10(%arg0: i32, %arg1: i32) -> (i32, i32) {
    %c0_i32 = arith.constant 0 : i32
    %c0_i32_0 = arith.constant 0 : i32
    return %arg0, %c0_i32 : i32, i32
  }
  func.func @transform_11(%arg0: i32, %arg1: i32) -> (i32, i32) {
    %c0_i32 = arith.constant 0 : i32
    %c0_i32_0 = arith.constant 0 : i32
    return %arg0, %c0_i32 : i32, i32
  }
}

module attributes {stable_mosaic.version = 11 : i64} {
  func.func @_brf_rsnn_kernel(%arg0: i32, %arg1: i32, %arg2: memref<64x16xf32, #tpu.memory_space<vmem>>, %arg3: memref<16x128xf32, #tpu.memory_space<vmem>>, %arg4: memref<128x128xbf16, #tpu.memory_space<vmem>>, %arg5: memref<128x128xbf16, #tpu.memory_space<vmem>>, %arg6: memref<1x128xf32, #tpu.memory_space<vmem>>, %arg7: memref<1x128xf32, #tpu.memory_space<vmem>>, %arg8: memref<1x128xf32, #tpu.memory_space<vmem>>, %arg9: memref<64x128xf32, #tpu.memory_space<vmem>>, %arg10: memref<16x128xf32, #tpu.memory_space<vmem>>, %arg11: memref<16x128xf32, #tpu.memory_space<vmem>>, %arg12: memref<16x128xf32, #tpu.memory_space<vmem>>, %arg13: memref<16x128xf32, #tpu.memory_space<vmem>>, %arg14: memref<16x128xbf16, #tpu.memory_space<vmem>>, %arg15: memref<16x128xf32, #tpu.memory_space<vmem>>, %arg16: memref<16x128xf32, #tpu.memory_space<vmem>>, %arg17: memref<16x128xf32, #tpu.memory_space<vmem>>, %arg18: memref<16x128xf32, #tpu.memory_space<vmem>>, %arg19: memref<16x128xf32, #tpu.memory_space<vmem>>, %arg20: memref<64x128xf32, #tpu.memory_space<vmem>>, %arg21: memref<64x128xbf16, #tpu.memory_space<vmem>>) attributes {dimension_semantics = [#tpu.dimension_semantics<parallel>, #tpu.dimension_semantics<arbitrary>], iteration_bounds = array<i64: 1, 2>, scalar_prefetch = 0 : i64, scratch_operands = 8 : i64, tpu.core_type = #tpu.core_type<tc>, window_params = [{transform_indices = @transform_0, window_bounds = array<i64: 64, 16>}, {pipeline_mode = #tpu.pipeline_mode<synchronous>, transform_indices = @transform_1, window_bounds = array<i64: 16, 128>}, {pipeline_mode = #tpu.pipeline_mode<synchronous>, transform_indices = @transform_2, window_bounds = array<i64: 128, 128>}, {pipeline_mode = #tpu.pipeline_mode<synchronous>, transform_indices = @transform_3, window_bounds = array<i64: 128, 128>}, {pipeline_mode = #tpu.pipeline_mode<synchronous>, transform_indices = @transform_4, window_bounds = array<i64: 1, 128>}, {pipeline_mode = #tpu.pipeline_mode<synchronous>, transform_indices = @transform_5, window_bounds = array<i64: 1, 128>}, {pipeline_mode = #tpu.pipeline_mode<synchronous>, transform_indices = @transform_6, window_bounds = array<i64: 1, 128>}, {transform_indices = @transform_7, window_bounds = array<i64: 64, 128>}, {transform_indices = @transform_8, window_bounds = array<i64: 16, 128>}, {transform_indices = @transform_9, window_bounds = array<i64: 16, 128>}, {transform_indices = @transform_10, window_bounds = array<i64: 16, 128>}, {transform_indices = @transform_11, window_bounds = array<i64: 16, 128>}]} {
    %c0_i32 = arith.constant 0 : i32
    %0 = arith.cmpi eq, %arg1, %c0_i32 : i32
    %1 = arith.extui %0 : i1 to i32
    %c0_i32_0 = arith.constant 0 : i32
    %2 = arith.cmpi ne, %1, %c0_i32_0 : i32
    scf.if %2 {
      %cst_105 = arith.constant 0.000000e+00 : bf16
      %236 = vector.broadcast %cst_105 : bf16 to vector<16x128xbf16>
      %c0_106 = arith.constant 0 : index
      %c0_107 = arith.constant 0 : index
      %237 = vector.load %arg14[%c0_106, %c0_107] : memref<16x128xbf16, #tpu.memory_space<vmem>>, vector<16x128xbf16>
      tpu.vector_store %arg14[%c0_106, %c0_107], %236 {strides = array<i32>} : memref<16x128xbf16, #tpu.memory_space<vmem>>, vector<16x128xbf16>,
      %cst_108 = arith.constant 0.000000e+00 : f32
      %238 = vector.broadcast %cst_108 : f32 to vector<16x128xf32>
      %c0_109 = arith.constant 0 : index
      %c0_110 = arith.constant 0 : index
      %239 = vector.load %arg15[%c0_109, %c0_110] : memref<16x128xf32, #tpu.memory_space<vmem>>, vector<16x128xf32>
      tpu.vector_store %arg15[%c0_109, %c0_110], %238 {strides = array<i32>} : memref<16x128xf32, #tpu.memory_space<vmem>>, vector<16x128xf32>,
      %cst_111 = arith.constant 0.000000e+00 : f32
      %240 = vector.broadcast %cst_111 : f32 to vector<16x128xf32>
      %c0_112 = arith.constant 0 : index
      %c0_113 = arith.constant 0 : index
      %241 = vector.load %arg16[%c0_112, %c0_113] : memref<16x128xf32, #tpu.memory_space<vmem>>, vector<16x128xf32>
      tpu.vector_store %arg16[%c0_112, %c0_113], %240 {strides = array<i32>} : memref<16x128xf32, #tpu.memory_space<vmem>>, vector<16x128xf32>,
      %cst_114 = arith.constant 0.000000e+00 : f32
      %242 = vector.broadcast %cst_114 : f32 to vector<16x128xf32>
      %c0_115 = arith.constant 0 : index
      %c0_116 = arith.constant 0 : index
      %243 = vector.load %arg17[%c0_115, %c0_116] : memref<16x128xf32, #tpu.memory_space<vmem>>, vector<16x128xf32>
      tpu.vector_store %arg17[%c0_115, %c0_116], %242 {strides = array<i32>} : memref<16x128xf32, #tpu.memory_space<vmem>>, vector<16x128xf32>,
      %cst_117 = arith.constant 0.000000e+00 : f32
      %244 = vector.broadcast %cst_117 : f32 to vector<16x128xf32>
      %c0_118 = arith.constant 0 : index
      %c0_119 = arith.constant 0 : index
      %245 = vector.load %arg18[%c0_118, %c0_119] : memref<16x128xf32, #tpu.memory_space<vmem>>, vector<16x128xf32>
      tpu.vector_store %arg18[%c0_118, %c0_119], %244 {strides = array<i32>} : memref<16x128xf32, #tpu.memory_space<vmem>>, vector<16x128xf32>,
      %cst_120 = arith.constant 0.000000e+00 : f32
      %246 = vector.broadcast %cst_120 : f32 to vector<16x128xf32>
      %c0_121 = arith.constant 0 : index
      %c0_122 = arith.constant 0 : index
      %247 = vector.load %arg19[%c0_121, %c0_122] : memref<16x128xf32, #tpu.memory_space<vmem>>, vector<16x128xf32>
      tpu.vector_store %arg19[%c0_121, %c0_122], %246 {strides = array<i32>} : memref<16x128xf32, #tpu.memory_space<vmem>>, vector<16x128xf32>,
    } else {
    }
    %c0 = arith.constant 0 : index
    %c0_1 = arith.constant 0 : index
    %3 = vector.load %arg6[%c0, %c0_1] : memref<1x128xf32, #tpu.memory_space<vmem>>, vector<1x128xf32>
    %c0_2 = arith.constant 0 : index
    %c0_3 = arith.constant 0 : index
    %4 = vector.load %arg7[%c0_2, %c0_3] : memref<1x128xf32, #tpu.memory_space<vmem>>, vector<1x128xf32>
    %c0_4 = arith.constant 0 : index
    %c0_5 = arith.constant 0 : index
    %5 = vector.load %arg4[%c0_4, %c0_5] : memref<128x128xbf16, #tpu.memory_space<vmem>>, vector<128x128xbf16>
    %c0_6 = arith.constant 0 : index
    %c0_7 = arith.constant 0 : index
    %6 = vector.load %arg8[%c0_6, %c0_7] : memref<1x128xf32, #tpu.memory_space<vmem>>, vector<1x128xf32>
    %cst = arith.constant 1.000000e+00 : f32
    %7 = vector.broadcast %cst : f32 to vector<1x128xf32>
    %8 = arith.subf %7, %6 : vector<1x128xf32>
    %c0_8 = arith.constant 0 : index
    %c0_9 = arith.constant 0 : index
    %9 = vector.load %arg2[%c0_8, %c0_9] : memref<64x16xf32, #tpu.memory_space<vmem>>, vector<64x16xf32>
    %c0_10 = arith.constant 0 : index
    %c0_11 = arith.constant 0 : index
    %10 = vector.load %arg3[%c0_10, %c0_11] : memref<16x128xf32, #tpu.memory_space<vmem>>, vector<16x128xf32>
    %cst_12 = arith.constant dense<0.000000e+00> : vector<64x128xf32>
    %11 = tpu.matmul %9, %10, %cst_12 {dimension_numbers = #tpu.dot_dimension_numbers<[1], [0], [0], [1], [0, 0, 1, 1], [], []>} : vector<64x16xf32>, vector<16x128xf32>, vector<64x128xf32> -> vector<64x128xf32>
    %c0_13 = arith.constant 0 : index
    %c0_14 = arith.constant 0 : index
    %12 = vector.load %arg20[%c0_13, %c0_14] : memref<64x128xf32, #tpu.memory_space<vmem>>, vector<64x128xf32>
    tpu.vector_store %arg20[%c0_13, %c0_14], %11 {strides = array<i32>} : memref<64x128xf32, #tpu.memory_space<vmem>>, vector<64x128xf32>,
    %c0_15 = arith.constant 0 : index
    %c0_16 = arith.constant 0 : index
    %13 = vector.load %arg14[%c0_15, %c0_16] : memref<16x128xbf16, #tpu.memory_space<vmem>>, vector<16x128xbf16>
    %c0_17 = arith.constant 0 : index
    %c0_18 = arith.constant 0 : index
    %14 = vector.load %arg15[%c0_17, %c0_18] : memref<16x128xf32, #tpu.memory_space<vmem>>, vector<16x128xf32>
    %c0_19 = arith.constant 0 : index
    %c0_20 = arith.constant 0 : index
    %15 = vector.load %arg16[%c0_19, %c0_20] : memref<16x128xf32, #tpu.memory_space<vmem>>, vector<16x128xf32>
    %c0_21 = arith.constant 0 : index
    %c0_22 = arith.constant 0 : index
    %16 = vector.load %arg17[%c0_21, %c0_22] : memref<16x128xf32, #tpu.memory_space<vmem>>, vector<16x128xf32>
    %c0_i32_23 = arith.constant 0 : i32
    %c16_i32 = arith.constant 16 : i32
    %17 = arith.muli %c0_i32_23, %c16_i32 : i32
    %18 = tpu.assume_multiple %17, 16 : i32
    %19 = arith.index_cast %18 : i32 to index
    %c0_24 = arith.constant 0 : index
    %20 = vector.load %arg20[%19, %c0_24] : memref<64x128xf32, #tpu.memory_space<vmem>>, vector<16x128xf32>
    %cst_25 = arith.constant dense<0.000000e+00> : vector<16x128xf32>
    %21 = tpu.matmul %13, %5, %cst_25 {dimension_numbers = #tpu.dot_dimension_numbers<[1], [0], [0], [1], [0, 0, 1, 1], [], []>} : vector<16x128xbf16>, vector<128x128xbf16>, vector<16x128xf32> -> vector<16x128xf32>
    %22 = arith.addf %20, %21 : vector<16x128xf32>
    %23 = vector.broadcast %4 : vector<1x128xf32> to vector<16x128xf32>
    %24 = arith.subf %23, %16 : vector<16x128xf32>
    %25 = arith.mulf %24, %14 : vector<16x128xf32>
    %26 = vector.broadcast %3 : vector<1x128xf32> to vector<16x128xf32>
    %27 = arith.mulf %26, %15 : vector<16x128xf32>
    %28 = arith.subf %25, %27 : vector<16x128xf32>
    %29 = arith.addf %28, %22 : vector<16x128xf32>
    %cst_26 = arith.constant 0.00999999977 : f32
    %30 = vector.broadcast %cst_26 : f32 to vector<16x128xf32>
    %31 = arith.mulf %30, %29 : vector<16x128xf32>
    %32 = arith.addf %14, %31 : vector<16x128xf32>
    %33 = vector.broadcast %3 : vector<1x128xf32> to vector<16x128xf32>
    %34 = arith.mulf %33, %14 : vector<16x128xf32>
    %35 = arith.mulf %24, %15 : vector<16x128xf32>
    %36 = arith.addf %34, %35 : vector<16x128xf32>
    %cst_27 = arith.constant 0.00999999977 : f32
    %37 = vector.broadcast %cst_27 : f32 to vector<16x128xf32>
    %38 = arith.mulf %37, %36 : vector<16x128xf32>
    %39 = arith.addf %15, %38 : vector<16x128xf32>
    %cst_28 = arith.constant 1.000000e+00 : f32
    %40 = vector.broadcast %cst_28 : f32 to vector<16x128xf32>
    %41 = arith.addf %40, %16 : vector<16x128xf32>
    %42 = arith.subf %32, %41 : vector<16x128xf32>
    %cst_29 = arith.constant 0.000000e+00 : f32
    %43 = vector.broadcast %cst_29 : f32 to vector<16x128xf32>
    %44 = arith.cmpf ogt, %42, %43 : vector<16x128xf32>
    %45 = arith.extui %44 : vector<16x128xi1> to vector<16x128xi32>
    %46 = arith.sitofp %45 : vector<16x128xi32> to vector<16x128xf32>
    %cst_30 = arith.constant 0.899999976 : f32
    %47 = vector.broadcast %cst_30 : f32 to vector<16x128xf32>
    %48 = arith.mulf %47, %16 : vector<16x128xf32>
    %49 = arith.addf %48, %46 : vector<16x128xf32>
    %50 = arith.truncf %46 : vector<16x128xf32> to vector<16x128xbf16>
    %51 = arith.index_cast %18 : i32 to index
    %c0_31 = arith.constant 0 : index
    %52 = vector.load %arg21[%51, %c0_31] : memref<64x128xbf16, #tpu.memory_space<vmem>>, vector<16x128xbf16>
    tpu.vector_store %arg21[%51, %c0_31], %50 {strides = array<i32>} : memref<64x128xbf16, #tpu.memory_space<vmem>>, vector<16x128xbf16>,
    %c1_i32 = arith.constant 1 : i32
    %c16_i32_32 = arith.constant 16 : i32
    %53 = arith.muli %c1_i32, %c16_i32_32 : i32
    %54 = tpu.assume_multiple %53, 16 : i32
    %55 = arith.index_cast %54 : i32 to index
    %c0_33 = arith.constant 0 : index
    %56 = vector.load %arg20[%55, %c0_33] : memref<64x128xf32, #tpu.memory_space<vmem>>, vector<16x128xf32>
    %cst_34 = arith.constant dense<0.000000e+00> : vector<16x128xf32>
    %57 = tpu.matmul %50, %5, %cst_34 {dimension_numbers = #tpu.dot_dimension_numbers<[1], [0], [0], [1], [0, 0, 1, 1], [], []>} : vector<16x128xbf16>, vector<128x128xbf16>, vector<16x128xf32> -> vector<16x128xf32>
    %58 = arith.addf %56, %57 : vector<16x128xf32>
    %59 = vector.broadcast %4 : vector<1x128xf32> to vector<16x128xf32>
    %60 = arith.subf %59, %49 : vector<16x128xf32>
    %61 = arith.mulf %60, %32 : vector<16x128xf32>
    %62 = vector.broadcast %3 : vector<1x128xf32> to vector<16x128xf32>
    %63 = arith.mulf %62, %39 : vector<16x128xf32>
    %64 = arith.subf %61, %63 : vector<16x128xf32>
    %65 = arith.addf %64, %58 : vector<16x128xf32>
    %cst_35 = arith.constant 0.00999999977 : f32
    %66 = vector.broadcast %cst_35 : f32 to vector<16x128xf32>
    %67 = arith.mulf %66, %65 : vector<16x128xf32>
    %68 = arith.addf %32, %67 : vector<16x128xf32>
    %69 = vector.broadcast %3 : vector<1x128xf32> to vector<16x128xf32>
    %70 = arith.mulf %69, %32 : vector<16x128xf32>
    %71 = arith.mulf %60, %39 : vector<16x128xf32>
    %72 = arith.addf %70, %71 : vector<16x128xf32>
    %cst_36 = arith.constant 0.00999999977 : f32
    %73 = vector.broadcast %cst_36 : f32 to vector<16x128xf32>
    %74 = arith.mulf %73, %72 : vector<16x128xf32>
    %75 = arith.addf %39, %74 : vector<16x128xf32>
    %cst_37 = arith.constant 1.000000e+00 : f32
    %76 = vector.broadcast %cst_37 : f32 to vector<16x128xf32>
    %77 = arith.addf %76, %49 : vector<16x128xf32>
    %78 = arith.subf %68, %77 : vector<16x128xf32>
    %cst_38 = arith.constant 0.000000e+00 : f32
    %79 = vector.broadcast %cst_38 : f32 to vector<16x128xf32>
    %80 = arith.cmpf ogt, %78, %79 : vector<16x128xf32>
    %81 = arith.extui %80 : vector<16x128xi1> to vector<16x128xi32>
    %82 = arith.sitofp %81 : vector<16x128xi32> to vector<16x128xf32>
    %cst_39 = arith.constant 0.899999976 : f32
    %83 = vector.broadcast %cst_39 : f32 to vector<16x128xf32>
    %84 = arith.mulf %83, %49 : vector<16x128xf32>
    %85 = arith.addf %84, %82 : vector<16x128xf32>
    %86 = arith.truncf %82 : vector<16x128xf32> to vector<16x128xbf16>
    %87 = arith.index_cast %54 : i32 to index
    %c0_40 = arith.constant 0 : index
    %88 = vector.load %arg21[%87, %c0_40] : memref<64x128xbf16, #tpu.memory_space<vmem>>, vector<16x128xbf16>
    tpu.vector_store %arg21[%87, %c0_40], %86 {strides = array<i32>} : memref<64x128xbf16, #tpu.memory_space<vmem>>, vector<16x128xbf16>,
    %c2_i32 = arith.constant 2 : i32
    %c16_i32_41 = arith.constant 16 : i32
    %89 = arith.muli %c2_i32, %c16_i32_41 : i32
    %90 = tpu.assume_multiple %89, 16 : i32
    %91 = arith.index_cast %90 : i32 to index
    %c0_42 = arith.constant 0 : index
    %92 = vector.load %arg20[%91, %c0_42] : memref<64x128xf32, #tpu.memory_space<vmem>>, vector<16x128xf32>
    %cst_43 = arith.constant dense<0.000000e+00> : vector<16x128xf32>
    %93 = tpu.matmul %86, %5, %cst_43 {dimension_numbers = #tpu.dot_dimension_numbers<[1], [0], [0], [1], [0, 0, 1, 1], [], []>} : vector<16x128xbf16>, vector<128x128xbf16>, vector<16x128xf32> -> vector<16x128xf32>
    %94 = arith.addf %92, %93 : vector<16x128xf32>
    %95 = vector.broadcast %4 : vector<1x128xf32> to vector<16x128xf32>
    %96 = arith.subf %95, %85 : vector<16x128xf32>
    %97 = arith.mulf %96, %68 : vector<16x128xf32>
    %98 = vector.broadcast %3 : vector<1x128xf32> to vector<16x128xf32>
    %99 = arith.mulf %98, %75 : vector<16x128xf32>
    %100 = arith.subf %97, %99 : vector<16x128xf32>
    %101 = arith.addf %100, %94 : vector<16x128xf32>
    %cst_44 = arith.constant 0.00999999977 : f32
    %102 = vector.broadcast %cst_44 : f32 to vector<16x128xf32>
    %103 = arith.mulf %102, %101 : vector<16x128xf32>
    %104 = arith.addf %68, %103 : vector<16x128xf32>
    %105 = vector.broadcast %3 : vector<1x128xf32> to vector<16x128xf32>
    %106 = arith.mulf %105, %68 : vector<16x128xf32>
    %107 = arith.mulf %96, %75 : vector<16x128xf32>
    %108 = arith.addf %106, %107 : vector<16x128xf32>
    %cst_45 = arith.constant 0.00999999977 : f32
    %109 = vector.broadcast %cst_45 : f32 to vector<16x128xf32>
    %110 = arith.mulf %109, %108 : vector<16x128xf32>
    %111 = arith.addf %75, %110 : vector<16x128xf32>
    %cst_46 = arith.constant 1.000000e+00 : f32
    %112 = vector.broadcast %cst_46 : f32 to vector<16x128xf32>
    %113 = arith.addf %112, %85 : vector<16x128xf32>
    %114 = arith.subf %104, %113 : vector<16x128xf32>
    %cst_47 = arith.constant 0.000000e+00 : f32
    %115 = vector.broadcast %cst_47 : f32 to vector<16x128xf32>
    %116 = arith.cmpf ogt, %114, %115 : vector<16x128xf32>
    %117 = arith.extui %116 : vector<16x128xi1> to vector<16x128xi32>
    %118 = arith.sitofp %117 : vector<16x128xi32> to vector<16x128xf32>
    %cst_48 = arith.constant 0.899999976 : f32
    %119 = vector.broadcast %cst_48 : f32 to vector<16x128xf32>
    %120 = arith.mulf %119, %85 : vector<16x128xf32>
    %121 = arith.addf %120, %118 : vector<16x128xf32>
    %122 = arith.truncf %118 : vector<16x128xf32> to vector<16x128xbf16>
    %123 = arith.index_cast %90 : i32 to index
    %c0_49 = arith.constant 0 : index
    %124 = vector.load %arg21[%123, %c0_49] : memref<64x128xbf16, #tpu.memory_space<vmem>>, vector<16x128xbf16>
    tpu.vector_store %arg21[%123, %c0_49], %122 {strides = array<i32>} : memref<64x128xbf16, #tpu.memory_space<vmem>>, vector<16x128xbf16>,
    %c3_i32 = arith.constant 3 : i32
    %c16_i32_50 = arith.constant 16 : i32
    %125 = arith.muli %c3_i32, %c16_i32_50 : i32
    %126 = tpu.assume_multiple %125, 16 : i32
    %127 = arith.index_cast %126 : i32 to index
    %c0_51 = arith.constant 0 : index
    %128 = vector.load %arg20[%127, %c0_51] : memref<64x128xf32, #tpu.memory_space<vmem>>, vector<16x128xf32>
    %cst_52 = arith.constant dense<0.000000e+00> : vector<16x128xf32>
    %129 = tpu.matmul %122, %5, %cst_52 {dimension_numbers = #tpu.dot_dimension_numbers<[1], [0], [0], [1], [0, 0, 1, 1], [], []>} : vector<16x128xbf16>, vector<128x128xbf16>, vector<16x128xf32> -> vector<16x128xf32>
    %130 = arith.addf %128, %129 : vector<16x128xf32>
    %131 = vector.broadcast %4 : vector<1x128xf32> to vector<16x128xf32>
    %132 = arith.subf %131, %121 : vector<16x128xf32>
    %133 = arith.mulf %132, %104 : vector<16x128xf32>
    %134 = vector.broadcast %3 : vector<1x128xf32> to vector<16x128xf32>
    %135 = arith.mulf %134, %111 : vector<16x128xf32>
    %136 = arith.subf %133, %135 : vector<16x128xf32>
    %137 = arith.addf %136, %130 : vector<16x128xf32>
    %cst_53 = arith.constant 0.00999999977 : f32
    %138 = vector.broadcast %cst_53 : f32 to vector<16x128xf32>
    %139 = arith.mulf %138, %137 : vector<16x128xf32>
    %140 = arith.addf %104, %139 : vector<16x128xf32>
    %141 = vector.broadcast %3 : vector<1x128xf32> to vector<16x128xf32>
    %142 = arith.mulf %141, %104 : vector<16x128xf32>
    %143 = arith.mulf %132, %111 : vector<16x128xf32>
    %144 = arith.addf %142, %143 : vector<16x128xf32>
    %cst_54 = arith.constant 0.00999999977 : f32
    %145 = vector.broadcast %cst_54 : f32 to vector<16x128xf32>
    %146 = arith.mulf %145, %144 : vector<16x128xf32>
    %147 = arith.addf %111, %146 : vector<16x128xf32>
    %cst_55 = arith.constant 1.000000e+00 : f32
    %148 = vector.broadcast %cst_55 : f32 to vector<16x128xf32>
    %149 = arith.addf %148, %121 : vector<16x128xf32>
    %150 = arith.subf %140, %149 : vector<16x128xf32>
    %cst_56 = arith.constant 0.000000e+00 : f32
    %151 = vector.broadcast %cst_56 : f32 to vector<16x128xf32>
    %152 = arith.cmpf ogt, %150, %151 : vector<16x128xf32>
    %153 = arith.extui %152 : vector<16x128xi1> to vector<16x128xi32>
    %154 = arith.sitofp %153 : vector<16x128xi32> to vector<16x128xf32>
    %cst_57 = arith.constant 0.899999976 : f32
    %155 = vector.broadcast %cst_57 : f32 to vector<16x128xf32>
    %156 = arith.mulf %155, %121 : vector<16x128xf32>
    %157 = arith.addf %156, %154 : vector<16x128xf32>
    %158 = arith.truncf %154 : vector<16x128xf32> to vector<16x128xbf16>
    %159 = arith.index_cast %126 : i32 to index
    %c0_58 = arith.constant 0 : index
    %160 = vector.load %arg21[%159, %c0_58] : memref<64x128xbf16, #tpu.memory_space<vmem>>, vector<16x128xbf16>
    tpu.vector_store %arg21[%159, %c0_58], %158 {strides = array<i32>} : memref<64x128xbf16, #tpu.memory_space<vmem>>, vector<16x128xbf16>,
    %c4_i32 = arith.constant 4 : i32
    %c0_59 = arith.constant 0 : index
    %c0_60 = arith.constant 0 : index
    %161 = vector.load %arg14[%c0_59, %c0_60] : memref<16x128xbf16, #tpu.memory_space<vmem>>, vector<16x128xbf16>
    tpu.vector_store %arg14[%c0_59, %c0_60], %158 {strides = array<i32>} : memref<16x128xbf16, #tpu.memory_space<vmem>>, vector<16x128xbf16>,
    %c0_61 = arith.constant 0 : index
    %c0_62 = arith.constant 0 : index
    %162 = vector.load %arg15[%c0_61, %c0_62] : memref<16x128xf32, #tpu.memory_space<vmem>>, vector<16x128xf32>
    tpu.vector_store %arg15[%c0_61, %c0_62], %140 {strides = array<i32>} : memref<16x128xf32, #tpu.memory_space<vmem>>, vector<16x128xf32>,
    %c0_63 = arith.constant 0 : index
    %c0_64 = arith.constant 0 : index
    %163 = vector.load %arg16[%c0_63, %c0_64] : memref<16x128xf32, #tpu.memory_space<vmem>>, vector<16x128xf32>
    tpu.vector_store %arg16[%c0_63, %c0_64], %147 {strides = array<i32>} : memref<16x128xf32, #tpu.memory_space<vmem>>, vector<16x128xf32>,
    %c0_65 = arith.constant 0 : index
    %c0_66 = arith.constant 0 : index
    %164 = vector.load %arg17[%c0_65, %c0_66] : memref<16x128xf32, #tpu.memory_space<vmem>>, vector<16x128xf32>
    tpu.vector_store %arg17[%c0_65, %c0_66], %157 {strides = array<i32>} : memref<16x128xf32, #tpu.memory_space<vmem>>, vector<16x128xf32>,
    %c0_67 = arith.constant 0 : index
    %c0_68 = arith.constant 0 : index
    %165 = vector.load %arg21[%c0_67, %c0_68] : memref<64x128xbf16, #tpu.memory_space<vmem>>, vector<64x128xbf16>
    %c0_69 = arith.constant 0 : index
    %c0_70 = arith.constant 0 : index
    %166 = vector.load %arg5[%c0_69, %c0_70] : memref<128x128xbf16, #tpu.memory_space<vmem>>, vector<128x128xbf16>
    %cst_71 = arith.constant dense<0.000000e+00> : vector<64x128xf32>
    %167 = tpu.matmul %165, %166, %cst_71 {dimension_numbers = #tpu.dot_dimension_numbers<[1], [0], [0], [1], [0, 0, 1, 1], [], []>} : vector<64x128xbf16>, vector<128x128xbf16>, vector<64x128xf32> -> vector<64x128xf32>
    %c0_72 = arith.constant 0 : index
    %c0_73 = arith.constant 0 : index
    %168 = vector.load %arg9[%c0_72, %c0_73] : memref<64x128xf32, #tpu.memory_space<vmem>>, vector<64x128xf32>
    tpu.vector_store %arg9[%c0_72, %c0_73], %167 {strides = array<i32>} : memref<64x128xf32, #tpu.memory_space<vmem>>, vector<64x128xf32>,
    %c0_74 = arith.constant 0 : index
    %c0_75 = arith.constant 0 : index
    %169 = vector.load %arg18[%c0_74, %c0_75] : memref<16x128xf32, #tpu.memory_space<vmem>>, vector<16x128xf32>
    %c0_76 = arith.constant 0 : index
    %c0_77 = arith.constant 0 : index
    %170 = vector.load %arg19[%c0_76, %c0_77] : memref<16x128xf32, #tpu.memory_space<vmem>>, vector<16x128xf32>
    %c0_i32_78 = arith.constant 0 : i32
    %c16_i32_79 = arith.constant 16 : i32
    %171 = arith.muli %c0_i32_78, %c16_i32_79 : i32
    %172 = tpu.assume_multiple %171, 16 : i32
    %173 = vector.broadcast %6 : vector<1x128xf32> to vector<16x128xf32>
    %174 = arith.mulf %173, %169 : vector<16x128xf32>
    %175 = arith.index_cast %172 : i32 to index
    %c0_80 = arith.constant 0 : index
    %176 = vector.load %arg9[%175, %c0_80] : memref<64x128xf32, #tpu.memory_space<vmem>>, vector<16x128xf32>
    %177 = vector.broadcast %8 : vector<1x128xf32> to vector<16x128xf32>
    %178 = arith.mulf %177, %176 : vector<16x128xf32>
    %179 = arith.addf %174, %178 : vector<16x128xf32>
    %180 = arith.index_cast %172 : i32 to index
    %c0_81 = arith.constant 0 : index
    %181 = vector.load %arg9[%180, %c0_81] : memref<64x128xf32, #tpu.memory_space<vmem>>, vector<16x128xf32>
    tpu.vector_store %arg9[%180, %c0_81], %179 {strides = array<i32>} : memref<64x128xf32, #tpu.memory_space<vmem>>, vector<16x128xf32>,
    %182 = arith.index_cast %172 : i32 to index
    %c0_82 = arith.constant 0 : index
    %183 = vector.load %arg21[%182, %c0_82] : memref<64x128xbf16, #tpu.memory_space<vmem>>, vector<16x128xbf16>
    %184 = arith.extf %183 : vector<16x128xbf16> to vector<16x128xf32>
    %185 = arith.addf %170, %184 : vector<16x128xf32>
    %c1_i32_83 = arith.constant 1 : i32
    %c16_i32_84 = arith.constant 16 : i32
    %186 = arith.muli %c1_i32_83, %c16_i32_84 : i32
    %187 = tpu.assume_multiple %186, 16 : i32
    %188 = vector.broadcast %6 : vector<1x128xf32> to vector<16x128xf32>
    %189 = arith.mulf %188, %179 : vector<16x128xf32>
    %190 = arith.index_cast %187 : i32 to index
    %c0_85 = arith.constant 0 : index
    %191 = vector.load %arg9[%190, %c0_85] : memref<64x128xf32, #tpu.memory_space<vmem>>, vector<16x128xf32>
    %192 = vector.broadcast %8 : vector<1x128xf32> to vector<16x128xf32>
    %193 = arith.mulf %192, %191 : vector<16x128xf32>
    %194 = arith.addf %189, %193 : vector<16x128xf32>
    %195 = arith.index_cast %187 : i32 to index
    %c0_86 = arith.constant 0 : index
    %196 = vector.load %arg9[%195, %c0_86] : memref<64x128xf32, #tpu.memory_space<vmem>>, vector<16x128xf32>
    tpu.vector_store %arg9[%195, %c0_86], %194 {strides = array<i32>} : memref<64x128xf32, #tpu.memory_space<vmem>>, vector<16x128xf32>,
    %197 = arith.index_cast %187 : i32 to index
    %c0_87 = arith.constant 0 : index
    %198 = vector.load %arg21[%197, %c0_87] : memref<64x128xbf16, #tpu.memory_space<vmem>>, vector<16x128xbf16>
    %199 = arith.extf %198 : vector<16x128xbf16> to vector<16x128xf32>
    %200 = arith.addf %185, %199 : vector<16x128xf32>
    %c2_i32_88 = arith.constant 2 : i32
    %c16_i32_89 = arith.constant 16 : i32
    %201 = arith.muli %c2_i32_88, %c16_i32_89 : i32
    %202 = tpu.assume_multiple %201, 16 : i32
    %203 = vector.broadcast %6 : vector<1x128xf32> to vector<16x128xf32>
    %204 = arith.mulf %203, %194 : vector<16x128xf32>
    %205 = arith.index_cast %202 : i32 to index
    %c0_90 = arith.constant 0 : index
    %206 = vector.load %arg9[%205, %c0_90] : memref<64x128xf32, #tpu.memory_space<vmem>>, vector<16x128xf32>
    %207 = vector.broadcast %8 : vector<1x128xf32> to vector<16x128xf32>
    %208 = arith.mulf %207, %206 : vector<16x128xf32>
    %209 = arith.addf %204, %208 : vector<16x128xf32>
    %210 = arith.index_cast %202 : i32 to index
    %c0_91 = arith.constant 0 : index
    %211 = vector.load %arg9[%210, %c0_91] : memref<64x128xf32, #tpu.memory_space<vmem>>, vector<16x128xf32>
    tpu.vector_store %arg9[%210, %c0_91], %209 {strides = array<i32>} : memref<64x128xf32, #tpu.memory_space<vmem>>, vector<16x128xf32>,
    %212 = arith.index_cast %202 : i32 to index
    %c0_92 = arith.constant 0 : index
    %213 = vector.load %arg21[%212, %c0_92] : memref<64x128xbf16, #tpu.memory_space<vmem>>, vector<16x128xbf16>
    %214 = arith.extf %213 : vector<16x128xbf16> to vector<16x128xf32>
    %215 = arith.addf %200, %214 : vector<16x128xf32>
    %c3_i32_93 = arith.constant 3 : i32
    %c16_i32_94 = arith.constant 16 : i32
    %216 = arith.muli %c3_i32_93, %c16_i32_94 : i32
    %217 = tpu.assume_multiple %216, 16 : i32
    %218 = vector.broadcast %6 : vector<1x128xf32> to vector<16x128xf32>
    %219 = arith.mulf %218, %209 : vector<16x128xf32>
    %220 = arith.index_cast %217 : i32 to index
    %c0_95 = arith.constant 0 : index
    %221 = vector.load %arg9[%220, %c0_95] : memref<64x128xf32, #tpu.memory_space<vmem>>, vector<16x128xf32>
    %222 = vector.broadcast %8 : vector<1x128xf32> to vector<16x128xf32>
    %223 = arith.mulf %222, %221 : vector<16x128xf32>
    %224 = arith.addf %219, %223 : vector<16x128xf32>
    %225 = arith.index_cast %217 : i32 to index
    %c0_96 = arith.constant 0 : index
    %226 = vector.load %arg9[%225, %c0_96] : memref<64x128xf32, #tpu.memory_space<vmem>>, vector<16x128xf32>
    tpu.vector_store %arg9[%225, %c0_96], %224 {strides = array<i32>} : memref<64x128xf32, #tpu.memory_space<vmem>>, vector<16x128xf32>,
    %227 = arith.index_cast %217 : i32 to index
    %c0_97 = arith.constant 0 : index
    %228 = vector.load %arg21[%227, %c0_97] : memref<64x128xbf16, #tpu.memory_space<vmem>>, vector<16x128xbf16>
    %229 = arith.extf %228 : vector<16x128xbf16> to vector<16x128xf32>
    %230 = arith.addf %215, %229 : vector<16x128xf32>
    %c4_i32_98 = arith.constant 4 : i32
    %c0_99 = arith.constant 0 : index
    %c0_100 = arith.constant 0 : index
    %231 = vector.load %arg18[%c0_99, %c0_100] : memref<16x128xf32, #tpu.memory_space<vmem>>, vector<16x128xf32>
    tpu.vector_store %arg18[%c0_99, %c0_100], %224 {strides = array<i32>} : memref<16x128xf32, #tpu.memory_space<vmem>>, vector<16x128xf32>,
    %c0_101 = arith.constant 0 : index
    %c0_102 = arith.constant 0 : index
    %232 = vector.load %arg19[%c0_101, %c0_102] : memref<16x128xf32, #tpu.memory_space<vmem>>, vector<16x128xf32>
    tpu.vector_store %arg19[%c0_101, %c0_102], %230 {strides = array<i32>} : memref<16x128xf32, #tpu.memory_space<vmem>>, vector<16x128xf32>,
    %c1_i32_103 = arith.constant 1 : i32
    %233 = arith.cmpi eq, %arg1, %c1_i32_103 : i32
    %234 = arith.extui %233 : i1 to i32
    %c0_i32_104 = arith.constant 0 : i32
    %235 = arith.cmpi ne, %234, %c0_i32_104 : i32
    scf.if %235 {
      %c0_105 = arith.constant 0 : index
      %c0_106 = arith.constant 0 : index
      %236 = vector.load %arg14[%c0_105, %c0_106] : memref<16x128xbf16, #tpu.memory_space<vmem>>, vector<16x128xbf16>
      %237 = arith.extf %236 : vector<16x128xbf16> to vector<16x128xf32>
      %c0_107 = arith.constant 0 : index
      %c0_108 = arith.constant 0 : index
      %238 = vector.load %arg10[%c0_107, %c0_108] : memref<16x128xf32, #tpu.memory_space<vmem>>, vector<16x128xf32>
      tpu.vector_store %arg10[%c0_107, %c0_108], %237 {strides = array<i32>} : memref<16x128xf32, #tpu.memory_space<vmem>>, vector<16x128xf32>,
      %c0_109 = arith.constant 0 : index
      %c0_110 = arith.constant 0 : index
      %239 = vector.load %arg15[%c0_109, %c0_110] : memref<16x128xf32, #tpu.memory_space<vmem>>, vector<16x128xf32>
      %c0_111 = arith.constant 0 : index
      %c0_112 = arith.constant 0 : index
      %240 = vector.load %arg11[%c0_111, %c0_112] : memref<16x128xf32, #tpu.memory_space<vmem>>, vector<16x128xf32>
      tpu.vector_store %arg11[%c0_111, %c0_112], %239 {strides = array<i32>} : memref<16x128xf32, #tpu.memory_space<vmem>>, vector<16x128xf32>,
      %c0_113 = arith.constant 0 : index
      %c0_114 = arith.constant 0 : index
      %241 = vector.load %arg18[%c0_113, %c0_114] : memref<16x128xf32, #tpu.memory_space<vmem>>, vector<16x128xf32>
      %c0_115 = arith.constant 0 : index
      %c0_116 = arith.constant 0 : index
      %242 = vector.load %arg12[%c0_115, %c0_116] : memref<16x128xf32, #tpu.memory_space<vmem>>, vector<16x128xf32>
      tpu.vector_store %arg12[%c0_115, %c0_116], %241 {strides = array<i32>} : memref<16x128xf32, #tpu.memory_space<vmem>>, vector<16x128xf32>,
      %c0_117 = arith.constant 0 : index
      %c0_118 = arith.constant 0 : index
      %243 = vector.load %arg19[%c0_117, %c0_118] : memref<16x128xf32, #tpu.memory_space<vmem>>, vector<16x128xf32>
      %c0_119 = arith.constant 0 : index
      %c0_120 = arith.constant 0 : index
      %244 = vector.load %arg13[%c0_119, %c0_120] : memref<16x128xf32, #tpu.memory_space<vmem>>, vector<16x128xf32>
      tpu.vector_store %arg13[%c0_119, %c0_120], %243 {strides = array<i32>} : memref<16x128xf32, #tpu.memory_space<vmem>>, vector<16x128xf32>,
    } else {
    }
    return
  }
  func.func @transform_0(%arg0: i32, %arg1: i32) -> (i32, i32) {
    %c2_i32 = arith.constant 2 : i32
    %0 = arith.muli %arg0, %c2_i32 : i32
    %1 = arith.addi %0, %arg1 : i32
    %c0_i32 = arith.constant 0 : i32
    %c0_i32_0 = arith.constant 0 : i32
    return %1, %c0_i32 : i32, i32
  }
  func.func @transform_1(%arg0: i32, %arg1: i32) -> (i32, i32) {
    %c0_i32 = arith.constant 0 : i32
    %c0_i32_0 = arith.constant 0 : i32
    %c0_i32_1 = arith.constant 0 : i32
    return %c0_i32, %c0_i32_0 : i32, i32
  }
  func.func @transform_2(%arg0: i32, %arg1: i32) -> (i32, i32) {
    %c0_i32 = arith.constant 0 : i32
    %c0_i32_0 = arith.constant 0 : i32
    %c0_i32_1 = arith.constant 0 : i32
    return %c0_i32, %c0_i32_0 : i32, i32
  }
  func.func @transform_3(%arg0: i32, %arg1: i32) -> (i32, i32) {
    %c0_i32 = arith.constant 0 : i32
    %c0_i32_0 = arith.constant 0 : i32
    %c0_i32_1 = arith.constant 0 : i32
    return %c0_i32, %c0_i32_0 : i32, i32
  }
  func.func @transform_4(%arg0: i32, %arg1: i32) -> (i32, i32) {
    %c0_i32 = arith.constant 0 : i32
    %c0_i32_0 = arith.constant 0 : i32
    %c0_i32_1 = arith.constant 0 : i32
    return %c0_i32, %c0_i32_0 : i32, i32
  }
  func.func @transform_5(%arg0: i32, %arg1: i32) -> (i32, i32) {
    %c0_i32 = arith.constant 0 : i32
    %c0_i32_0 = arith.constant 0 : i32
    %c0_i32_1 = arith.constant 0 : i32
    return %c0_i32, %c0_i32_0 : i32, i32
  }
  func.func @transform_6(%arg0: i32, %arg1: i32) -> (i32, i32) {
    %c0_i32 = arith.constant 0 : i32
    %c0_i32_0 = arith.constant 0 : i32
    %c0_i32_1 = arith.constant 0 : i32
    return %c0_i32, %c0_i32_0 : i32, i32
  }
  func.func @transform_7(%arg0: i32, %arg1: i32) -> (i32, i32) {
    %c2_i32 = arith.constant 2 : i32
    %0 = arith.muli %arg0, %c2_i32 : i32
    %1 = arith.addi %0, %arg1 : i32
    %c0_i32 = arith.constant 0 : i32
    %c0_i32_0 = arith.constant 0 : i32
    return %1, %c0_i32 : i32, i32
  }
  func.func @transform_8(%arg0: i32, %arg1: i32) -> (i32, i32) {
    %c0_i32 = arith.constant 0 : i32
    %c0_i32_0 = arith.constant 0 : i32
    return %arg0, %c0_i32 : i32, i32
  }
  func.func @transform_9(%arg0: i32, %arg1: i32) -> (i32, i32) {
    %c0_i32 = arith.constant 0 : i32
    %c0_i32_0 = arith.constant 0 : i32
    return %arg0, %c0_i32 : i32, i32
  }
  func.func @transform_10(%arg0: i32, %arg1: i32) -> (i32, i32) {
    %c0_i32 = arith.constant 0 : i32
    %c0_i32_0 = arith.constant 0 : i32
    return %arg0, %c0_i32 : i32, i32
  }
  func.func @transform_11(%arg0: i32, %arg1: i32) -> (i32, i32) {
    %c0_i32 = arith.constant 0 : i32
    %c0_i32_0 = arith.constant 0 : i32
    return %arg0, %c0_i32 : i32, i32
  }
}

</mosaic_0001>

<llo_original>
// kernel: tpu_custom_call.1
$region0: #{tpu_custom_call.1}
  #allocation0 [shape = 'u32[]', space=smem, size = 0x4, offset = 0x4, fixed_abs, tag = 'smem constant byte address 0x4 - core index']
  #allocation1 [shape = 'u32[144,128]{1,0:T(1,128)}', space=vmem, size = 0x12000, scoped, tag = 'internal scratch']
  #allocation2 [shape = 'bf16[16,128]{1,0:T(16,128)(2,1)}', space=vmem, size = 0x1000, scoped, tag = 'scratch operand']
  #allocation3 [shape = 'f32[16,128]{1,0:T(8,128)}', space=vmem, size = 0x2000, scoped, tag = 'scratch operand']
  #allocation4 [shape = 'f32[16,128]{1,0:T(8,128)}', space=vmem, size = 0x2000, scoped, tag = 'scratch operand']
  #allocation5 [shape = 'f32[16,128]{1,0:T(8,128)}', space=vmem, size = 0x2000, scoped, tag = 'scratch operand']
  #allocation6 [shape = 'f32[16,128]{1,0:T(8,128)}', space=vmem, size = 0x2000, scoped, tag = 'scratch operand']
  #allocation7 [shape = 'f32[16,128]{1,0:T(8,128)}', space=vmem, size = 0x2000, scoped, tag = 'scratch operand']
  #allocation8 [shape = 'f32[64,128]{1,0:T(8,128)}', space=vmem, size = 0x8000, scoped, tag = 'scratch operand']
  #allocation9 [shape = 'bf16[64,128]{1,0:T(16,128)(2,1)}', space=vmem, size = 0x4000, scoped, tag = 'scratch operand']
  %s0 = inlined_call_operand.vmem [shape: f32[128,16], index: 0, kind: input, shape index: {}]
  %s1 = inlined_call_operand.vmem [shape: f32[16,128], index: 1, kind: input, shape index: {}]
  %s2 = inlined_call_operand.vmem [shape: bf16[128,128], index: 2, kind: input, shape index: {}]
  %s3 = inlined_call_operand.vmem [shape: bf16[128,128], index: 3, kind: input, shape index: {}]
  %s4 = inlined_call_operand.vmem [shape: f32[1,128], index: 4, kind: input, shape index: {}]
  %s5 = inlined_call_operand.vmem [shape: f32[1,128], index: 5, kind: input, shape index: {}]
  %s6 = inlined_call_operand.vmem [shape: f32[1,128], index: 6, kind: input, shape index: {}]
  %s7 = inlined_call_operand.hbm [shape: f32[128,128], index: 7, kind: output, shape index: {0}]
  %s8 = inlined_call_operand.hbm [shape: f32[16,128], index: 8, kind: output, shape index: {1}]
  %s9 = inlined_call_operand.hbm [shape: f32[16,128], index: 9, kind: output, shape index: {2}]
  %s10 = inlined_call_operand.hbm [shape: f32[16,128], index: 10, kind: output, shape index: {3}]
  %s11 = inlined_call_operand.hbm [shape: f32[16,128], index: 11, kind: output, shape index: {4}]
  %12 = xla_tuple %s7, %s8, %s9, %s10, %s11
  %s13 = sld [smem:[#allocation0]]
  $region101: #{tpu_custom_call.1} parent=0
    _
  %s15 = ssub.s32 1, %s13
  %s16 = scalar_select 0, %s15, %s13
  $region1: #{tpu_custom_call.1} parent=0
    #allocation10 [shape = 'u8[65536]{0}', space=vmem, size = 0x10000, scoped, tag = 'output window, operand 0']
    #allocation11 [shape = 's32[2]{0}', space=sflag, size = 0x8, scoped, tag = 'scoped memory for tpu_custom_call.1']
    #allocation12 [shape = 'u8[8192]{0}', space=vmem, size = 0x2000, scoped, tag = 'output window, operand 1, single buffered']
    #allocation13 [shape = 's32[1]{0}', space=sflag, size = 0x4, scoped, tag = 'scoped memory for tpu_custom_call.1']
    #allocation14 [shape = 'u8[8192]{0}', space=vmem, size = 0x2000, scoped, tag = 'output window, operand 2, single buffered']
    #allocation15 [shape = 'u8[8192]{0}', space=vmem, size = 0x2000, scoped, tag = 'output window, operand 3, single buffered']
    #allocation16 [shape = 's32[1]{0}', space=sflag, size = 0x4, scoped, tag = 'scoped memory for tpu_custom_call.1']
    #allocation17 [shape = 'u8[8192]{0}', space=vmem, size = 0x2000, scoped, tag = 'output window, operand 4, single buffered']
    %17 = vsyncpa [#allocation11], 0
    %s18 = scalar_lea.sflag [#allocation11], 1
    %19 = vsyncpa %s18, 0
    %20 = vsyncpa [#allocation13], 0
    %21 = vsyncpa [#allocation16], 0
    loop: start=0, step=1, limit=4
    $region2: #{tpu_custom_call.1} parent=1 // loop_pre_header
      _
    $region3: #{tpu_custom_call.1} parent=1 // loop_header
      %s23 = sphi 0, %s27
      %p24 = scmp.ge.s32.totalorder %s23, 4
      %s30 = sphi 0, %s42
      %s31 = sphi 0, %s38
      %s32 = sphi 0, %s30
      %s33 = sphi 0, %s31
      %s34 = sphi 0, %s32
      %s35 = sphi 0, %s33
      %s49 = sphi 0, %s51
      %s52 = sphi 0, %s49
      %s53 = sphi 0, %s52
      %s69 = sphi 0, %s53
      %s73 = sphi 0, %s73
      %s75 = sphi 0, %s73
      %s76 = sphi 0, %s75
      %s90 = sphi 0, %s76
      %s94 = sphi 0, %s94
      %s96 = sphi 0, %s94
      %s97 = sphi 0, %s96
      %s111 = sphi 0, %s97
      %s115 = sphi 0, %s115
      %s117 = sphi 0, %s115
      %s118 = sphi 0, %s117
      %s132 = sphi 0, %s118
      %s136 = sphi 0, %s136
      %s138 = sphi 0, %s136
      %s139 = sphi 0, %s138
      %s153 = sphi 0, %s139
      %s157 = sphi 0, %s157
      %s159 = sphi 0, %s157
      %s160 = sphi 0, %s159
      %s174 = sphi 0, %s160
      %s178 = sphi 0, %s178
      %s180 = sphi 0, %s178
      %s181 = sphi 0, %s180
      %s195 = sphi 0, %s181
      %s205 = sphi 0, %s207
      %s208 = sphi 0, %s205
      %s209 = sphi 0, %s208
      %s225 = sphi 0, %s209
      %s231 = sphi 0, %s233
      %s234 = sphi 0, %s231
      %s235 = sphi 0, %s234
      %s251 = sphi 0, %s235
      %s257 = sphi 0, %s259
      %s260 = sphi 0, %s257
      %s261 = sphi 0, %s260
      %s277 = sphi 0, %s261
      %s283 = sphi 0, %s285
      %s286 = sphi 0, %s283
      %s287 = sphi 0, %s286
      %s303 = sphi 0, %s287
      %s309 = sphi 0, %s311
      %s312 = sphi 0, %s309
      %s313 = sphi 0, %s312
      %s329 = sphi 0, %s313
    $region4: #{tpu_custom_call.1} parent=1 // loop_header_branch
      %26 = sbr.rel (%p24) target = $region8
    $region5: #{tpu_custom_call.1} parent=1 // loop_body
      %s28 = ssub.s32 %s23, 1
      %s29 = ssub.s32 %s23, 2
      %s36 = sadd.s32 1, %s31
      %p37 = scmp.ge.s32.totalorder %s36, 2
      %s38 = scalar_select %p37, 0, %s36
      %s39 = sadd.s32 1, %s30
      %s40 = scalar_select %p37, %s39, %s30
      %p41 = scmp.ge.s32.totalorder %s40, 1
      %s42 = scalar_select %p41, 0, %s40
      %s43 = smul.u32 %s30, 2
      %s44 = sadd.s32 %s43, %s31
      %s45 = smul.u32 %s42, 2
      %s46 = sadd.s32 %s45, %s38
      %s47 = ssub.s32 %s44, %s46
      %p48 = scmp.eq.s32.totalorder %s47, 0
      %s50 = sadd.s32 %s49, 1
      %s51 = scalar_select %p48, %s49, %s50
      %p54 = pneg %p48
      %p55 = scmp.eq.s32.totalorder %s23, 1
      %p56 = por %p54, %p55
      %p57 = scmp.ne.s32.totalorder %s49, %s52
      %p58 = scmp.eq.s32.totalorder %s23, 0
      %p59 = por %p57, %p58
      %p60 = scmp.ne.s32.totalorder %s49, %s52
      %p61 = scmp.eq.s32.totalorder %s28, 1
      %p62 = por %p60, %p61
      %p63 = scmp.ne.s32.totalorder %s52, %s53
      %p64 = scmp.eq.s32.totalorder %s28, 0
      %p65 = por %p63, %p64
      %p66 = scmp.ne.s32.totalorder %s52, %s53
      %p67 = scmp.eq.s32.totalorder %s29, 1
      %p68 = por %p66, %p67
      %p70 = scmp.ne.s32.totalorder %s53, %s69
      %p71 = scmp.eq.s32.totalorder %s29, 0
      %p72 = por %p70, %p71
      %s74 = sadd.s32 %s73, 1
      %p77 = scmp.eq.s32.totalorder %s23, 1
      %p78 = scmp.ne.s32.totalorder %s73, %s75
      %p79 = scmp.eq.s32.totalorder %s23, 0
      %p80 = por %p78, %p79
      %p81 = scmp.ne.s32.totalorder %s73, %s75
      %p82 = scmp.eq.s32.totalorder %s28, 1
      %p83 = por %p81, %p82
      %p84 = scmp.ne.s32.totalorder %s75, %s76
      %p85 = scmp.eq.s32.totalorder %s28, 0
      %p86 = por %p84, %p85
      %p87 = scmp.ne.s32.totalorder %s75, %s76
      %p88 = scmp.eq.s32.totalorder %s29, 1
      %p89 = por %p87, %p88
      %p91 = scmp.ne.s32.totalorder %s76, %s90
      %p92 = scmp.eq.s32.totalorder %s29, 0
      %p93 = por %p91, %p92
      %s95 = sadd.s32 %s94, 1
      %p98 = scmp.eq.s32.totalorder %s23, 1
      %p99 = scmp.ne.s32.totalorder %s94, %s96
      %p100 = scmp.eq.s32.totalorder %s23, 0
      %p101 = por %p99, %p100
      %p102 = scmp.ne.s32.totalorder %s94, %s96
      %p103 = scmp.eq.s32.totalorder %s28, 1
      %p104 = por %p102, %p103
      %p105 = scmp.ne.s32.totalorder %s96, %s97
      %p106 = scmp.eq.s32.totalorder %s28, 0
      %p107 = por %p105, %p106
      %p108 = scmp.ne.s32.totalorder %s96, %s97
      %p109 = scmp.eq.s32.totalorder %s29, 1
      %p110 = por %p108, %p109
      %p112 = scmp.ne.s32.totalorder %s97, %s111
      %p113 = scmp.eq.s32.totalorder %s29, 0
      %p114 = por %p112, %p113
      %s116 = sadd.s32 %s115, 1
      %p119 = scmp.eq.s32.totalorder %s23, 1
      %p120 = scmp.ne.s32.totalorder %s115, %s117
      %p121 = scmp.eq.s32.totalorder %s23, 0
      %p122 = por %p120, %p121
      %p123 = scmp.ne.s32.totalorder %s115, %s117
      %p124 = scmp.eq.s32.totalorder %s28, 1
      %p125 = por %p123, %p124
      %p126 = scmp.ne.s32.totalorder %s117, %s118
      %p127 = scmp.eq.s32.totalorder %s28, 0
      %p128 = por %p126, %p127
      %p129 = scmp.ne.s32.totalorder %s117, %s118
      %p130 = scmp.eq.s32.totalorder %s29, 1
      %p131 = por %p129, %p130
      %p133 = scmp.ne.s32.totalorder %s118, %s132
      %p134 = scmp.eq.s32.totalorder %s29, 0
      %p135 = por %p133, %p134
      %s137 = sadd.s32 %s136, 1
      %p140 = scmp.eq.s32.totalorder %s23, 1
      %p141 = scmp.ne.s32.totalorder %s136, %s138
      %p142 = scmp.eq.s32.totalorder %s23, 0
      %p143 = por %p141, %p142
      %p144 = scmp.ne.s32.totalorder %s136, %s138
      %p145 = scmp.eq.s32.totalorder %s28, 1
      %p146 = por %p144, %p145
      %p147 = scmp.ne.s32.totalorder %s138, %s139
      %p148 = scmp.eq.s32.totalorder %s28, 0
      %p149 = por %p147, %p148
      %p150 = scmp.ne.s32.totalorder %s138, %s139
      %p151 = scmp.eq.s32.totalorder %s29, 1
      %p152 = por %p150, %p151
      %p154 = scmp.ne.s32.totalorder %s139, %s153
      %p155 = scmp.eq.s32.totalorder %s29, 0
      %p156 = por %p154, %p155
      %s158 = sadd.s32 %s157, 1
      %p161 = scmp.eq.s32.totalorder %s23, 1
      %p162 = scmp.ne.s32.totalorder %s157, %s159
      %p163 = scmp.eq.s32.totalorder %s23, 0
      %p164 = por %p162, %p163
      %p165 = scmp.ne.s32.totalorder %s157, %s159
      %p166 = scmp.eq.s32.totalorder %s28, 1
      %p167 = por %p165, %p166
      %p168 = scmp.ne.s32.totalorder %s159, %s160
      %p169 = scmp.eq.s32.totalorder %s28, 0
      %p170 = por %p168, %p169
      %p171 = scmp.ne.s32.totalorder %s159, %s160
      %p172 = scmp.eq.s32.totalorder %s29, 1
      %p173 = por %p171, %p172
      %p175 = scmp.ne.s32.totalorder %s160, %s174
      %p176 = scmp.eq.s32.totalorder %s29, 0
      %p177 = por %p175, %p176
      %s179 = sadd.s32 %s178, 1
      %p182 = scmp.eq.s32.totalorder %s23, 1
      %p183 = scmp.ne.s32.totalorder %s178, %s180
      %p184 = scmp.eq.s32.totalorder %s23, 0
      %p185 = por %p183, %p184
      %p186 = scmp.ne.s32.totalorder %s178, %s180
      %p187 = scmp.eq.s32.totalorder %s28, 1
      %p188 = por %p186, %p187
      %p189 = scmp.ne.s32.totalorder %s180, %s181
      %p190 = scmp.eq.s32.totalorder %s28, 0
      %p191 = por %p189, %p190
      %p192 = scmp.ne.s32.totalorder %s180, %s181
      %p193 = scmp.eq.s32.totalorder %s29, 1
      %p194 = por %p192, %p193
      %p196 = scmp.ne.s32.totalorder %s181, %s195
      %p197 = scmp.eq.s32.totalorder %s29, 0
      %p198 = por %p196, %p197
      %s199 = smul.u32 %s30, 2
      %s200 = sadd.s32 %s199, %s31
      %s201 = smul.u32 %s42, 2
      %s202 = sadd.s32 %s201, %s38
      %s203 = ssub.s32 %s200, %s202
      %p204 = scmp.eq.s32.totalorder %s203, 0
      %s206 = sadd.s32 %s205, 1
      %s207 = scalar_select %p204, %s205, %s206
      %p210 = pneg %p204
      %p211 = scmp.eq.s32.totalorder %s23, 1
      %p212 = por %p210, %p211
      %p213 = scmp.ne.s32.totalorder %s205, %s208
      %p214 = scmp.eq.s32.totalorder %s23, 0
      %p215 = por %p213, %p214
      %p216 = scmp.ne.s32.totalorder %s205, %s208
      %p217 = scmp.eq.s32.totalorder %s28, 1
      %p218 = por %p216, %p217
      %p219 = scmp.ne.s32.totalorder %s208, %s209
      %p220 = scmp.eq.s32.totalorder %s28, 0
      %p221 = por %p219, %p220
      %p222 = scmp.ne.s32.totalorder %s208, %s209
      %p223 = scmp.eq.s32.totalorder %s29, 1
      %p224 = por %p222, %p223
      %p226 = scmp.ne.s32.totalorder %s209, %s225
      %p227 = scmp.eq.s32.totalorder %s29, 0
      %p228 = por %p226, %p227
      %s229 = ssub.s32 %s30, %s42
      %p230 = scmp.eq.s32.totalorder %s229, 0
      %s232 = sadd.s32 %s231, 1
      %s233 = scalar_select %p230, %s231, %s232
      %p236 = pneg %p230
      %p237 = scmp.eq.s32.totalorder %s23, 1
      %p238 = por %p236, %p237
      %p239 = scmp.ne.s32.totalorder %s231, %s234
      %p240 = scmp.eq.s32.totalorder %s23, 0
      %p241 = por %p239, %p240
      %p242 = scmp.ne.s32.totalorder %s231, %s234
      %p243 = scmp.eq.s32.totalorder %s28, 1
      %p244 = por %p242, %p243
      %p245 = scmp.ne.s32.totalorder %s234, %s235
      %p246 = scmp.eq.s32.totalorder %s28, 0
      %p247 = por %p245, %p246
      %p248 = scmp.ne.s32.totalorder %s234, %s235
      %p249 = scmp.eq.s32.totalorder %s29, 1
      %p250 = por %p248, %p249
      %p252 = scmp.ne.s32.totalorder %s235, %s251
      %p253 = scmp.eq.s32.totalorder %s29, 0
      %p254 = por %p252, %p253
      %s255 = ssub.s32 %s30, %s42
      %p256 = scmp.eq.s32.totalorder %s255, 0
      %s258 = sadd.s32 %s257, 1
      %s259 = scalar_select %p256, %s257, %s258
      %p262 = pneg %p256
      %p263 = scmp.eq.s32.totalorder %s23, 1
      %p264 = por %p262, %p263
      %p265 = scmp.ne.s32.totalorder %s257, %s260
      %p266 = scmp.eq.s32.totalorder %s23, 0
      %p267 = por %p265, %p266
      %p268 = scmp.ne.s32.totalorder %s257, %s260
      %p269 = scmp.eq.s32.totalorder %s28, 1
      %p270 = por %p268, %p269
      %p271 = scmp.ne.s32.totalorder %s260, %s261
      %p272 = scmp.eq.s32.totalorder %s28, 0
      %p273 = por %p271, %p272
      %p274 = scmp.ne.s32.totalorder %s260, %s261
      %p275 = scmp.eq.s32.totalorder %s29, 1
      %p276 = por %p274, %p275
      %p278 = scmp.ne.s32.totalorder %s261, %s277
      %p279 = scmp.eq.s32.totalorder %s29, 0
      %p280 = por %p278, %p279
      %s281 = ssub.s32 %s30, %s42
      %p282 = scmp.eq.s32.totalorder %s281, 0
      %s284 = sadd.s32 %s283, 1
      %s285 = scalar_select %p282, %s283, %s284
      %p288 = pneg %p282
      %p289 = scmp.eq.s32.totalorder %s23, 1
      %p290 = por %p288, %p289
      %p291 = scmp.ne.s32.totalorder %s283, %s286
      %p292 = scmp.eq.s32.totalorder %s23, 0
      %p293 = por %p291, %p292
      %p294 = scmp.ne.s32.totalorder %s283, %s286
      %p295 = scmp.eq.s32.totalorder %s28, 1
      %p296 = por %p294, %p295
      %p297 = scmp.ne.s32.totalorder %s286, %s287
      %p298 = scmp.eq.s32.totalorder %s28, 0
      %p299 = por %p297, %p298
      %p300 = scmp.ne.s32.totalorder %s286, %s287
      %p301 = scmp.eq.s32.totalorder %s29, 1
      %p302 = por %p300, %p301
      %p304 = scmp.ne.s32.totalorder %s287, %s303
      %p305 = scmp.eq.s32.totalorder %s29, 0
      %p306 = por %p304, %p305
      %s307 = ssub.s32 %s30, %s42
      %p308 = scmp.eq.s32.totalorder %s307, 0
      %s310 = sadd.s32 %s309, 1
      %s311 = scalar_select %p308, %s309, %s310
      %p314 = pneg %p308
      %p315 = scmp.eq.s32.totalorder %s23, 1
      %p316 = por %p314, %p315
      %p317 = scmp.ne.s32.totalorder %s309, %s312
      %p318 = scmp.eq.s32.totalorder %s23, 0
      %p319 = por %p317, %p318
      %p320 = scmp.ne.s32.totalorder %s309, %s312
      %p321 = scmp.eq.s32.totalorder %s28, 1
      %p322 = por %p320, %p321
      %p323 = scmp.ne.s32.totalorder %s312, %s313
      %p324 = scmp.eq.s32.totalorder %s28, 0
      %p325 = por %p323, %p324
      %p326 = scmp.ne.s32.totalorder %s312, %s313
      %p327 = scmp.eq.s32.totalorder %s29, 1
      %p328 = por %p326, %p327
      %p330 = scmp.ne.s32.totalorder %s313, %s329
      %p331 = scmp.eq.s32.totalorder %s29, 0
      %p332 = por %p330, %p331
      %p333 = scmp.le.s32.totalorder 1, %s23
      %p334 = scmp.lt.s32.totalorder %s23, 3
      %p335 = pnand %p333, %p334
      %p336 = pneg %p335
      // Predicated region
      $region9: #{tpu_custom_call.1} parent=5 // pred_check
        _
      $region10: #{tpu_custom_call.1} parent=5 // pred_check_branch
        %338 = sbr.rel (%p335) target = $region12
      $region11: #{tpu_custom_call.1} parent=5 // pred_region
        %s339 = ssub.s32 %s23, 1
        // Predicated region
        $region13: #{tpu_custom_call.1} parent=11 // pred_check
          %p340 = pneg %p86
        $region14: #{tpu_custom_call.1} parent=11 // pred_check_branch
          %342 = sbr.rel (%p340) target = $region16
        $region15: #{tpu_custom_call.1} parent=11 // pred_region
          _
        $region16: #{tpu_custom_call.1} parent=11 // pred_fallthru
          _
        // Predicated region
        $region17: #{tpu_custom_call.1} parent=11 // pred_check
          %p343 = pneg %p107
        $region18: #{tpu_custom_call.1} parent=11 // pred_check_branch
          %345 = sbr.rel (%p343) target = $region20
        $region19: #{tpu_custom_call.1} parent=11 // pred_region
          _
        $region20: #{tpu_custom_call.1} parent=11 // pred_fallthru
          _
        // Predicated region
        $region21: #{tpu_custom_call.1} parent=11 // pred_check
          %p346 = pneg %p128
        $region22: #{tpu_custom_call.1} parent=11 // pred_check_branch
          %348 = sbr.rel (%p346) target = $region24
        $region23: #{tpu_custom_call.1} parent=11 // pred_region
          _
        $region24: #{tpu_custom_call.1} parent=11 // pred_fallthru
          _
        // Predicated region
        $region25: #{tpu_custom_call.1} parent=11 // pred_check
          %p349 = pneg %p149
        $region26: #{tpu_custom_call.1} parent=11 // pred_check_branch
          %351 = sbr.rel (%p349) target = $region28
        $region27: #{tpu_custom_call.1} parent=11 // pred_region
          _
        $region28: #{tpu_custom_call.1} parent=11 // pred_fallthru
          _
        // Predicated region
        $region29: #{tpu_custom_call.1} parent=11 // pred_check
          %p352 = pneg %p170
        $region30: #{tpu_custom_call.1} parent=11 // pred_check_branch
          %354 = sbr.rel (%p352) target = $region32
        $region31: #{tpu_custom_call.1} parent=11 // pred_region
          _
        $region32: #{tpu_custom_call.1} parent=11 // pred_fallthru
          _
        // Predicated region
        $region33: #{tpu_custom_call.1} parent=11 // pred_check
          %p355 = pneg %p191
        $region34: #{tpu_custom_call.1} parent=11 // pred_check_branch
          %357 = sbr.rel (%p355) target = $region36
        $region35: #{tpu_custom_call.1} parent=11 // pred_region
          _
        $region36: #{tpu_custom_call.1} parent=11 // pred_fallthru
          _
      $region12: #{tpu_custom_call.1} parent=5 // pred_fallthru
        _
      %p358 = scmp.lt.s32.totalorder %s23, 2
      // Predicated region
      $region37: #{tpu_custom_call.1} parent=5 // pred_check
        %p359 = pneg %p358
      $region38: #{tpu_custom_call.1} parent=5 // pred_check_branch
        %361 = sbr.rel (%p359) target = $region40
      $region39: #{tpu_custom_call.1} parent=5 // pred_region
        // Predicated region
        $region41: #{tpu_custom_call.1} parent=39 // pred_check
          %p362 = pneg %p59
        $region42: #{tpu_custom_call.1} parent=39 // pred_check_branch
          %364 = sbr.rel (%p362) target = $region44
        $region43: #{tpu_custom_call.1} parent=39 // pred_region
          %s365 = smul.u32 %s30, 2
          %s366 = sadd.s32 %s365, %s31
          %s367 = smul.u32 8, %s366
          %p368 = scmp.lt.s32.totalorder %s367, 15
          %s369 = scalar_select %p368, %s367, 15
          %s370 = smul.addr %s369, 8
          %s371 = scalar_lea.vmem %s0, %s370
          %s372 = smul.u32 %s30, 2
          %s373 = sadd.s32 %s372, %s31
          %s374 = smul.u32 8, %s373
        $region44: #{tpu_custom_call.1} parent=39 // pred_fallthru
          _
      $region40: #{tpu_custom_call.1} parent=5 // pred_fallthru
        _
      %p375 = scmp.le.s32.totalorder 1, %s23
      %p376 = scmp.lt.s32.totalorder %s23, 3
      %p377 = pnand %p375, %p376
      %p378 = pneg %p377
      // Predicated region
      $region45: #{tpu_custom_call.1} parent=5 // pred_check
        _
      $region46: #{tpu_custom_call.1} parent=5 // pred_check_branch
        %380 = sbr.rel (%p377) target = $region48
      $region47: #{tpu_custom_call.1} parent=5 // pred_region
        %s381 = ssub.s32 %s23, 1
        %s382 = smul.u32 %s32, 2
        %s383 = sadd.s32 %s382, %s33
        %s384 = smul.u32 8, %s383
        %p385 = scmp.lt.s32.totalorder %s384, 15
        %s386 = scalar_select %p385, %s384, 15
        %s387 = smul.addr %s386, 8
        %s388 = scalar_lea.vmem %s0, %s387
        %p389 = pneg %p65
        %p390 = pneg %p62
        %p391 = pneg %p86
        %p392 = pneg %p83
        %p393 = pneg %p107
        %p394 = pneg %p104
        %p395 = pneg %p128
        %p396 = pneg %p125
        %p397 = pneg %p149
        %p398 = pneg %p146
        %p399 = pneg %p170
        %p400 = pneg %p167
        %p401 = pneg %p191
        %p402 = pneg %p188
        %p403 = pneg %p221
        %p404 = pneg %p218
        %s405 = sand.u32 %s208, 1
        %s406 = scalar_lea.sflag [#allocation11], %s405
        %s407 = sand.u32 %s208, 1
        %s408 = smul.addr %s407, 64
        %s409 = scalar_lea.vmem [#allocation10], %s408
        %p410 = pneg %p247
        %p411 = pneg %p244
        %p412 = pneg %p273
        %p413 = pneg %p270
        %p414 = pneg %p299
        %p415 = pneg %p296
        %p416 = pneg %p325
        %p417 = pneg %p322
        %s418 = smul.u32 %s32, 2
        %s419 = sadd.s32 %s418, %s33
        %s420 = smul.u32 8, %s419
        %p421 = scmp.lt.s32.totalorder %s420, 15
        %s422 = scalar_select %p421, %s420, 15
        %s423 = smul.addr %s422, 8
        %s424 = scalar_lea.vmem %s0, %s423
        %s425 = smul.u32 %s32, 2
        %s426 = sadd.s32 %s425, %s33
        %s427 = smul.u32 8, %s426
        %s428 = smul.u32 %s32, 2
        %s429 = sadd.s32 %s428, %s33
        %s430 = smul.u32 8, %s429
        %s431 = smul.u32 2, %s32
        %s432 = smul.u32 2, %s32
        %s433 = smul.u32 2, %s32
        %s434 = smul.u32 2, %s32
        %p436 = scmp.eq.s32.totalorder %s33, 0
        // Predicated region
        $region49: #{tpu_custom_call.1} parent=47 // pred_check
          %p437 = pneg %p436
        $region50: #{tpu_custom_call.1} parent=47 // pred_check_branch
          %439 = sbr.rel (%p437) target = $region52
        $region51: #{tpu_custom_call.1} parent=47 // pred_region
          %440 = vst [vmem:[#allocation2] sm:$0xff] 0
          %441 = vst [vmem:[#allocation3] sm:$0xff] 0.0
          %442 = vst [vmem:[#allocation3 + $0x8] sm:$0xff] 0.0
          %443 = vst [vmem:[#allocation4] sm:$0xff] 0.0
          %444 = vst [vmem:[#allocation4 + $0x8] sm:$0xff] 0.0
          %445 = vst [vmem:[#allocation5] sm:$0xff] 0.0
          %446 = vst [vmem:[#allocation5 + $0x8] sm:$0xff] 0.0
          %447 = vst [vmem:[#allocation6] sm:$0xff] 0.0
          %448 = vst [vmem:[#allocation6 + $0x8] sm:$0xff] 0.0
          %449 = vst [vmem:[#allocation7] sm:$0xff] 0.0
          %450 = vst [vmem:[#allocation7 + $0x8] sm:$0xff] 0.0
        $region52: #{tpu_custom_call.1} parent=47 // pred_fallthru
          _
        %v451 = vld [vmem:[%s4] sm:$0x1]
        %v452 = vld [vmem:[%s5] sm:$0x1]
        %v453 = vld [vmem:[%s2] sm:$0xf]
        %v454 = vld [vmem:[%s2 + $0x4] sm:$0xf]
        %v455 = vld [vmem:[%s2 + $0x8] sm:$0xf]
        %v456 = vld [vmem:[%s2 + $0xc] sm:$0xf]
        %v457 = vld [vmem:[%s2 + $0x10] sm:$0xf]
        %v458 = vld [vmem:[%s2 + $0x14] sm:$0xf]
        %v459 = vld [vmem:[%s2 + $0x18] sm:$0xf]
        %v460 = vld [vmem:[%s2 + $0x1c] sm:$0xf]
        %v461 = vld [vmem:[%s2 + $0x20] sm:$0xf]
        %v462 = vld [vmem:[%s2 + $0x24] sm:$0xf]
        %v463 = vld [vmem:[%s2 + $0x28] sm:$0xf]
        %v464 = vld [vmem:[%s2 + $0x2c] sm:$0xf]
        %v465 = vld [vmem:[%s2 + $0x30] sm:$0xf]
        %v466 = vld [vmem:[%s2 + $0x34] sm:$0xf]
        %v467 = vld [vmem:[%s2 + $0x38] sm:$0xf]
        %v468 = vld [vmem:[%s2 + $0x3c] sm:$0xf]
        %v469 = vld [vmem:[%s6] sm:$0x1]
        %v470 = vsub.f32 1.0, %v469
        %v471 = vld [vmem:[%s424] sm:$0xff]
        %v472 = vld [vmem:[%s424 + $0x8] sm:$0xff]
        %v473 = vld [vmem:[%s424 + $0x10] sm:$0xff]
        %v474 = vld [vmem:[%s424 + $0x18] sm:$0xff]
        %v475 = vld [vmem:[%s424 + $0x20] sm:$0xff]
        %v476 = vld [vmem:[%s424 + $0x28] sm:$0xff]
        %v477 = vld [vmem:[%s424 + $0x30] sm:$0xff]
        %v478 = vld [vmem:[%s424 + $0x38] sm:$0xff]
        %v479 = vld [vmem:[%s1] sm:$0xff]
        %v480 = vld [vmem:[%s1 + $0x8] sm:$0xff]
        %vm481 = vcmask 130048
        %v483 = vsel %vm481, %v471, 0
        %v486 = vsel %vm481, %v472, 0
        %v489 = vsel %vm481, %v473, 0
        %v492 = vsel %vm481, %v474, 0
        %v495 = vsel %vm481, %v475, 0
        %v498 = vsel %vm481, %v476, 0
        %v501 = vsel %vm481, %v477, 0
        %v504 = vsel %vm481, %v478, 0
        %506 = vmatprep.subr.mxu0 0.0
        %507 = vmatpush1.msra.mxu0 %v479
        %508 = vmatprep.subr.mxu0 0.0
        %509 = vmatpush1.msra.mxu0 %v480
        %510 = vmatprep.subr.mxu0 0.0
        %511 = vmatpush1.msra.mxu0 0.0
        %512 = vmatprep.subr.mxu0 0.0
        %513 = vmatpush1.msra.mxu0 0.0
        %514 = vmatprep.subr.mxu0 0.0
        %515 = vmatpush1.msra.mxu0 0.0
        %516 = vmatprep.subr.mxu0 0.0
        %517 = vmatpush1.msra.mxu0 0.0
        %518 = vmatprep.subr.mxu0 0.0
        %519 = vmatpush1.msra.mxu0 0.0
        %520 = vmatprep.subr.mxu0 0.0
        %521 = vmatpush1.msra.mxu0 0.0
        %522 = vmatprep.subr.mxu0 0.0
        %523 = vmatpush1.msra.mxu0 0.0
        %524 = vmatprep.subr.mxu0 0.0
        %525 = vmatpush1.msra.mxu0 0.0
        %526 = vmatprep.subr.mxu0 0.0
        %527 = vmatpush1.msra.mxu0 0.0
        %528 = vmatprep.subr.mxu0 0.0
        %529 = vmatpush1.msra.mxu0 0.0
        %530 = vmatprep.subr.mxu0 0.0
        %531 = vmatpush1.msra.mxu0 0.0
        %532 = vmatprep.subr.mxu0 0.0
        %533 = vmatpush1.msra.mxu0 0.0
        %534 = vmatprep.subr.mxu0 0.0
        %535 = vmatpush1.msra.mxu0 0.0
        %536 = vmatprep.subr.mxu0 0.0
        %537 = vmatpush1.msra.mxu0 0.0
        %538 = vmatprep.subr.mxu0 0.0
        %539 = vmatpush1.msra.mxu0 0.0
        %540 = vmatprep.subr.mxu0 0.0
        %541 = vmatpush1.msra.mxu0 0.0
        %542 = vmatprep.subr.mxu0 0.0
        %543 = vmatpush1.msra.mxu0 0.0
        %544 = vmatprep.subr.mxu0 0.0
        %545 = vmatpush1.msra.mxu0 0.0
        %546 = vmatprep.subr.mxu0 0.0
        %547 = vmatpush1.msra.mxu0 0.0
        %548 = vmatprep.subr.mxu0 0.0
        %549 = vmatpush1.msra.mxu0 0.0
        %550 = vmatprep.subr.mxu0 0.0
        %551 = vmatpush1.msra.mxu0 0.0
        %552 = vmatprep.subr.mxu0 0.0
        %553 = vmatpush1.msra.mxu0 0.0
        %554 = vmatprep.subr.mxu0 0.0
        %555 = vmatpush1.msra.mxu0 0.0
        %556 = vmatprep.subr.mxu0 0.0
        %557 = vmatpush1.msra.mxu0 0.0
        %558 = vmatprep.subr.mxu0 0.0
        %559 = vmatpush1.msra.mxu0 0.0
        %560 = vmatprep.subr.mxu0 0.0
        %561 = vmatpush1.msra.mxu0 0.0
        %562 = vmatprep.subr.mxu0 0.0
        %563 = vmatpush1.msra.mxu0 0.0
        %564 = vmatprep.subr.mxu0 0.0
        %565 = vmatpush1.msra.mxu0 0.0
        %566 = vmatprep.subr.mxu0 0.0
        %567 = vmatpush1.msra.mxu0 0.0
        %568 = vmatprep.subr.mxu0 0.0
        %569 = vmatpush1.msra.mxu0 0.0
        %570 = vmatprep.mubr.f32.mxu0 0.0
        %571 = vmatmul.mubr.f32.gmra.mrb[0].mxu0 %v483
        %v572 = vpop.f32.mrb[0].mxu0
        %v573 = vadd.f32 0.0, %v572
        %v574 = vpop.f32.mrb[0].mxu0
        %575 = vmatprep.mubr.f32.mxu0 0.0
        %576 = vmatmul.mubr.f32.gmra.mrb[0].mxu0 %v486
        %v577 = vpop.f32.mrb[0].mxu0
        %v578 = vadd.f32 0.0, %v577
        %v579 = vpop.f32.mrb[0].mxu0
        %580 = vmatprep.mubr.f32.mxu0 0.0
        %581 = vmatmul.mubr.f32.gmra.mrb[0].mxu0 %v489
        %v582 = vpop.f32.mrb[0].mxu0
        %v583 = vadd.f32 0.0, %v582
        %v584 = vpop.f32.mrb[0].mxu0
        %585 = vmatprep.mubr.f32.mxu0 0.0
        %586 = vmatmul.mubr.f32.gmra.mrb[0].mxu0 %v492
        %v587 = vpop.f32.mrb[0].mxu0
        %v588 = vadd.f32 0.0, %v587
        %v589 = vpop.f32.mrb[0].mxu0
        %590 = vmatprep.mubr.f32.mxu0 0.0
        %591 = vmatmul.mubr.f32.gmra.mrb[0].mxu0 %v495
        %v592 = vpop.f32.mrb[0].mxu0
        %v593 = vadd.f32 0.0, %v592
        %v594 = vpop.f32.mrb[0].mxu0
        %595 = vmatprep.mubr.f32.mxu0 0.0
        %596 = vmatmul.mubr.f32.gmra.mrb[0].mxu0 %v498
        %v597 = vpop.f32.mrb[0].mxu0
        %v598 = vadd.f32 0.0, %v597
        %v599 = vpop.f32.mrb[0].mxu0
        %600 = vmatprep.mubr.f32.mxu0 0.0
        %601 = vmatmul.mubr.f32.gmra.mrb[0].mxu0 %v501
        %v602 = vpop.f32.mrb[0].mxu0
        %v603 = vadd.f32 0.0, %v602
        %v604 = vpop.f32.mrb[0].mxu0
        %605 = vmatprep.mubr.f32.mxu0 0.0
        %606 = vmatmul.mubr.f32.gmra.mrb[0].mxu0 %v504
        %v607 = vpop.f32.mrb[0].mxu0
        %v608 = vadd.f32 0.0, %v607
        %v609 = vpop.f32.mrb[0].mxu0
        %610 = vdwg.mxu0
        %611 = vst [vmem:[#allocation8] sm:$0xff] %v573
        %612 = vst [vmem:[#allocation8 + $0x8] sm:$0xff] %v578
        %613 = vst [vmem:[#allocation8 + $0x10] sm:$0xff] %v583
        %614 = vst [vmem:[#allocation8 + $0x18] sm:$0xff] %v588
        %615 = vst [vmem:[#allocation8 + $0x20] sm:$0xff] %v593
        %616 = vst [vmem:[#allocation8 + $0x28] sm:$0xff] %v598
        %617 = vst [vmem:[#allocation8 + $0x30] sm:$0xff] %v603
        %618 = vst [vmem:[#allocation8 + $0x38] sm:$0xff] %v608
        %v619 = vld [vmem:[#allocation2] sm:$0xff]
        %v620 = vld [vmem:[#allocation3] sm:$0xff]
        %v621 = vld [vmem:[#allocation3 + $0x8] sm:$0xff]
        %v622 = vld [vmem:[#allocation4] sm:$0xff]
        %v623 = vld [vmem:[#allocation4 + $0x8] sm:$0xff]
        %v624 = vld [vmem:[#allocation5] sm:$0xff]
        %v625 = vld [vmem:[#allocation5 + $0x8] sm:$0xff]
        %v626 = vld [vmem:[#allocation8] sm:$0xff]
        %v627 = vld [vmem:[#allocation8 + $0x8] sm:$0xff]
        %v644 = vunpack.c.l.b16 %v453
        %v645 = vunpack.c.l.b16 %v454
        %v646 = vunpack.c.l.b16 %v455
        %v647 = vunpack.c.l.b16 %v456
        %v648 = vunpack.c.l.b16 %v457
        %v649 = vunpack.c.l.b16 %v458
        %v650 = vunpack.c.l.b16 %v459
        %v651 = vunpack.c.l.b16 %v460
        %v652 = vunpack.c.l.b16 %v461
        %v653 = vunpack.c.l.b16 %v462
        %v654 = vunpack.c.l.b16 %v463
        %v655 = vunpack.c.l.b16 %v464
        %v656 = vunpack.c.l.b16 %v465
        %v657 = vunpack.c.l.b16 %v466
        %v658 = vunpack.c.l.b16 %v467
        %v659 = vunpack.c.l.b16 %v468
        %v660 = vpack.c.b16 %v645, %v644
        %v661 = vpack.c.b16 %v647, %v646
        %v662 = vpack.c.b16 %v649, %v648
        %v663 = vpack.c.b16 %v651, %v650
        %v664 = vpack.c.b16 %v653, %v652
        %v665 = vpack.c.b16 %v655, %v654
        %v666 = vpack.c.b16 %v657, %v656
        %v667 = vpack.c.b16 %v659, %v658
        %676 = vmatprep.subr.bf16.mxu0 0
        %677 = vmatpush1.bf16.msra.mxu0 %v660
        %678 = vmatprep.subr.bf16.mxu0 0
        %679 = vmatpush1.bf16.msra.mxu0 %v661
        %680 = vmatprep.subr.bf16.mxu0 0
        %681 = vmatpush1.bf16.msra.mxu0 %v662
        %682 = vmatprep.subr.bf16.mxu0 0
        %683 = vmatpush1.bf16.msra.mxu0 %v663
        %684 = vmatprep.subr.bf16.mxu0 0
        %685 = vmatpush1.bf16.msra.mxu0 %v664
        %686 = vmatprep.subr.bf16.mxu0 0
        %687 = vmatpush1.bf16.msra.mxu0 %v665
        %688 = vmatprep.subr.bf16.mxu0 0
        %689 = vmatpush1.bf16.msra.mxu0 %v666
        %690 = vmatprep.subr.bf16.mxu0 0
        %691 = vmatpush1.bf16.msra.mxu0 %v667
        %692 = vmatprep.subr.bf16.mxu0 0
        %693 = vmatpush1.bf16.msra.mxu0 0
        %694 = vmatprep.subr.bf16.mxu0 0
        %695 = vmatpush1.bf16.msra.mxu0 0
        %696 = vmatprep.subr.bf16.mxu0 0
        %697 = vmatpush1.bf16.msra.mxu0 0
        %698 = vmatprep.subr.bf16.mxu0 0
        %699 = vmatpush1.bf16.msra.mxu0 0
        %700 = vmatprep.subr.bf16.mxu0 0
        %701 = vmatpush1.bf16.msra.mxu0 0
        %702 = vmatprep.subr.bf16.mxu0 0
        %703 = vmatpush1.bf16.msra.mxu0 0
        %704 = vmatprep.subr.bf16.mxu0 0
        %705 = vmatpush1.bf16.msra.mxu0 0
        %706 = vmatprep.subr.bf16.mxu0 0
        %707 = vmatpush1.bf16.msra.mxu0 0
        %708 = vmatprep.mubr.bf16.mxu0 0
        %709 = vmatmul.mubr.bf16.gmra.mrb[0].mxu0 %v619
        %v710 = vpop.f32.mrb[0].mxu0
        %v711 = vadd.f32 0.0, %v710
        %v712 = vpop.f32.mrb[0].mxu0
        %v713 = vpop.f32.mrb[0].mxu0
        %v714 = vadd.f32 0.0, %v713
        %v715 = vpop.f32.mrb[0].mxu0
        %716 = vdwg.mxu0
        %v717 = vadd.f32 %v626, %v711
        %v718 = vadd.f32 %v627, %v714
        %v720 = vlaneseq
        %v721 = vshrl.u32 %v720, 7
        %v722 = vsub.s32 0, %v721
        %v723 = vrot.slane %v452, %v722
        %v725 = vsub.f32 %v723, %v624
        %v726 = vsub.f32 %v723, %v625
        %v727 = vmul.f32 %v725, %v620
        %v728 = vmul.f32 %v726, %v621
        %v730 = vlaneseq
        %v731 = vshrl.u32 %v730, 7
        %v732 = vsub.s32 0, %v731
        %v733 = vrot.slane %v451, %v732
        %v735 = vmul.f32 %v733, %v622
        %v736 = vmul.f32 %v733, %v623
        %v737 = vsub.f32 %v727, %v735
        %v738 = vsub.f32 %v728, %v736
        %v739 = vadd.f32 %v737, %v717
        %v740 = vadd.f32 %v738, %v718
        %v741 = vmul.f32 %v739, 0.01
        %v742 = vmul.f32 %v740, 0.01
        %v743 = vadd.f32 %v620, %v741
        %v744 = vadd.f32 %v621, %v742
        %v745 = vmul.f32 %v733, %v620
        %v746 = vmul.f32 %v733, %v621
        %v747 = vmul.f32 %v725, %v622
        %v748 = vmul.f32 %v726, %v623
        %v749 = vadd.f32 %v745, %v747
        %v750 = vadd.f32 %v746, %v748
        %v751 = vmul.f32 %v749, 0.01
        %v752 = vmul.f32 %v750, 0.01
        %v753 = vadd.f32 %v622, %v751
        %v754 = vadd.f32 %v623, %v752
        %v755 = vadd.f32 %v624, 1.0
        %v756 = vadd.f32 %v625, 1.0
        %v757 = vsub.f32 %v743, %v755
        %v758 = vsub.f32 %v744, %v756
        %vm759 = vcmp.gt.f32.partialorder %v757, 0.0
        %vm760 = vcmp.gt.f32.partialorder %v758, 0.0
        %v761 = vsel %vm759, 1, 0
        %v762 = vsel %vm760, 1, 0
        %v763 = vcvt.s32.f32 %v761
        %v764 = vcvt.s32.f32 %v762
        %v765 = vmul.f32 %v624, 0.9
        %v766 = vmul.f32 %v625, 0.9
        %v767 = vadd.f32 %v765, %v763
        %v768 = vadd.f32 %v766, %v764
        %v769 = vpack.c.bf16 %v764, %v763
        %770 = vst [vmem:[#allocation9] sm:$0xff] %v769
        %s771 = scalar_lea.vmem [#allocation8], 16
        %v772 = vld [vmem:[%s771] sm:$0xff]
        %v773 = vld [vmem:[%s771 + $0x8] sm:$0xff]
        %774 = vmatprep.subr.bf16.mxu0 0
        %775 = vmatpush1.bf16.msra.mxu0 %v660
        %776 = vmatprep.subr.bf16.mxu0 0
        %777 = vmatpush1.bf16.msra.mxu0 %v661
        %778 = vmatprep.subr.bf16.mxu0 0
        %779 = vmatpush1.bf16.msra.mxu0 %v662
        %780 = vmatprep.subr.bf16.mxu0 0
        %781 = vmatpush1.bf16.msra.mxu0 %v663
        %782 = vmatprep.subr.bf16.mxu0 0
        %783 = vmatpush1.bf16.msra.mxu0 %v664
        %784 = vmatprep.subr.bf16.mxu0 0
        %785 = vmatpush1.bf16.msra.mxu0 %v665
        %786 = vmatprep.subr.bf16.mxu0 0
        %787 = vmatpush1.bf16.msra.mxu0 %v666
        %788 = vmatprep.subr.bf16.mxu0 0
        %789 = vmatpush1.bf16.msra.mxu0 %v667
        %790 = vmatprep.subr.bf16.mxu0 0
        %791 = vmatpush1.bf16.msra.mxu0 0
        %792 = vmatprep.subr.bf16.mxu0 0
        %793 = vmatpush1.bf16.msra.mxu0 0
        %794 = vmatprep.subr.bf16.mxu0 0
        %795 = vmatpush1.bf16.msra.mxu0 0
        %796 = vmatprep.subr.bf16.mxu0 0
        %797 = vmatpush1.bf16.msra.mxu0 0
        %798 = vmatprep.subr.bf16.mxu0 0
        %799 = vmatpush1.bf16.msra.mxu0 0
        %800 = vmatprep.subr.bf16.mxu0 0
        %801 = vmatpush1.bf16.msra.mxu0 0
        %802 = vmatprep.subr.bf16.mxu0 0
        %803 = vmatpush1.bf16.msra.mxu0 0
        %804 = vmatprep.subr.bf16.mxu0 0
        %805 = vmatpush1.bf16.msra.mxu0 0
        %806 = vmatprep.mubr.bf16.mxu0 0
        %807 = vmatmul.mubr.bf16.gmra.mrb[0].mxu0 %v769
        %v808 = vpop.f32.mrb[0].mxu0
        %v809 = vadd.f32 0.0, %v808
        %v810 = vpop.f32.mrb[0].mxu0
        %v811 = vpop.f32.mrb[0].mxu0
        %v812 = vadd.f32 0.0, %v811
        %v813 = vpop.f32.mrb[0].mxu0
        %814 = vdwg.mxu0
        %v815 = vadd.f32 %v772, %v809
        %v816 = vadd.f32 %v773, %v812
        %v817 = vsub.f32 %v723, %v767
        %v818 = vsub.f32 %v723, %v768
        %v819 = vmul.f32 %v817, %v743
        %v820 = vmul.f32 %v818, %v744
        %v821 = vmul.f32 %v733, %v753
        %v822 = vmul.f32 %v733, %v754
        %v823 = vsub.f32 %v819, %v821
        %v824 = vsub.f32 %v820, %v822
        %v825 = vadd.f32 %v823, %v815
        %v826 = vadd.f32 %v824, %v816
        %v827 = vmul.f32 %v825, 0.01
        %v828 = vmul.f32 %v826, 0.01
        %v829 = vadd.f32 %v743, %v827
        %v830 = vadd.f32 %v744, %v828
        %v831 = vmul.f32 %v733, %v743
        %v832 = vmul.f32 %v733, %v744
        %v833 = vmul.f32 %v817, %v753
        %v834 = vmul.f32 %v818, %v754
        %v835 = vadd.f32 %v831, %v833
        %v836 = vadd.f32 %v832, %v834
        %v837 = vmul.f32 %v835, 0.01
        %v838 = vmul.f32 %v836, 0.01
        %v839 = vadd.f32 %v753, %v837
        %v840 = vadd.f32 %v754, %v838
        %v841 = vadd.f32 %v767, 1.0
        %v842 = vadd.f32 %v768, 1.0
        %v843 = vsub.f32 %v829, %v841
        %v844 = vsub.f32 %v830, %v842
        %vm845 = vcmp.gt.f32.partialorder %v843, 0.0
        %vm846 = vcmp.gt.f32.partialorder %v844, 0.0
        %v847 = vsel %vm845, 1, 0
        %v848 = vsel %vm846, 1, 0
        %v849 = vcvt.s32.f32 %v847
        %v850 = vcvt.s32.f32 %v848
        %v851 = vmul.f32 %v767, 0.9
        %v852 = vmul.f32 %v768, 0.9
        %v853 = vadd.f32 %v851, %v849
        %v854 = vadd.f32 %v852, %v850
        %v855 = vpack.c.bf16 %v850, %v849
        %s856 = scalar_lea.vmem [#allocation9], 8
        %857 = vst [vmem:[%s856] sm:$0xff] %v855
        %s858 = scalar_lea.vmem [#allocation8], 32
        %v859 = vld [vmem:[%s858] sm:$0xff]
        %v860 = vld [vmem:[%s858 + $0x8] sm:$0xff]
        %861 = vmatprep.subr.bf16.mxu0 0
        %862 = vmatpush1.bf16.msra.mxu0 %v660
        %863 = vmatprep.subr.bf16.mxu0 0
        %864 = vmatpush1.bf16.msra.mxu0 %v661
        %865 = vmatprep.subr.bf16.mxu0 0
        %866 = vmatpush1.bf16.msra.mxu0 %v662
        %867 = vmatprep.subr.bf16.mxu0 0
        %868 = vmatpush1.bf16.msra.mxu0 %v663
        %869 = vmatprep.subr.bf16.mxu0 0
        %870 = vmatpush1.bf16.msra.mxu0 %v664
        %871 = vmatprep.subr.bf16.mxu0 0
        %872 = vmatpush1.bf16.msra.mxu0 %v665
        %873 = vmatprep.subr.bf16.mxu0 0
        %874 = vmatpush1.bf16.msra.mxu0 %v666
        %875 = vmatprep.subr.bf16.mxu0 0
        %876 = vmatpush1.bf16.msra.mxu0 %v667
        %877 = vmatprep.subr.bf16.mxu0 0
        %878 = vmatpush1.bf16.msra.mxu0 0
        %879 = vmatprep.subr.bf16.mxu0 0
        %880 = vmatpush1.bf16.msra.mxu0 0
        %881 = vmatprep.subr.bf16.mxu0 0
        %882 = vmatpush1.bf16.msra.mxu0 0
        %883 = vmatprep.subr.bf16.mxu0 0
        %884 = vmatpush1.bf16.msra.mxu0 0
        %885 = vmatprep.subr.bf16.mxu0 0
        %886 = vmatpush1.bf16.msra.mxu0 0
        %887 = vmatprep.subr.bf16.mxu0 0
        %888 = vmatpush1.bf16.msra.mxu0 0
        %889 = vmatprep.subr.bf16.mxu0 0
        %890 = vmatpush1.bf16.msra.mxu0 0
        %891 = vmatprep.subr.bf16.mxu0 0
        %892 = vmatpush1.bf16.msra.mxu0 0
        %893 = vmatprep.mubr.bf16.mxu0 0
        %894 = vmatmul.mubr.bf16.gmra.mrb[0].mxu0 %v855
        %v895 = vpop.f32.mrb[0].mxu0
        %v896 = vadd.f32 0.0, %v895
        %v897 = vpop.f32.mrb[0].mxu0
        %v898 = vpop.f32.mrb[0].mxu0
        %v899 = vadd.f32 0.0, %v898
        %v900 = vpop.f32.mrb[0].mxu0
        %901 = vdwg.mxu0
        %v902 = vadd.f32 %v859, %v896
        %v903 = vadd.f32 %v860, %v899
        %v904 = vsub.f32 %v723, %v853
        %v905 = vsub.f32 %v723, %v854
        %v906 = vmul.f32 %v904, %v829
        %v907 = vmul.f32 %v905, %v830
        %v908 = vmul.f32 %v733, %v839
        %v909 = vmul.f32 %v733, %v840
        %v910 = vsub.f32 %v906, %v908
        %v911 = vsub.f32 %v907, %v909
        %v912 = vadd.f32 %v910, %v902
        %v913 = vadd.f32 %v911, %v903
        %v914 = vmul.f32 %v912, 0.01
        %v915 = vmul.f32 %v913, 0.01
        %v916 = vadd.f32 %v829, %v914
        %v917 = vadd.f32 %v830, %v915
        %v918 = vmul.f32 %v733, %v829
        %v919 = vmul.f32 %v733, %v830
        %v920 = vmul.f32 %v904, %v839
        %v921 = vmul.f32 %v905, %v840
        %v922 = vadd.f32 %v918, %v920
        %v923 = vadd.f32 %v919, %v921
        %v924 = vmul.f32 %v922, 0.01
        %v925 = vmul.f32 %v923, 0.01
        %v926 = vadd.f32 %v839, %v924
        %v927 = vadd.f32 %v840, %v925
        %v928 = vadd.f32 %v853, 1.0
        %v929 = vadd.f32 %v854, 1.0
        %v930 = vsub.f32 %v916, %v928
        %v931 = vsub.f32 %v917, %v929
        %vm932 = vcmp.gt.f32.partialorder %v930, 0.0
        %vm933 = vcmp.gt.f32.partialorder %v931, 0.0
        %v934 = vsel %vm932, 1, 0
        %v935 = vsel %vm933, 1, 0
        %v936 = vcvt.s32.f32 %v934
        %v937 = vcvt.s32.f32 %v935
        %v938 = vmul.f32 %v853, 0.9
        %v939 = vmul.f32 %v854, 0.9
        %v940 = vadd.f32 %v938, %v936
        %v941 = vadd.f32 %v939, %v937
        %v942 = vpack.c.bf16 %v937, %v936
        %s943 = scalar_lea.vmem [#allocation9], 16
        %944 = vst [vmem:[%s943] sm:$0xff] %v942
        %s945 = scalar_lea.vmem [#allocation8], 48
        %v946 = vld [vmem:[%s945] sm:$0xff]
        %v947 = vld [vmem:[%s945 + $0x8] sm:$0xff]
        %948 = vmatprep.subr.bf16.mxu0 0
        %949 = vmatpush1.bf16.msra.mxu0 %v660
        %950 = vmatprep.subr.bf16.mxu0 0
        %951 = vmatpush1.bf16.msra.mxu0 %v661
        %952 = vmatprep.subr.bf16.mxu0 0
        %953 = vmatpush1.bf16.msra.mxu0 %v662
        %954 = vmatprep.subr.bf16.mxu0 0
        %955 = vmatpush1.bf16.msra.mxu0 %v663
        %956 = vmatprep.subr.bf16.mxu0 0
        %957 = vmatpush1.bf16.msra.mxu0 %v664
        %958 = vmatprep.subr.bf16.mxu0 0
        %959 = vmatpush1.bf16.msra.mxu0 %v665
        %960 = vmatprep.subr.bf16.mxu0 0
        %961 = vmatpush1.bf16.msra.mxu0 %v666
        %962 = vmatprep.subr.bf16.mxu0 0
        %963 = vmatpush1.bf16.msra.mxu0 %v667
        %964 = vmatprep.subr.bf16.mxu0 0
        %965 = vmatpush1.bf16.msra.mxu0 0
        %966 = vmatprep.subr.bf16.mxu0 0
        %967 = vmatpush1.bf16.msra.mxu0 0
        %968 = vmatprep.subr.bf16.mxu0 0
        %969 = vmatpush1.bf16.msra.mxu0 0
        %970 = vmatprep.subr.bf16.mxu0 0
        %971 = vmatpush1.bf16.msra.mxu0 0
        %972 = vmatprep.subr.bf16.mxu0 0
        %973 = vmatpush1.bf16.msra.mxu0 0
        %974 = vmatprep.subr.bf16.mxu0 0
        %975 = vmatpush1.bf16.msra.mxu0 0
        %976 = vmatprep.subr.bf16.mxu0 0
        %977 = vmatpush1.bf16.msra.mxu0 0
        %978 = vmatprep.subr.bf16.mxu0 0
        %979 = vmatpush1.bf16.msra.mxu0 0
        %980 = vmatprep.mubr.bf16.mxu0 0
        %981 = vmatmul.mubr.bf16.gmra.mrb[0].mxu0 %v942
        %v982 = vpop.f32.mrb[0].mxu0
        %v983 = vadd.f32 0.0, %v982
        %v984 = vpop.f32.mrb[0].mxu0
        %v985 = vpop.f32.mrb[0].mxu0
        %v986 = vadd.f32 0.0, %v985
        %v987 = vpop.f32.mrb[0].mxu0
        %988 = vdwg.mxu0
        %v989 = vadd.f32 %v946, %v983
        %v990 = vadd.f32 %v947, %v986
        %v991 = vsub.f32 %v723, %v940
        %v992 = vsub.f32 %v723, %v941
        %v993 = vmul.f32 %v991, %v916
        %v994 = vmul.f32 %v992, %v917
        %v995 = vmul.f32 %v733, %v926
        %v996 = vmul.f32 %v733, %v927
        %v997 = vsub.f32 %v993, %v995
        %v998 = vsub.f32 %v994, %v996
        %v999 = vadd.f32 %v997, %v989
        %v1000 = vadd.f32 %v998, %v990
        %v1001 = vmul.f32 %v999, 0.01
        %v1002 = vmul.f32 %v1000, 0.01
        %v1003 = vadd.f32 %v916, %v1001
        %v1004 = vadd.f32 %v917, %v1002
        %v1005 = vmul.f32 %v733, %v916
        %v1006 = vmul.f32 %v733, %v917
        %v1007 = vmul.f32 %v991, %v926
        %v1008 = vmul.f32 %v992, %v927
        %v1009 = vadd.f32 %v1005, %v1007
        %v1010 = vadd.f32 %v1006, %v1008
        %v1011 = vmul.f32 %v1009, 0.01
        %v1012 = vmul.f32 %v1010, 0.01
        %v1013 = vadd.f32 %v926, %v1011
        %v1014 = vadd.f32 %v927, %v1012
        %v1015 = vadd.f32 %v940, 1.0
        %v1016 = vadd.f32 %v941, 1.0
        %v1017 = vsub.f32 %v1003, %v1015
        %v1018 = vsub.f32 %v1004, %v1016
        %vm1019 = vcmp.gt.f32.partialorder %v1017, 0.0
        %vm1020 = vcmp.gt.f32.partialorder %v1018, 0.0
        %v1021 = vsel %vm1019, 1, 0
        %v1022 = vsel %vm1020, 1, 0
        %v1023 = vcvt.s32.f32 %v1021
        %v1024 = vcvt.s32.f32 %v1022
        %v1025 = vmul.f32 %v940, 0.9
        %v1026 = vmul.f32 %v941, 0.9
        %v1027 = vadd.f32 %v1025, %v1023
        %v1028 = vadd.f32 %v1026, %v1024
        %v1029 = vpack.c.bf16 %v1024, %v1023
        %s1030 = scalar_lea.vmem [#allocation9], 24
        %1031 = vst [vmem:[%s1030] sm:$0xff] %v1029
        %1032 = vst [vmem:[#allocation2] sm:$0xff] %v1029
        %1033 = vst [vmem:[#allocation3] sm:$0xff] %v1003
        %1034 = vst [vmem:[#allocation3 + $0x8] sm:$0xff] %v1004
        %1035 = vst [vmem:[#allocation4] sm:$0xff] %v1013
        %1036 = vst [vmem:[#allocation4 + $0x8] sm:$0xff] %v1014
        %1037 = vst [vmem:[#allocation5] sm:$0xff] %v1027
        %1038 = vst [vmem:[#allocation5 + $0x8] sm:$0xff] %v1028
        %v1039 = vld [vmem:[#allocation9] sm:$0xff]
        %v1040 = vld [vmem:[#allocation9 + $0x8] sm:$0xff]
        %v1041 = vld [vmem:[#allocation9 + $0x10] sm:$0xff]
        %v1042 = vld [vmem:[#allocation9 + $0x18] sm:$0xff]
        %v1043 = vld [vmem:[%s3] sm:$0xf]
        %v1044 = vld [vmem:[%s3 + $0x4] sm:$0xf]
        %v1045 = vld [vmem:[%s3 + $0x8] sm:$0xf]
        %v1046 = vld [vmem:[%s3 + $0xc] sm:$0xf]
        %v1047 = vld [vmem:[%s3 + $0x10] sm:$0xf]
        %v1048 = vld [vmem:[%s3 + $0x14] sm:$0xf]
        %v1049 = vld [vmem:[%s3 + $0x18] sm:$0xf]
        %v1050 = vld [vmem:[%s3 + $0x1c] sm:$0xf]
        %v1051 = vld [vmem:[%s3 + $0x20] sm:$0xf]
        %v1052 = vld [vmem:[%s3 + $0x24] sm:$0xf]
        %v1053 = vld [vmem:[%s3 + $0x28] sm:$0xf]
        %v1054 = vld [vmem:[%s3 + $0x2c] sm:$0xf]
        %v1055 = vld [vmem:[%s3 + $0x30] sm:$0xf]
        %v1056 = vld [vmem:[%s3 + $0x34] sm:$0xf]
        %v1057 = vld [vmem:[%s3 + $0x38] sm:$0xf]
        %v1058 = vld [vmem:[%s3 + $0x3c] sm:$0xf]
        %v1075 = vunpack.c.l.b16 %v1043
        %v1076 = vunpack.c.l.b16 %v1044
        %v1077 = vunpack.c.l.b16 %v1045
        %v1078 = vunpack.c.l.b16 %v1046
        %v1079 = vunpack.c.l.b16 %v1047
        %v1080 = vunpack.c.l.b16 %v1048
        %v1081 = vunpack.c.l.b16 %v1049
        %v1082 = vunpack.c.l.b16 %v1050
        %v1083 = vunpack.c.l.b16 %v1051
        %v1084 = vunpack.c.l.b16 %v1052
        %v1085 = vunpack.c.l.b16 %v1053
        %v1086 = vunpack.c.l.b16 %v1054
        %v1087 = vunpack.c.l.b16 %v1055
        %v1088 = vunpack.c.l.b16 %v1056
        %v1089 = vunpack.c.l.b16 %v1057
        %v1090 = vunpack.c.l.b16 %v1058
        %v1091 = vpack.c.b16 %v1076, %v1075
        %v1092 = vpack.c.b16 %v1078, %v1077
        %v1093 = vpack.c.b16 %v1080, %v1079
        %v1094 = vpack.c.b16 %v1082, %v1081
        %v1095 = vpack.c.b16 %v1084, %v1083
        %v1096 = vpack.c.b16 %v1086, %v1085
        %v1097 = vpack.c.b16 %v1088, %v1087
        %v1098 = vpack.c.b16 %v1090, %v1089
        %1107 = vmatprep.subr.bf16.mxu0 0
        %1108 = vmatpush1.bf16.msra.mxu0 %v1091
        %1109 = vmatprep.subr.bf16.mxu0 0
        %1110 = vmatpush1.bf16.msra.mxu0 %v1092
        %1111 = vmatprep.subr.bf16.mxu0 0
        %1112 = vmatpush1.bf16.msra.mxu0 %v1093
        %1113 = vmatprep.subr.bf16.mxu0 0
        %1114 = vmatpush1.bf16.msra.mxu0 %v1094
        %1115 = vmatprep.subr.bf16.mxu0 0
        %1116 = vmatpush1.bf16.msra.mxu0 %v1095
        %1117 = vmatprep.subr.bf16.mxu0 0
        %1118 = vmatpush1.bf16.msra.mxu0 %v1096
        %1119 = vmatprep.subr.bf16.mxu0 0
        %1120 = vmatpush1.bf16.msra.mxu0 %v1097
        %1121 = vmatprep.subr.bf16.mxu0 0
        %1122 = vmatpush1.bf16.msra.mxu0 %v1098
        %1123 = vmatprep.subr.bf16.mxu0 0
        %1124 = vmatpush1.bf16.msra.mxu0 0
        %1125 = vmatprep.subr.bf16.mxu0 0
        %1126 = vmatpush1.bf16.msra.mxu0 0
        %1127 = vmatprep.subr.bf16.mxu0 0
        %1128 = vmatpush1.bf16.msra.mxu0 0
        %1129 = vmatprep.subr.bf16.mxu0 0
        %1130 = vmatpush1.bf16.msra.mxu0 0
        %1131 = vmatprep.subr.bf16.mxu0 0
        %1132 = vmatpush1.bf16.msra.mxu0 0
        %1133 = vmatprep.subr.bf16.mxu0 0
        %1134 = vmatpush1.bf16.msra.mxu0 0
        %1135 = vmatprep.subr.bf16.mxu0 0
        %1136 = vmatpush1.bf16.msra.mxu0 0
        %1137 = vmatprep.subr.bf16.mxu0 0
        %1138 = vmatpush1.bf16.msra.mxu0 0
        %1139 = vmatprep.mubr.bf16.mxu0 0
        %1140 = vmatmul.mubr.bf16.gmra.mrb[0].mxu0 %v1039
        %v1141 = vpop.f32.mrb[0].mxu0
        %v1142 = vadd.f32 0.0, %v1141
        %v1143 = vpop.f32.mrb[0].mxu0
        %v1144 = vpop.f32.mrb[0].mxu0
        %v1145 = vadd.f32 0.0, %v1144
        %v1146 = vpop.f32.mrb[0].mxu0
        %1147 = vmatprep.mubr.bf16.mxu0 0
        %1148 = vmatmul.mubr.bf16.gmra.mrb[0].mxu0 %v1040
        %v1149 = vpop.f32.mrb[0].mxu0
        %v1150 = vadd.f32 0.0, %v1149
        %v1151 = vpop.f32.mrb[0].mxu0
        %v1152 = vpop.f32.mrb[0].mxu0
        %v1153 = vadd.f32 0.0, %v1152
        %v1154 = vpop.f32.mrb[0].mxu0
        %1155 = vmatprep.mubr.bf16.mxu0 0
        %1156 = vmatmul.mubr.bf16.gmra.mrb[0].mxu0 %v1041
        %v1157 = vpop.f32.mrb[0].mxu0
        %v1158 = vadd.f32 0.0, %v1157
        %v1159 = vpop.f32.mrb[0].mxu0
        %v1160 = vpop.f32.mrb[0].mxu0
        %v1161 = vadd.f32 0.0, %v1160
        %v1162 = vpop.f32.mrb[0].mxu0
        %1163 = vmatprep.mubr.bf16.mxu0 0
        %1164 = vmatmul.mubr.bf16.gmra.mrb[0].mxu0 %v1042
        %v1165 = vpop.f32.mrb[0].mxu0
        %v1166 = vadd.f32 0.0, %v1165
        %v1167 = vpop.f32.mrb[0].mxu0
        %v1168 = vpop.f32.mrb[0].mxu0
        %v1169 = vadd.f32 0.0, %v1168
        %v1170 = vpop.f32.mrb[0].mxu0
        %1171 = vdwg.mxu0
        %1172 = vst [vmem:[%s409] sm:$0xff] %v1142
        %1173 = vst [vmem:[%s409 + $0x8] sm:$0xff] %v1145
        %1174 = vst [vmem:[%s409 + $0x10] sm:$0xff] %v1150
        %1175 = vst [vmem:[%s409 + $0x18] sm:$0xff] %v1153
        %1176 = vst [vmem:[%s409 + $0x20] sm:$0xff] %v1158
        %1177 = vst [vmem:[%s409 + $0x28] sm:$0xff] %v1161
        %1178 = vst [vmem:[%s409 + $0x30] sm:$0xff] %v1166
        %1179 = vst [vmem:[%s409 + $0x38] sm:$0xff] %v1169
        %v1180 = vld [vmem:[#allocation6] sm:$0xff]
        %v1181 = vld [vmem:[#allocation6 + $0x8] sm:$0xff]
        %v1182 = vld [vmem:[#allocation7] sm:$0xff]
        %v1183 = vld [vmem:[#allocation7 + $0x8] sm:$0xff]
        %v1185 = vlaneseq
        %v1186 = vshrl.u32 %v1185, 7
        %v1187 = vsub.s32 0, %v1186
        %v1188 = vrot.slane %v469, %v1187
        %v1190 = vmul.f32 %v1188, %v1180
        %v1191 = vmul.f32 %v1188, %v1181
        %v1192 = vld [vmem:[%s409] sm:$0xff]
        %v1193 = vld [vmem:[%s409 + $0x8] sm:$0xff]
        %v1195 = vlaneseq
        %v1196 = vshrl.u32 %v1195, 7
        %v1197 = vsub.s32 0, %v1196
        %v1198 = vrot.slane %v470, %v1197
        %v1200 = vmul.f32 %v1198, %v1192
        %v1201 = vmul.f32 %v1198, %v1193
        %v1202 = vadd.f32 %v1190, %v1200
        %v1203 = vadd.f32 %v1191, %v1201
        %1204 = vst [vmem:[%s409] sm:$0xff] %v1202
        %1205 = vst [vmem:[%s409 + $0x8] sm:$0xff] %v1203
        %v1206 = vld [vmem:[#allocation9] sm:$0xff]
        %v1207 = vunpack.c.l.bf16 %v1206
        %v1208 = vunpack.c.h.bf16 %v1206
        %v1209 = vadd.f32 %v1182, %v1207
        %v1210 = vadd.f32 %v1183, %v1208
        %v1211 = vmul.f32 %v1188, %v1202
        %v1212 = vmul.f32 %v1188, %v1203
        %s1213 = scalar_lea.vmem %s409, 16 [#allocation10]
        %v1214 = vld [vmem:[%s1213] sm:$0xff]
        %v1215 = vld [vmem:[%s1213 + $0x8] sm:$0xff]
        %v1216 = vmul.f32 %v1198, %v1214
        %v1217 = vmul.f32 %v1198, %v1215
        %v1218 = vadd.f32 %v1211, %v1216
        %v1219 = vadd.f32 %v1212, %v1217
        %1220 = vst [vmem:[%s1213] sm:$0xff] %v1218
        %1221 = vst [vmem:[%s1213 + $0x8] sm:$0xff] %v1219
        %v1222 = vld [vmem:[%s856] sm:$0xff]
        %v1223 = vunpack.c.l.bf16 %v1222
        %v1224 = vunpack.c.h.bf16 %v1222
        %v1225 = vadd.f32 %v1209, %v1223
        %v1226 = vadd.f32 %v1210, %v1224
        %v1227 = vmul.f32 %v1188, %v1218
        %v1228 = vmul.f32 %v1188, %v1219
        %s1229 = scalar_lea.vmem %s409, 32 [#allocation10]
        %v1230 = vld [vmem:[%s1229] sm:$0xff]
        %v1231 = vld [vmem:[%s1229 + $0x8] sm:$0xff]
        %v1232 = vmul.f32 %v1198, %v1230
        %v1233 = vmul.f32 %v1198, %v1231
        %v1234 = vadd.f32 %v1227, %v1232
        %v1235 = vadd.f32 %v1228, %v1233
        %1236 = vst [vmem:[%s1229] sm:$0xff] %v1234
        %1237 = vst [vmem:[%s1229 + $0x8] sm:$0xff] %v1235
        %v1238 = vld [vmem:[%s943] sm:$0xff]
        %v1239 = vunpack.c.l.bf16 %v1238
        %v1240 = vunpack.c.h.bf16 %v1238
        %v1241 = vadd.f32 %v1225, %v1239
        %v1242 = vadd.f32 %v1226, %v1240
        %v1243 = vmul.f32 %v1188, %v1234
        %v1244 = vmul.f32 %v1188, %v1235
        %s1245 = scalar_lea.vmem %s409, 48 [#allocation10]
        %v1246 = vld [vmem:[%s1245] sm:$0xff]
        %v1247 = vld [vmem:[%s1245 + $0x8] sm:$0xff]
        %v1248 = vmul.f32 %v1198, %v1246
        %v1249 = vmul.f32 %v1198, %v1247
        %v1250 = vadd.f32 %v1243, %v1248
        %v1251 = vadd.f32 %v1244, %v1249
        %1252 = vst [vmem:[%s1245] sm:$0xff] %v1250
        %1253 = vst [vmem:[%s1245 + $0x8] sm:$0xff] %v1251
        %v1254 = vld [vmem:[%s1030] sm:$0xff]
        %v1255 = vunpack.c.l.bf16 %v1254
        %v1256 = vunpack.c.h.bf16 %v1254
        %v1257 = vadd.f32 %v1241, %v1255
        %v1258 = vadd.f32 %v1242, %v1256
        %1259 = vst [vmem:[#allocation6] sm:$0xff] %v1250
        %1260 = vst [vmem:[#allocation6 + $0x8] sm:$0xff] %v1251
        %1261 = vst [vmem:[#allocation7] sm:$0xff] %v1257
        %1262 = vst [vmem:[#allocation7 + $0x8] sm:$0xff] %v1258
        %p1263 = scmp.eq.s32.totalorder %s33, 1
        // Predicated region
        $region53: #{tpu_custom_call.1} parent=47 // pred_check
          %p1264 = pneg %p1263
        $region54: #{tpu_custom_call.1} parent=47 // pred_check_branch
          %1266 = sbr.rel (%p1264) target = $region56
        $region55: #{tpu_custom_call.1} parent=47 // pred_region
          %v1267 = vld [vmem:[#allocation2] sm:$0xff]
          %v1268 = vunpack.c.l.bf16 %v1267
          %v1269 = vunpack.c.h.bf16 %v1267
          %1270 = vst [vmem:[#allocation12] sm:$0xff] %v1268
          %1271 = vst [vmem:[#allocation12 + $0x8] sm:$0xff] %v1269
          %v1272 = vld [vmem:[#allocation3] sm:$0xff]
          %v1273 = vld [vmem:[#allocation3 + $0x8] sm:$0xff]
          %1274 = vst [vmem:[#allocation14] sm:$0xff] %v1272
          %1275 = vst [vmem:[#allocation14 + $0x8] sm:$0xff] %v1273
          %v1276 = vld [vmem:[#allocation6] sm:$0xff]
          %v1277 = vld [vmem:[#allocation6 + $0x8] sm:$0xff]
          %1278 = vst [vmem:[#allocation15] sm:$0xff] %v1276
          %1279 = vst [vmem:[#allocation15 + $0x8] sm:$0xff] %v1277
          %v1280 = vld [vmem:[#allocation7] sm:$0xff]
          %v1281 = vld [vmem:[#allocation7 + $0x8] sm:$0xff]
          %1282 = vst [vmem:[#allocation17] sm:$0xff] %v1280
          %1283 = vst [vmem:[#allocation17 + $0x8] sm:$0xff] %v1281
        $region56: #{tpu_custom_call.1} parent=47 // pred_fallthru
          _
        %s1284 = sand.u32 %s208, 1
        %s1285 = scalar_lea.sflag [#allocation11], %s1284
        %s1286 = sand.u32 %s208, 1
        %s1287 = smul.addr %s1286, 64
        %s1288 = scalar_lea.vmem [#allocation10], %s1287
        // Predicated region
        $region57: #{tpu_custom_call.1} parent=47 // pred_check
          %p1289 = pneg %p218
        $region58: #{tpu_custom_call.1} parent=47 // pred_check_branch
          %1291 = sbr.rel (%p1289) target = $region60
        $region59: #{tpu_custom_call.1} parent=47 // pred_region
          %s1292 = smul.u32 %s32, 2
          %s1293 = sadd.s32 %s1292, %s33
          %s1294 = smul.u32 8, %s1293
          %s1296 = ssub.s32 1024, 1024
          %1297 = vsyncadd %s1285, %s1296
          %s1298 = smul.addr %s1294, 128
          %s1299 = scalar_lea.hbm %s7, %s1298
          %s1300 = sshll.u32 %s1288, 4
          %s1301 = int_to_ptr.vmem [resolvable:$true] %s1300
          %1306 = dma.vmem_to_hbm [thread:$0]  %s1301, 1024, %s1299, %s1285, 128, 128, 8
        $region60: #{tpu_custom_call.1} parent=47 // pred_fallthru
          _
        // Predicated region
        $region61: #{tpu_custom_call.1} parent=47 // pred_check
          %p1307 = pneg %p244
        $region62: #{tpu_custom_call.1} parent=47 // pred_check_branch
          %1309 = sbr.rel (%p1307) target = $region64
        $region63: #{tpu_custom_call.1} parent=47 // pred_region
          %s1310 = smul.u32 2, %s32
          %s1312 = ssub.s32 256, 256
          %1313 = vsyncadd [#allocation13], %s1312
          %s1314 = smul.addr %s1310, 128
          %s1315 = scalar_lea.hbm %s8, %s1314
          %s1316 = sshll.u32 [#allocation12], 4
          %s1317 = int_to_ptr.vmem [resolvable:$true] %s1316
          %1322 = dma.vmem_to_hbm [thread:$0]  %s1317, 256, %s1315, [#allocation13], 128, 128, 8
        $region64: #{tpu_custom_call.1} parent=47 // pred_fallthru
          _
        // Predicated region
        $region65: #{tpu_custom_call.1} parent=47 // pred_check
          %p1323 = pneg %p270
        $region66: #{tpu_custom_call.1} parent=47 // pred_check_branch
          %1325 = sbr.rel (%p1323) target = $region68
        $region67: #{tpu_custom_call.1} parent=47 // pred_region
          %s1326 = smul.u32 2, %s32
          %s1328 = ssub.s32 256, 256
          %1329 = vsyncadd [#allocation13], %s1328
          %s1330 = smul.addr %s1326, 128
          %s1331 = scalar_lea.hbm %s9, %s1330
          %s1332 = sshll.u32 [#allocation14], 4
          %s1333 = int_to_ptr.vmem [resolvable:$true] %s1332
          %1338 = dma.vmem_to_hbm [thread:$0]  %s1333, 256, %s1331, [#allocation13], 128, 128, 8
        $region68: #{tpu_custom_call.1} parent=47 // pred_fallthru
          _
        // Predicated region
        $region69: #{tpu_custom_call.1} parent=47 // pred_check
          %p1339 = pneg %p296
        $region70: #{tpu_custom_call.1} parent=47 // pred_check_branch
          %1341 = sbr.rel (%p1339) target = $region72
        $region71: #{tpu_custom_call.1} parent=47 // pred_region
          %s1342 = smul.u32 2, %s32
          %s1344 = ssub.s32 256, 256
          %1345 = vsyncadd [#allocation16], %s1344
          %s1346 = smul.addr %s1342, 128
          %s1347 = scalar_lea.hbm %s10, %s1346
          %s1348 = sshll.u32 [#allocation15], 4
          %s1349 = int_to_ptr.vmem [resolvable:$true] %s1348
          %1354 = dma.vmem_to_hbm [thread:$0]  %s1349, 256, %s1347, [#allocation16], 128, 128, 8
        $region72: #{tpu_custom_call.1} parent=47 // pred_fallthru
          _
        // Predicated region
        $region73: #{tpu_custom_call.1} parent=47 // pred_check
          %p1355 = pneg %p322
        $region74: #{tpu_custom_call.1} parent=47 // pred_check_branch
          %1357 = sbr.rel (%p1355) target = $region76
        $region75: #{tpu_custom_call.1} parent=47 // pred_region
          %s1358 = smul.u32 2, %s32
          %s1360 = ssub.s32 256, 256
          %1361 = vsyncadd [#allocation16], %s1360
          %s1362 = smul.addr %s1358, 128
          %s1363 = scalar_lea.hbm %s11, %s1362
          %s1364 = sshll.u32 [#allocation17], 4
          %s1365 = int_to_ptr.vmem [resolvable:$true] %s1364
          %1370 = dma.vmem_to_hbm [thread:$0]  %s1365, 256, %s1363, [#allocation16], 128, 128, 8
        $region76: #{tpu_custom_call.1} parent=47 // pred_fallthru
          _
        // Predicated region
        $region77: #{tpu_custom_call.1} parent=47 // pred_check
          %p1371 = pneg %p244
        $region78: #{tpu_custom_call.1} parent=47 // pred_check_branch
          %1373 = sbr.rel (%p1371) target = $region80
        $region79: #{tpu_custom_call.1} parent=47 // pred_region
          %1374 = dma.done [#allocation13], 256
        $region80: #{tpu_custom_call.1} parent=47 // pred_fallthru
          _
        // Predicated region
        $region81: #{tpu_custom_call.1} parent=47 // pred_check
          %p1375 = pneg %p270
        $region82: #{tpu_custom_call.1} parent=47 // pred_check_branch
          %1377 = sbr.rel (%p1375) target = $region84
        $region83: #{tpu_custom_call.1} parent=47 // pred_region
          %1378 = dma.done [#allocation13], 256
        $region84: #{tpu_custom_call.1} parent=47 // pred_fallthru
          _
        // Predicated region
        $region85: #{tpu_custom_call.1} parent=47 // pred_check
          %p1379 = pneg %p296
        $region86: #{tpu_custom_call.1} parent=47 // pred_check_branch
          %1381 = sbr.rel (%p1379) target = $region88
        $region87: #{tpu_custom_call.1} parent=47 // pred_region
          %1382 = dma.done [#allocation16], 256
        $region88: #{tpu_custom_call.1} parent=47 // pred_fallthru
          _
        // Predicated region
        $region89: #{tpu_custom_call.1} parent=47 // pred_check
          %p1383 = pneg %p322
        $region90: #{tpu_custom_call.1} parent=47 // pred_check_branch
          %1385 = sbr.rel (%p1383) target = $region92
        $region91: #{tpu_custom_call.1} parent=47 // pred_region
          %1386 = dma.done [#allocation16], 256
        $region92: #{tpu_custom_call.1} parent=47 // pred_fallthru
          _
      $region48: #{tpu_custom_call.1} parent=5 // pred_fallthru
        _
      %p1387 = scmp.le.s32.totalorder 2, %s23
      // Predicated region
      $region93: #{tpu_custom_call.1} parent=5 // pred_check
        %p1388 = pneg %p1387
      $region94: #{tpu_custom_call.1} parent=5 // pred_check_branch
        %1390 = sbr.rel (%p1388) target = $region96
      $region95: #{tpu_custom_call.1} parent=5 // pred_region
        %s1391 = ssub.s32 %s23, 2
        // Predicated region
        $region97: #{tpu_custom_call.1} parent=95 // pred_check
          %p1392 = pneg %p224
        $region98: #{tpu_custom_call.1} parent=95 // pred_check_branch
          %1394 = sbr.rel (%p1392) target = $region100
        $region99: #{tpu_custom_call.1} parent=95 // pred_region
          %s1395 = sand.u32 %s209, 1
          %s1396 = scalar_lea.sflag [#allocation11], %s1395
          %s1397 = sand.u32 %s209, 1
          %s1398 = smul.addr %s1397, 64
          %s1399 = scalar_lea.vmem [#allocation10], %s1398
          %1400 = dma.done %s1396, 1024
        $region100: #{tpu_custom_call.1} parent=95 // pred_fallthru
          _
      $region96: #{tpu_custom_call.1} parent=5 // pred_fallthru
        _
    $region6: #{tpu_custom_call.1} parent=1 // loop_footer
      %s27 = sadd.s32 1, %s23
    $region7: #{tpu_custom_call.1} parent=1 // loop_footer_branch
      %22 = sbr.rel target = $region3
    $region8: #{tpu_custom_call.1} parent=1 // loop_exit
      _
    %1401 = vsyncpa [#allocation11], 1
    %s1402 = scalar_lea.sflag [#allocation11], 1
    %1403 = vsyncpa %s1402, 1
    %1404 = vsyncpa [#allocation13], 1
    %1405 = vsyncpa [#allocation16], 1

// kernel: tpu_custom_call.1
$region0: #{tpu_custom_call.1}
  #allocation0 [shape = 'u32[]', space=smem, size = 0x4, offset = 0x4, fixed_abs, tag = 'smem constant byte address 0x4 - core index']
  #allocation1 [shape = 'u32[144,128]{1,0:T(1,128)}', space=vmem, size = 0x12000, scoped, tag = 'internal scratch']
  #allocation2 [shape = 'bf16[16,128]{1,0:T(16,128)(2,1)}', space=vmem, size = 0x1000, scoped, tag = 'scratch operand']
  #allocation3 [shape = 'f32[16,128]{1,0:T(8,128)}', space=vmem, size = 0x2000, scoped, tag = 'scratch operand']
  #allocation4 [shape = 'f32[16,128]{1,0:T(8,128)}', space=vmem, size = 0x2000, scoped, tag = 'scratch operand']
  #allocation5 [shape = 'f32[16,128]{1,0:T(8,128)}', space=vmem, size = 0x2000, scoped, tag = 'scratch operand']
  #allocation6 [shape = 'f32[16,128]{1,0:T(8,128)}', space=vmem, size = 0x2000, scoped, tag = 'scratch operand']
  #allocation7 [shape = 'f32[16,128]{1,0:T(8,128)}', space=vmem, size = 0x2000, scoped, tag = 'scratch operand']
  #allocation8 [shape = 'f32[64,128]{1,0:T(8,128)}', space=vmem, size = 0x8000, scoped, tag = 'scratch operand']
  #allocation9 [shape = 'bf16[64,128]{1,0:T(16,128)(2,1)}', space=vmem, size = 0x4000, scoped, tag = 'scratch operand']
  %s0 = inlined_call_operand.vmem [shape: f32[128,16], index: 0, kind: input, shape index: {}]
  %s1 = inlined_call_operand.vmem [shape: f32[16,128], index: 1, kind: input, shape index: {}]
  %s2 = inlined_call_operand.vmem [shape: bf16[128,128], index: 2, kind: input, shape index: {}]
  %s3 = inlined_call_operand.vmem [shape: bf16[128,128], index: 3, kind: input, shape index: {}]
  %s4 = inlined_call_operand.vmem [shape: f32[1,128], index: 4, kind: input, shape index: {}]
  %s5 = inlined_call_operand.vmem [shape: f32[1,128], index: 5, kind: input, shape index: {}]
  %s6 = inlined_call_operand.vmem [shape: f32[1,128], index: 6, kind: input, shape index: {}]
  %s7 = inlined_call_operand.hbm [shape: f32[128,128], index: 7, kind: output, shape index: {0}]
  %s8 = inlined_call_operand.hbm [shape: f32[16,128], index: 8, kind: output, shape index: {1}]
  %s9 = inlined_call_operand.hbm [shape: f32[16,128], index: 9, kind: output, shape index: {2}]
  %s10 = inlined_call_operand.hbm [shape: f32[16,128], index: 10, kind: output, shape index: {3}]
  %s11 = inlined_call_operand.hbm [shape: f32[16,128], index: 11, kind: output, shape index: {4}]
  %12 = xla_tuple %s7, %s8, %s9, %s10, %s11
  %s13 = sld [smem:[#allocation0]]
  $region101: #{tpu_custom_call.1} parent=0
    _
  %s15 = ssub.s32 1, %s13
  %s16 = scalar_select 0, %s15, %s13
  $region1: #{tpu_custom_call.1} parent=0
    #allocation10 [shape = 'u8[65536]{0}', space=vmem, size = 0x10000, scoped, tag = 'output window, operand 0']
    #allocation11 [shape = 's32[2]{0}', space=sflag, size = 0x8, scoped, tag = 'scoped memory for tpu_custom_call.1']
    #allocation12 [shape = 'u8[8192]{0}', space=vmem, size = 0x2000, scoped, tag = 'output window, operand 1, single buffered']
    #allocation13 [shape = 's32[1]{0}', space=sflag, size = 0x4, scoped, tag = 'scoped memory for tpu_custom_call.1']
    #allocation14 [shape = 'u8[8192]{0}', space=vmem, size = 0x2000, scoped, tag = 'output window, operand 2, single buffered']
    #allocation15 [shape = 'u8[8192]{0}', space=vmem, size = 0x2000, scoped, tag = 'output window, operand 3, single buffered']
    #allocation16 [shape = 's32[1]{0}', space=sflag, size = 0x4, scoped, tag = 'scoped memory for tpu_custom_call.1']
    #allocation17 [shape = 'u8[8192]{0}', space=vmem, size = 0x2000, scoped, tag = 'output window, operand 4, single buffered']
    %17 = vsyncpa [#allocation11], 0
    %s18 = scalar_lea.sflag [#allocation11], 1
    %19 = vsyncpa %s18, 0
    %20 = vsyncpa [#allocation13], 0
    %21 = vsyncpa [#allocation16], 0
    loop: start=0, step=1, limit=4
    $region2: #{tpu_custom_call.1} parent=1 // loop_pre_header
      _
    $region3: #{tpu_custom_call.1} parent=1 // loop_header
      %s23 = sphi 0, %s27
      %p24 = scmp.ge.s32.totalorder %s23, 4
      %s30 = sphi 0, %s42
      %s31 = sphi 0, %s38
      %s32 = sphi 0, %s30
      %s33 = sphi 0, %s31
      %s34 = sphi 0, %s32
      %s35 = sphi 0, %s33
      %s49 = sphi 0, %s51
      %s52 = sphi 0, %s49
      %s53 = sphi 0, %s52
      %s69 = sphi 0, %s53
      %s73 = sphi 0, %s73
      %s75 = sphi 0, %s73
      %s76 = sphi 0, %s75
      %s90 = sphi 0, %s76
      %s94 = sphi 0, %s94
      %s96 = sphi 0, %s94
      %s97 = sphi 0, %s96
      %s111 = sphi 0, %s97
      %s115 = sphi 0, %s115
      %s117 = sphi 0, %s115
      %s118 = sphi 0, %s117
      %s132 = sphi 0, %s118
      %s136 = sphi 0, %s136
      %s138 = sphi 0, %s136
      %s139 = sphi 0, %s138
      %s153 = sphi 0, %s139
      %s157 = sphi 0, %s157
      %s159 = sphi 0, %s157
      %s160 = sphi 0, %s159
      %s174 = sphi 0, %s160
      %s178 = sphi 0, %s178
      %s180 = sphi 0, %s178
      %s181 = sphi 0, %s180
      %s195 = sphi 0, %s181
      %s205 = sphi 0, %s207
      %s208 = sphi 0, %s205
      %s209 = sphi 0, %s208
      %s225 = sphi 0, %s209
      %s231 = sphi 0, %s233
      %s234 = sphi 0, %s231
      %s235 = sphi 0, %s234
      %s251 = sphi 0, %s235
      %s257 = sphi 0, %s259
      %s260 = sphi 0, %s257
      %s261 = sphi 0, %s260
      %s277 = sphi 0, %s261
      %s283 = sphi 0, %s285
      %s286 = sphi 0, %s283
      %s287 = sphi 0, %s286
      %s303 = sphi 0, %s287
      %s309 = sphi 0, %s311
      %s312 = sphi 0, %s309
      %s313 = sphi 0, %s312
      %s329 = sphi 0, %s313
    $region4: #{tpu_custom_call.1} parent=1 // loop_header_branch
      %26 = sbr.rel (%p24) target = $region8
    $region5: #{tpu_custom_call.1} parent=1 // loop_body
      %s28 = ssub.s32 %s23, 1
      %s29 = ssub.s32 %s23, 2
      %s36 = sadd.s32 1, %s31
      %p37 = scmp.ge.s32.totalorder %s36, 2
      %s38 = scalar_select %p37, 0, %s36
      %s39 = sadd.s32 1, %s30
      %s40 = scalar_select %p37, %s39, %s30
      %p41 = scmp.ge.s32.totalorder %s40, 1
      %s42 = scalar_select %p41, 0, %s40
      %s43 = smul.u32 %s30, 2
      %s44 = sadd.s32 %s43, %s31
      %s45 = smul.u32 %s42, 2
      %s46 = sadd.s32 %s45, %s38
      %s47 = ssub.s32 %s44, %s46
      %p48 = scmp.eq.s32.totalorder %s47, 0
      %s50 = sadd.s32 %s49, 1
      %s51 = scalar_select %p48, %s49, %s50
      %p54 = pneg %p48
      %p55 = scmp.eq.s32.totalorder %s23, 1
      %p56 = por %p54, %p55
      %p57 = scmp.ne.s32.totalorder %s49, %s52
      %p58 = scmp.eq.s32.totalorder %s23, 0
      %p59 = por %p57, %p58
      %p60 = scmp.ne.s32.totalorder %s49, %s52
      %p61 = scmp.eq.s32.totalorder %s28, 1
      %p62 = por %p60, %p61
      %p63 = scmp.ne.s32.totalorder %s52, %s53
      %p64 = scmp.eq.s32.totalorder %s28, 0
      %p65 = por %p63, %p64
      %p66 = scmp.ne.s32.totalorder %s52, %s53
      %p67 = scmp.eq.s32.totalorder %s29, 1
      %p68 = por %p66, %p67
      %p70 = scmp.ne.s32.totalorder %s53, %s69
      %p71 = scmp.eq.s32.totalorder %s29, 0
      %p72 = por %p70, %p71
      %s74 = sadd.s32 %s73, 1
      %p77 = scmp.eq.s32.totalorder %s23, 1
      %p78 = scmp.ne.s32.totalorder %s73, %s75
      %p79 = scmp.eq.s32.totalorder %s23, 0
      %p80 = por %p78, %p79
      %p81 = scmp.ne.s32.totalorder %s73, %s75
      %p82 = scmp.eq.s32.totalorder %s28, 1
      %p83 = por %p81, %p82
      %p84 = scmp.ne.s32.totalorder %s75, %s76
      %p85 = scmp.eq.s32.totalorder %s28, 0
      %p86 = por %p84, %p85
      %p87 = scmp.ne.s32.totalorder %s75, %s76
      %p88 = scmp.eq.s32.totalorder %s29, 1
      %p89 = por %p87, %p88
      %p91 = scmp.ne.s32.totalorder %s76, %s90
      %p92 = scmp.eq.s32.totalorder %s29, 0
      %p93 = por %p91, %p92
      %s95 = sadd.s32 %s94, 1
      %p98 = scmp.eq.s32.totalorder %s23, 1
      %p99 = scmp.ne.s32.totalorder %s94, %s96
      %p100 = scmp.eq.s32.totalorder %s23, 0
      %p101 = por %p99, %p100
      %p102 = scmp.ne.s32.totalorder %s94, %s96
      %p103 = scmp.eq.s32.totalorder %s28, 1
      %p104 = por %p102, %p103
      %p105 = scmp.ne.s32.totalorder %s96, %s97
      %p106 = scmp.eq.s32.totalorder %s28, 0
      %p107 = por %p105, %p106
      %p108 = scmp.ne.s32.totalorder %s96, %s97
      %p109 = scmp.eq.s32.totalorder %s29, 1
      %p110 = por %p108, %p109
      %p112 = scmp.ne.s32.totalorder %s97, %s111
      %p113 = scmp.eq.s32.totalorder %s29, 0
      %p114 = por %p112, %p113
      %s116 = sadd.s32 %s115, 1
      %p119 = scmp.eq.s32.totalorder %s23, 1
      %p120 = scmp.ne.s32.totalorder %s115, %s117
      %p121 = scmp.eq.s32.totalorder %s23, 0
      %p122 = por %p120, %p121
      %p123 = scmp.ne.s32.totalorder %s115, %s117
      %p124 = scmp.eq.s32.totalorder %s28, 1
      %p125 = por %p123, %p124
      %p126 = scmp.ne.s32.totalorder %s117, %s118
      %p127 = scmp.eq.s32.totalorder %s28, 0
      %p128 = por %p126, %p127
      %p129 = scmp.ne.s32.totalorder %s117, %s118
      %p130 = scmp.eq.s32.totalorder %s29, 1
      %p131 = por %p129, %p130
      %p133 = scmp.ne.s32.totalorder %s118, %s132
      %p134 = scmp.eq.s32.totalorder %s29, 0
      %p135 = por %p133, %p134
      %s137 = sadd.s32 %s136, 1
      %p140 = scmp.eq.s32.totalorder %s23, 1
      %p141 = scmp.ne.s32.totalorder %s136, %s138
      %p142 = scmp.eq.s32.totalorder %s23, 0
      %p143 = por %p141, %p142
      %p144 = scmp.ne.s32.totalorder %s136, %s138
      %p145 = scmp.eq.s32.totalorder %s28, 1
      %p146 = por %p144, %p145
      %p147 = scmp.ne.s32.totalorder %s138, %s139
      %p148 = scmp.eq.s32.totalorder %s28, 0
      %p149 = por %p147, %p148
      %p150 = scmp.ne.s32.totalorder %s138, %s139
      %p151 = scmp.eq.s32.totalorder %s29, 1
      %p152 = por %p150, %p151
      %p154 = scmp.ne.s32.totalorder %s139, %s153
      %p155 = scmp.eq.s32.totalorder %s29, 0
      %p156 = por %p154, %p155
      %s158 = sadd.s32 %s157, 1
      %p161 = scmp.eq.s32.totalorder %s23, 1
      %p162 = scmp.ne.s32.totalorder %s157, %s159
      %p163 = scmp.eq.s32.totalorder %s23, 0
      %p164 = por %p162, %p163
      %p165 = scmp.ne.s32.totalorder %s157, %s159
      %p166 = scmp.eq.s32.totalorder %s28, 1
      %p167 = por %p165, %p166
      %p168 = scmp.ne.s32.totalorder %s159, %s160
      %p169 = scmp.eq.s32.totalorder %s28, 0
      %p170 = por %p168, %p169
      %p171 = scmp.ne.s32.totalorder %s159, %s160
      %p172 = scmp.eq.s32.totalorder %s29, 1
      %p173 = por %p171, %p172
      %p175 = scmp.ne.s32.totalorder %s160, %s174
      %p176 = scmp.eq.s32.totalorder %s29, 0
      %p177 = por %p175, %p176
      %s179 = sadd.s32 %s178, 1
      %p182 = scmp.eq.s32.totalorder %s23, 1
      %p183 = scmp.ne.s32.totalorder %s178, %s180
      %p184 = scmp.eq.s32.totalorder %s23, 0
      %p185 = por %p183, %p184
      %p186 = scmp.ne.s32.totalorder %s178, %s180
      %p187 = scmp.eq.s32.totalorder %s28, 1
      %p188 = por %p186, %p187
      %p189 = scmp.ne.s32.totalorder %s180, %s181
      %p190 = scmp.eq.s32.totalorder %s28, 0
      %p191 = por %p189, %p190
      %p192 = scmp.ne.s32.totalorder %s180, %s181
      %p193 = scmp.eq.s32.totalorder %s29, 1
      %p194 = por %p192, %p193
      %p196 = scmp.ne.s32.totalorder %s181, %s195
      %p197 = scmp.eq.s32.totalorder %s29, 0
      %p198 = por %p196, %p197
      %s199 = smul.u32 %s30, 2
      %s200 = sadd.s32 %s199, %s31
      %s201 = smul.u32 %s42, 2
      %s202 = sadd.s32 %s201, %s38
      %s203 = ssub.s32 %s200, %s202
      %p204 = scmp.eq.s32.totalorder %s203, 0
      %s206 = sadd.s32 %s205, 1
      %s207 = scalar_select %p204, %s205, %s206
      %p210 = pneg %p204
      %p211 = scmp.eq.s32.totalorder %s23, 1
      %p212 = por %p210, %p211
      %p213 = scmp.ne.s32.totalorder %s205, %s208
      %p214 = scmp.eq.s32.totalorder %s23, 0
      %p215 = por %p213, %p214
      %p216 = scmp.ne.s32.totalorder %s205, %s208
      %p217 = scmp.eq.s32.totalorder %s28, 1
      %p218 = por %p216, %p217
      %p219 = scmp.ne.s32.totalorder %s208, %s209
      %p220 = scmp.eq.s32.totalorder %s28, 0
      %p221 = por %p219, %p220
      %p222 = scmp.ne.s32.totalorder %s208, %s209
      %p223 = scmp.eq.s32.totalorder %s29, 1
      %p224 = por %p222, %p223
      %p226 = scmp.ne.s32.totalorder %s209, %s225
      %p227 = scmp.eq.s32.totalorder %s29, 0
      %p228 = por %p226, %p227
      %s229 = ssub.s32 %s30, %s42
      %p230 = scmp.eq.s32.totalorder %s229, 0
      %s232 = sadd.s32 %s231, 1
      %s233 = scalar_select %p230, %s231, %s232
      %p236 = pneg %p230
      %p237 = scmp.eq.s32.totalorder %s23, 1
      %p238 = por %p236, %p237
      %p239 = scmp.ne.s32.totalorder %s231, %s234
      %p240 = scmp.eq.s32.totalorder %s23, 0
      %p241 = por %p239, %p240
      %p242 = scmp.ne.s32.totalorder %s231, %s234
      %p243 = scmp.eq.s32.totalorder %s28, 1
      %p244 = por %p242, %p243
      %p245 = scmp.ne.s32.totalorder %s234, %s235
      %p246 = scmp.eq.s32.totalorder %s28, 0
      %p247 = por %p245, %p246
      %p248 = scmp.ne.s32.totalorder %s234, %s235
      %p249 = scmp.eq.s32.totalorder %s29, 1
      %p250 = por %p248, %p249
      %p252 = scmp.ne.s32.totalorder %s235, %s251
      %p253 = scmp.eq.s32.totalorder %s29, 0
      %p254 = por %p252, %p253
      %s255 = ssub.s32 %s30, %s42
      %p256 = scmp.eq.s32.totalorder %s255, 0
      %s258 = sadd.s32 %s257, 1
      %s259 = scalar_select %p256, %s257, %s258
      %p262 = pneg %p256
      %p263 = scmp.eq.s32.totalorder %s23, 1
      %p264 = por %p262, %p263
      %p265 = scmp.ne.s32.totalorder %s257, %s260
      %p266 = scmp.eq.s32.totalorder %s23, 0
      %p267 = por %p265, %p266
      %p268 = scmp.ne.s32.totalorder %s257, %s260
      %p269 = scmp.eq.s32.totalorder %s28, 1
      %p270 = por %p268, %p269
      %p271 = scmp.ne.s32.totalorder %s260, %s261
      %p272 = scmp.eq.s32.totalorder %s28, 0
      %p273 = por %p271, %p272
      %p274 = scmp.ne.s32.totalorder %s260, %s261
      %p275 = scmp.eq.s32.totalorder %s29, 1
      %p276 = por %p274, %p275
      %p278 = scmp.ne.s32.totalorder %s261, %s277
      %p279 = scmp.eq.s32.totalorder %s29, 0
      %p280 = por %p278, %p279
      %s281 = ssub.s32 %s30, %s42
      %p282 = scmp.eq.s32.totalorder %s281, 0
      %s284 = sadd.s32 %s283, 1
      %s285 = scalar_select %p282, %s283, %s284
      %p288 = pneg %p282
      %p289 = scmp.eq.s32.totalorder %s23, 1
      %p290 = por %p288, %p289
      %p291 = scmp.ne.s32.totalorder %s283, %s286
      %p292 = scmp.eq.s32.totalorder %s23, 0
      %p293 = por %p291, %p292
      %p294 = scmp.ne.s32.totalorder %s283, %s286
      %p295 = scmp.eq.s32.totalorder %s28, 1
      %p296 = por %p294, %p295
      %p297 = scmp.ne.s32.totalorder %s286, %s287
      %p298 = scmp.eq.s32.totalorder %s28, 0
      %p299 = por %p297, %p298
      %p300 = scmp.ne.s32.totalorder %s286, %s287
      %p301 = scmp.eq.s32.totalorder %s29, 1
      %p302 = por %p300, %p301
      %p304 = scmp.ne.s32.totalorder %s287, %s303
      %p305 = scmp.eq.s32.totalorder %s29, 0
      %p306 = por %p304, %p305
      %s307 = ssub.s32 %s30, %s42
      %p308 = scmp.eq.s32.totalorder %s307, 0
      %s310 = sadd.s32 %s309, 1
      %s311 = scalar_select %p308, %s309, %s310
      %p314 = pneg %p308
      %p315 = scmp.eq.s32.totalorder %s23, 1
      %p316 = por %p314, %p315
      %p317 = scmp.ne.s32.totalorder %s309, %s312
      %p318 = scmp.eq.s32.totalorder %s23, 0
      %p319 = por %p317, %p318
      %p320 = scmp.ne.s32.totalorder %s309, %s312
      %p321 = scmp.eq.s32.totalorder %s28, 1
      %p322 = por %p320, %p321
      %p323 = scmp.ne.s32.totalorder %s312, %s313
      %p324 = scmp.eq.s32.totalorder %s28, 0
      %p325 = por %p323, %p324
      %p326 = scmp.ne.s32.totalorder %s312, %s313
      %p327 = scmp.eq.s32.totalorder %s29, 1
      %p328 = por %p326, %p327
      %p330 = scmp.ne.s32.totalorder %s313, %s329
      %p331 = scmp.eq.s32.totalorder %s29, 0
      %p332 = por %p330, %p331
      %p333 = scmp.le.s32.totalorder 1, %s23
      %p334 = scmp.lt.s32.totalorder %s23, 3
      %p335 = pnand %p333, %p334
      %p336 = pneg %p335
      // Predicated region
      $region9: #{tpu_custom_call.1} parent=5 // pred_check
        _
      $region10: #{tpu_custom_call.1} parent=5 // pred_check_branch
        %338 = sbr.rel (%p335) target = $region12
      $region11: #{tpu_custom_call.1} parent=5 // pred_region
        %s339 = ssub.s32 %s23, 1
        // Predicated region
        $region13: #{tpu_custom_call.1} parent=11 // pred_check
          %p340 = pneg %p86
        $region14: #{tpu_custom_call.1} parent=11 // pred_check_branch
          %342 = sbr.rel (%p340) target = $region16
        $region15: #{tpu_custom_call.1} parent=11 // pred_region
          _
        $region16: #{tpu_custom_call.1} parent=11 // pred_fallthru
          _
        // Predicated region
        $region17: #{tpu_custom_call.1} parent=11 // pred_check
          %p343 = pneg %p107
        $region18: #{tpu_custom_call.1} parent=11 // pred_check_branch
          %345 = sbr.rel (%p343) target = $region20
        $region19: #{tpu_custom_call.1} parent=11 // pred_region
          _
        $region20: #{tpu_custom_call.1} parent=11 // pred_fallthru
          _
        // Predicated region
        $region21: #{tpu_custom_call.1} parent=11 // pred_check
          %p346 = pneg %p128
        $region22: #{tpu_custom_call.1} parent=11 // pred_check_branch
          %348 = sbr.rel (%p346) target = $region24
        $region23: #{tpu_custom_call.1} parent=11 // pred_region
          _
        $region24: #{tpu_custom_call.1} parent=11 // pred_fallthru
          _
        // Predicated region
        $region25: #{tpu_custom_call.1} parent=11 // pred_check
          %p349 = pneg %p149
        $region26: #{tpu_custom_call.1} parent=11 // pred_check_branch
          %351 = sbr.rel (%p349) target = $region28
        $region27: #{tpu_custom_call.1} parent=11 // pred_region
          _
        $region28: #{tpu_custom_call.1} parent=11 // pred_fallthru
          _
        // Predicated region
        $region29: #{tpu_custom_call.1} parent=11 // pred_check
          %p352 = pneg %p170
        $region30: #{tpu_custom_call.1} parent=11 // pred_check_branch
          %354 = sbr.rel (%p352) target = $region32
        $region31: #{tpu_custom_call.1} parent=11 // pred_region
          _
        $region32: #{tpu_custom_call.1} parent=11 // pred_fallthru
          _
        // Predicated region
        $region33: #{tpu_custom_call.1} parent=11 // pred_check
          %p355 = pneg %p191
        $region34: #{tpu_custom_call.1} parent=11 // pred_check_branch
          %357 = sbr.rel (%p355) target = $region36
        $region35: #{tpu_custom_call.1} parent=11 // pred_region
          _
        $region36: #{tpu_custom_call.1} parent=11 // pred_fallthru
          _
      $region12: #{tpu_custom_call.1} parent=5 // pred_fallthru
        _
      %p358 = scmp.lt.s32.totalorder %s23, 2
      // Predicated region
      $region37: #{tpu_custom_call.1} parent=5 // pred_check
        %p359 = pneg %p358
      $region38: #{tpu_custom_call.1} parent=5 // pred_check_branch
        %361 = sbr.rel (%p359) target = $region40
      $region39: #{tpu_custom_call.1} parent=5 // pred_region
        // Predicated region
        $region41: #{tpu_custom_call.1} parent=39 // pred_check
          %p362 = pneg %p59
        $region42: #{tpu_custom_call.1} parent=39 // pred_check_branch
          %364 = sbr.rel (%p362) target = $region44
        $region43: #{tpu_custom_call.1} parent=39 // pred_region
          %s365 = smul.u32 %s30, 2
          %s366 = sadd.s32 %s365, %s31
          %s367 = smul.u32 8, %s366
          %p368 = scmp.lt.s32.totalorder %s367, 15
          %s369 = scalar_select %p368, %s367, 15
          %s370 = smul.addr %s369, 8
          %s371 = scalar_lea.vmem %s0, %s370
          %s372 = smul.u32 %s30, 2
          %s373 = sadd.s32 %s372, %s31
          %s374 = smul.u32 8, %s373
        $region44: #{tpu_custom_call.1} parent=39 // pred_fallthru
          _
      $region40: #{tpu_custom_call.1} parent=5 // pred_fallthru
        _
      %p375 = scmp.le.s32.totalorder 1, %s23
      %p376 = scmp.lt.s32.totalorder %s23, 3
      %p377 = pnand %p375, %p376
      %p378 = pneg %p377
      // Predicated region
      $region45: #{tpu_custom_call.1} parent=5 // pred_check
        _
      $region46: #{tpu_custom_call.1} parent=5 // pred_check_branch
        %380 = sbr.rel (%p377) target = $region48
      $region47: #{tpu_custom_call.1} parent=5 // pred_region
        %s381 = ssub.s32 %s23, 1
        %s382 = smul.u32 %s32, 2
        %s383 = sadd.s32 %s382, %s33
        %s384 = smul.u32 8, %s383
        %p385 = scmp.lt.s32.totalorder %s384, 15
        %s386 = scalar_select %p385, %s384, 15
        %s387 = smul.addr %s386, 8
        %s388 = scalar_lea.vmem %s0, %s387
        %p389 = pneg %p65
        %p390 = pneg %p62
        %p391 = pneg %p86
        %p392 = pneg %p83
        %p393 = pneg %p107
        %p394 = pneg %p104
        %p395 = pneg %p128
        %p396 = pneg %p125
        %p397 = pneg %p149
        %p398 = pneg %p146
        %p399 = pneg %p170
        %p400 = pneg %p167
        %p401 = pneg %p191
        %p402 = pneg %p188
        %p403 = pneg %p221
        %p404 = pneg %p218
        %s405 = sand.u32 %s208, 1
        %s406 = scalar_lea.sflag [#allocation11], %s405
        %s407 = sand.u32 %s208, 1
        %s408 = smul.addr %s407, 64
        %s409 = scalar_lea.vmem [#allocation10], %s408
        %p410 = pneg %p247
        %p411 = pneg %p244
        %p412 = pneg %p273
        %p413 = pneg %p270
        %p414 = pneg %p299
        %p415 = pneg %p296
        %p416 = pneg %p325
        %p417 = pneg %p322
        %s418 = smul.u32 %s32, 2
        %s419 = sadd.s32 %s418, %s33
        %s420 = smul.u32 8, %s419
        %p421 = scmp.lt.s32.totalorder %s420, 15
        %s422 = scalar_select %p421, %s420, 15
        %s423 = smul.addr %s422, 8
        %s424 = scalar_lea.vmem %s0, %s423
        %s425 = smul.u32 %s32, 2
        %s426 = sadd.s32 %s425, %s33
        %s427 = smul.u32 8, %s426
        %s428 = smul.u32 %s32, 2
        %s429 = sadd.s32 %s428, %s33
        %s430 = smul.u32 8, %s429
        %s431 = smul.u32 2, %s32
        %s432 = smul.u32 2, %s32
        %s433 = smul.u32 2, %s32
        %s434 = smul.u32 2, %s32
        %p436 = scmp.eq.s32.totalorder %s33, 0
        // Predicated region
        $region49: #{tpu_custom_call.1} parent=47 // pred_check
          %p437 = pneg %p436
        $region50: #{tpu_custom_call.1} parent=47 // pred_check_branch
          %439 = sbr.rel (%p437) target = $region52
        $region51: #{tpu_custom_call.1} parent=47 // pred_region
          %440 = vst [vmem:[#allocation2] sm:$0xff] 0
          %441 = vst [vmem:[#allocation3] sm:$0xff] 0.0
          %442 = vst [vmem:[#allocation3 + $0x8] sm:$0xff] 0.0
          %443 = vst [vmem:[#allocation4] sm:$0xff] 0.0
          %444 = vst [vmem:[#allocation4 + $0x8] sm:$0xff] 0.0
          %445 = vst [vmem:[#allocation5] sm:$0xff] 0.0
          %446 = vst [vmem:[#allocation5 + $0x8] sm:$0xff] 0.0
          %447 = vst [vmem:[#allocation6] sm:$0xff] 0.0
          %448 = vst [vmem:[#allocation6 + $0x8] sm:$0xff] 0.0
          %449 = vst [vmem:[#allocation7] sm:$0xff] 0.0
          %450 = vst [vmem:[#allocation7 + $0x8] sm:$0xff] 0.0
        $region52: #{tpu_custom_call.1} parent=47 // pred_fallthru
          _
        %v451 = vld [vmem:[%s4] sm:$0x1]
        %v452 = vld [vmem:[%s5] sm:$0x1]
        %v453 = vld [vmem:[%s2] sm:$0xf]
        %v454 = vld [vmem:[%s2 + $0x4] sm:$0xf]
        %v455 = vld [vmem:[%s2 + $0x8] sm:$0xf]
        %v456 = vld [vmem:[%s2 + $0xc] sm:$0xf]
        %v457 = vld [vmem:[%s2 + $0x10] sm:$0xf]
        %v458 = vld [vmem:[%s2 + $0x14] sm:$0xf]
        %v459 = vld [vmem:[%s2 + $0x18] sm:$0xf]
        %v460 = vld [vmem:[%s2 + $0x1c] sm:$0xf]
        %v461 = vld [vmem:[%s2 + $0x20] sm:$0xf]
        %v462 = vld [vmem:[%s2 + $0x24] sm:$0xf]
        %v463 = vld [vmem:[%s2 + $0x28] sm:$0xf]
        %v464 = vld [vmem:[%s2 + $0x2c] sm:$0xf]
        %v465 = vld [vmem:[%s2 + $0x30] sm:$0xf]
        %v466 = vld [vmem:[%s2 + $0x34] sm:$0xf]
        %v467 = vld [vmem:[%s2 + $0x38] sm:$0xf]
        %v468 = vld [vmem:[%s2 + $0x3c] sm:$0xf]
        %v469 = vld [vmem:[%s6] sm:$0x1]
        %v470 = vsub.f32 1.0, %v469
        %v471 = vld [vmem:[%s424] sm:$0xff]
        %v472 = vld [vmem:[%s424 + $0x8] sm:$0xff]
        %v473 = vld [vmem:[%s424 + $0x10] sm:$0xff]
        %v474 = vld [vmem:[%s424 + $0x18] sm:$0xff]
        %v475 = vld [vmem:[%s424 + $0x20] sm:$0xff]
        %v476 = vld [vmem:[%s424 + $0x28] sm:$0xff]
        %v477 = vld [vmem:[%s424 + $0x30] sm:$0xff]
        %v478 = vld [vmem:[%s424 + $0x38] sm:$0xff]
        %v479 = vld [vmem:[%s1] sm:$0xff]
        %v480 = vld [vmem:[%s1 + $0x8] sm:$0xff]
        %vm481 = vcmask 130048
        %v483 = vsel %vm481, %v471, 0
        %v486 = vsel %vm481, %v472, 0
        %v489 = vsel %vm481, %v473, 0
        %v492 = vsel %vm481, %v474, 0
        %v495 = vsel %vm481, %v475, 0
        %v498 = vsel %vm481, %v476, 0
        %v501 = vsel %vm481, %v477, 0
        %v504 = vsel %vm481, %v478, 0
        %506 = vmatprep.subr.mxu0 0.0
        %507 = vmatpush1.msra.mxu0 %v479
        %508 = vmatprep.subr.mxu0 0.0
        %509 = vmatpush1.msra.mxu0 %v480
        %510 = vmatprep.subr.mxu0 0.0
        %511 = vmatpush1.msra.mxu0 0.0
        %512 = vmatprep.subr.mxu0 0.0
        %513 = vmatpush1.msra.mxu0 0.0
        %514 = vmatprep.subr.mxu0 0.0
        %515 = vmatpush1.msra.mxu0 0.0
        %516 = vmatprep.subr.mxu0 0.0
        %517 = vmatpush1.msra.mxu0 0.0
        %518 = vmatprep.subr.mxu0 0.0
        %519 = vmatpush1.msra.mxu0 0.0
        %520 = vmatprep.subr.mxu0 0.0
        %521 = vmatpush1.msra.mxu0 0.0
        %522 = vmatprep.subr.mxu0 0.0
        %523 = vmatpush1.msra.mxu0 0.0
        %524 = vmatprep.subr.mxu0 0.0
        %525 = vmatpush1.msra.mxu0 0.0
        %526 = vmatprep.subr.mxu0 0.0
        %527 = vmatpush1.msra.mxu0 0.0
        %528 = vmatprep.subr.mxu0 0.0
        %529 = vmatpush1.msra.mxu0 0.0
        %530 = vmatprep.subr.mxu0 0.0
        %531 = vmatpush1.msra.mxu0 0.0
        %532 = vmatprep.subr.mxu0 0.0
        %533 = vmatpush1.msra.mxu0 0.0
        %534 = vmatprep.subr.mxu0 0.0
        %535 = vmatpush1.msra.mxu0 0.0
        %536 = vmatprep.subr.mxu0 0.0
        %537 = vmatpush1.msra.mxu0 0.0
        %538 = vmatprep.subr.mxu0 0.0
        %539 = vmatpush1.msra.mxu0 0.0
        %540 = vmatprep.subr.mxu0 0.0
        %541 = vmatpush1.msra.mxu0 0.0
        %542 = vmatprep.subr.mxu0 0.0
        %543 = vmatpush1.msra.mxu0 0.0
        %544 = vmatprep.subr.mxu0 0.0
        %545 = vmatpush1.msra.mxu0 0.0
        %546 = vmatprep.subr.mxu0 0.0
        %547 = vmatpush1.msra.mxu0 0.0
        %548 = vmatprep.subr.mxu0 0.0
        %549 = vmatpush1.msra.mxu0 0.0
        %550 = vmatprep.subr.mxu0 0.0
        %551 = vmatpush1.msra.mxu0 0.0
        %552 = vmatprep.subr.mxu0 0.0
        %553 = vmatpush1.msra.mxu0 0.0
        %554 = vmatprep.subr.mxu0 0.0
        %555 = vmatpush1.msra.mxu0 0.0
        %556 = vmatprep.subr.mxu0 0.0
        %557 = vmatpush1.msra.mxu0 0.0
        %558 = vmatprep.subr.mxu0 0.0
        %559 = vmatpush1.msra.mxu0 0.0
        %560 = vmatprep.subr.mxu0 0.0
        %561 = vmatpush1.msra.mxu0 0.0
        %562 = vmatprep.subr.mxu0 0.0
        %563 = vmatpush1.msra.mxu0 0.0
        %564 = vmatprep.subr.mxu0 0.0
        %565 = vmatpush1.msra.mxu0 0.0
        %566 = vmatprep.subr.mxu0 0.0
        %567 = vmatpush1.msra.mxu0 0.0
        %568 = vmatprep.subr.mxu0 0.0
        %569 = vmatpush1.msra.mxu0 0.0
        %570 = vmatprep.mubr.f32.mxu0 0.0
        %571 = vmatmul.mubr.f32.gmra.mrb[0].mxu0 %v483
        %v572 = vpop.f32.mrb[0].mxu0
        %v573 = vadd.f32 0.0, %v572
        %v574 = vpop.f32.mrb[0].mxu0
        %575 = vmatprep.mubr.f32.mxu0 0.0
        %576 = vmatmul.mubr.f32.gmra.mrb[0].mxu0 %v486
        %v577 = vpop.f32.mrb[0].mxu0
        %v578 = vadd.f32 0.0, %v577
        %v579 = vpop.f32.mrb[0].mxu0
        %580 = vmatprep.mubr.f32.mxu0 0.0
        %581 = vmatmul.mubr.f32.gmra.mrb[0].mxu0 %v489
        %v582 = vpop.f32.mrb[0].mxu0
        %v583 = vadd.f32 0.0, %v582
        %v584 = vpop.f32.mrb[0].mxu0
        %585 = vmatprep.mubr.f32.mxu0 0.0
        %586 = vmatmul.mubr.f32.gmra.mrb[0].mxu0 %v492
        %v587 = vpop.f32.mrb[0].mxu0
        %v588 = vadd.f32 0.0, %v587
        %v589 = vpop.f32.mrb[0].mxu0
        %590 = vmatprep.mubr.f32.mxu0 0.0
        %591 = vmatmul.mubr.f32.gmra.mrb[0].mxu0 %v495
        %v592 = vpop.f32.mrb[0].mxu0
        %v593 = vadd.f32 0.0, %v592
        %v594 = vpop.f32.mrb[0].mxu0
        %595 = vmatprep.mubr.f32.mxu0 0.0
        %596 = vmatmul.mubr.f32.gmra.mrb[0].mxu0 %v498
        %v597 = vpop.f32.mrb[0].mxu0
        %v598 = vadd.f32 0.0, %v597
        %v599 = vpop.f32.mrb[0].mxu0
        %600 = vmatprep.mubr.f32.mxu0 0.0
        %601 = vmatmul.mubr.f32.gmra.mrb[0].mxu0 %v501
        %v602 = vpop.f32.mrb[0].mxu0
        %v603 = vadd.f32 0.0, %v602
        %v604 = vpop.f32.mrb[0].mxu0
        %605 = vmatprep.mubr.f32.mxu0 0.0
        %606 = vmatmul.mubr.f32.gmra.mrb[0].mxu0 %v504
        %v607 = vpop.f32.mrb[0].mxu0
        %v608 = vadd.f32 0.0, %v607
        %v609 = vpop.f32.mrb[0].mxu0
        %610 = vdwg.mxu0
        %611 = vst [vmem:[#allocation8] sm:$0xff] %v573
        %612 = vst [vmem:[#allocation8 + $0x8] sm:$0xff] %v578
        %613 = vst [vmem:[#allocation8 + $0x10] sm:$0xff] %v583
        %614 = vst [vmem:[#allocation8 + $0x18] sm:$0xff] %v588
        %615 = vst [vmem:[#allocation8 + $0x20] sm:$0xff] %v593
        %616 = vst [vmem:[#allocation8 + $0x28] sm:$0xff] %v598
        %617 = vst [vmem:[#allocation8 + $0x30] sm:$0xff] %v603
        %618 = vst [vmem:[#allocation8 + $0x38] sm:$0xff] %v608
        %v619 = vld [vmem:[#allocation2] sm:$0xff]
        %v620 = vld [vmem:[#allocation3] sm:$0xff]
        %v621 = vld [vmem:[#allocation3 + $0x8] sm:$0xff]
        %v622 = vld [vmem:[#allocation4] sm:$0xff]
        %v623 = vld [vmem:[#allocation4 + $0x8] sm:$0xff]
        %v624 = vld [vmem:[#allocation5] sm:$0xff]
        %v625 = vld [vmem:[#allocation5 + $0x8] sm:$0xff]
        %v626 = vld [vmem:[#allocation8] sm:$0xff]
        %v627 = vld [vmem:[#allocation8 + $0x8] sm:$0xff]
        %v644 = vunpack.c.l.b16 %v453
        %v645 = vunpack.c.l.b16 %v454
        %v646 = vunpack.c.l.b16 %v455
        %v647 = vunpack.c.l.b16 %v456
        %v648 = vunpack.c.l.b16 %v457
        %v649 = vunpack.c.l.b16 %v458
        %v650 = vunpack.c.l.b16 %v459
        %v651 = vunpack.c.l.b16 %v460
        %v652 = vunpack.c.l.b16 %v461
        %v653 = vunpack.c.l.b16 %v462
        %v654 = vunpack.c.l.b16 %v463
        %v655 = vunpack.c.l.b16 %v464
        %v656 = vunpack.c.l.b16 %v465
        %v657 = vunpack.c.l.b16 %v466
        %v658 = vunpack.c.l.b16 %v467
        %v659 = vunpack.c.l.b16 %v468
        %v660 = vpack.c.b16 %v645, %v644
        %v661 = vpack.c.b16 %v647, %v646
        %v662 = vpack.c.b16 %v649, %v648
        %v663 = vpack.c.b16 %v651, %v650
        %v664 = vpack.c.b16 %v653, %v652
        %v665 = vpack.c.b16 %v655, %v654
        %v666 = vpack.c.b16 %v657, %v656
        %v667 = vpack.c.b16 %v659, %v658
        %676 = vmatprep.subr.bf16.mxu0 0
        %677 = vmatpush1.bf16.msra.mxu0 %v660
        %678 = vmatprep.subr.bf16.mxu0 0
        %679 = vmatpush1.bf16.msra.mxu0 %v661
        %680 = vmatprep.subr.bf16.mxu0 0
        %681 = vmatpush1.bf16.msra.mxu0 %v662
        %682 = vmatprep.subr.bf16.mxu0 0
        %683 = vmatpush1.bf16.msra.mxu0 %v663
        %684 = vmatprep.subr.bf16.mxu0 0
        %685 = vmatpush1.bf16.msra.mxu0 %v664
        %686 = vmatprep.subr.bf16.mxu0 0
        %687 = vmatpush1.bf16.msra.mxu0 %v665
        %688 = vmatprep.subr.bf16.mxu0 0
        %689 = vmatpush1.bf16.msra.mxu0 %v666
        %690 = vmatprep.subr.bf16.mxu0 0
        %691 = vmatpush1.bf16.msra.mxu0 %v667
        %692 = vmatprep.subr.bf16.mxu0 0
        %693 = vmatpush1.bf16.msra.mxu0 0
        %694 = vmatprep.subr.bf16.mxu0 0
        %695 = vmatpush1.bf16.msra.mxu0 0
        %696 = vmatprep.subr.bf16.mxu0 0
        %697 = vmatpush1.bf16.msra.mxu0 0
        %698 = vmatprep.subr.bf16.mxu0 0
        %699 = vmatpush1.bf16.msra.mxu0 0
        %700 = vmatprep.subr.bf16.mxu0 0
        %701 = vmatpush1.bf16.msra.mxu0 0
        %702 = vmatprep.subr.bf16.mxu0 0
        %703 = vmatpush1.bf16.msra.mxu0 0
        %704 = vmatprep.subr.bf16.mxu0 0
        %705 = vmatpush1.bf16.msra.mxu0 0
        %706 = vmatprep.subr.bf16.mxu0 0
        %707 = vmatpush1.bf16.msra.mxu0 0
        %708 = vmatprep.mubr.bf16.mxu0 0
        %709 = vmatmul.mubr.bf16.gmra.mrb[0].mxu0 %v619
        %v710 = vpop.f32.mrb[0].mxu0
        %v711 = vadd.f32 0.0, %v710
        %v712 = vpop.f32.mrb[0].mxu0
        %v713 = vpop.f32.mrb[0].mxu0
        %v714 = vadd.f32 0.0, %v713
        %v715 = vpop.f32.mrb[0].mxu0
        %716 = vdwg.mxu0
        %v717 = vadd.f32 %v626, %v711
        %v718 = vadd.f32 %v627, %v714
        %v720 = vlaneseq
        %v721 = vshrl.u32 %v720, 7
        %v722 = vsub.s32 0, %v721
        %v723 = vrot.slane %v452, %v722
        %v725 = vsub.f32 %v723, %v624
        %v726 = vsub.f32 %v723, %v625
        %v727 = vmul.f32 %v725, %v620
        %v728 = vmul.f32 %v726, %v621
        %v730 = vlaneseq
        %v731 = vshrl.u32 %v730, 7
        %v732 = vsub.s32 0, %v731
        %v733 = vrot.slane %v451, %v732
        %v735 = vmul.f32 %v733, %v622
        %v736 = vmul.f32 %v733, %v623
        %v737 = vsub.f32 %v727, %v735
        %v738 = vsub.f32 %v728, %v736
        %v739 = vadd.f32 %v737, %v717
        %v740 = vadd.f32 %v738, %v718
        %v741 = vmul.f32 %v739, 0.01
        %v742 = vmul.f32 %v740, 0.01
        %v743 = vadd.f32 %v620, %v741
        %v744 = vadd.f32 %v621, %v742
        %v745 = vmul.f32 %v733, %v620
        %v746 = vmul.f32 %v733, %v621
        %v747 = vmul.f32 %v725, %v622
        %v748 = vmul.f32 %v726, %v623
        %v749 = vadd.f32 %v745, %v747
        %v750 = vadd.f32 %v746, %v748
        %v751 = vmul.f32 %v749, 0.01
        %v752 = vmul.f32 %v750, 0.01
        %v753 = vadd.f32 %v622, %v751
        %v754 = vadd.f32 %v623, %v752
        %v755 = vadd.f32 %v624, 1.0
        %v756 = vadd.f32 %v625, 1.0
        %v757 = vsub.f32 %v743, %v755
        %v758 = vsub.f32 %v744, %v756
        %vm759 = vcmp.gt.f32.partialorder %v757, 0.0
        %vm760 = vcmp.gt.f32.partialorder %v758, 0.0
        %v761 = vsel %vm759, 1, 0
        %v762 = vsel %vm760, 1, 0
        %v763 = vcvt.s32.f32 %v761
        %v764 = vcvt.s32.f32 %v762
        %v765 = vmul.f32 %v624, 0.9
        %v766 = vmul.f32 %v625, 0.9
        %v767 = vadd.f32 %v765, %v763
        %v768 = vadd.f32 %v766, %v764
        %v769 = vpack.c.bf16 %v764, %v763
        %770 = vst [vmem:[#allocation9] sm:$0xff] %v769
        %s771 = scalar_lea.vmem [#allocation8], 16
        %v772 = vld [vmem:[%s771] sm:$0xff]
        %v773 = vld [vmem:[%s771 + $0x8] sm:$0xff]
        %774 = vmatprep.subr.bf16.mxu0 0
        %775 = vmatpush1.bf16.msra.mxu0 %v660
        %776 = vmatprep.subr.bf16.mxu0 0
        %777 = vmatpush1.bf16.msra.mxu0 %v661
        %778 = vmatprep.subr.bf16.mxu0 0
        %779 = vmatpush1.bf16.msra.mxu0 %v662
        %780 = vmatprep.subr.bf16.mxu0 0
        %781 = vmatpush1.bf16.msra.mxu0 %v663
        %782 = vmatprep.subr.bf16.mxu0 0
        %783 = vmatpush1.bf16.msra.mxu0 %v664
        %784 = vmatprep.subr.bf16.mxu0 0
        %785 = vmatpush1.bf16.msra.mxu0 %v665
        %786 = vmatprep.subr.bf16.mxu0 0
        %787 = vmatpush1.bf16.msra.mxu0 %v666
        %788 = vmatprep.subr.bf16.mxu0 0
        %789 = vmatpush1.bf16.msra.mxu0 %v667
        %790 = vmatprep.subr.bf16.mxu0 0
        %791 = vmatpush1.bf16.msra.mxu0 0
        %792 = vmatprep.subr.bf16.mxu0 0
        %793 = vmatpush1.bf16.msra.mxu0 0
        %794 = vmatprep.subr.bf16.mxu0 0
        %795 = vmatpush1.bf16.msra.mxu0 0
        %796 = vmatprep.subr.bf16.mxu0 0
        %797 = vmatpush1.bf16.msra.mxu0 0
        %798 = vmatprep.subr.bf16.mxu0 0
        %799 = vmatpush1.bf16.msra.mxu0 0
        %800 = vmatprep.subr.bf16.mxu0 0
        %801 = vmatpush1.bf16.msra.mxu0 0
        %802 = vmatprep.subr.bf16.mxu0 0
        %803 = vmatpush1.bf16.msra.mxu0 0
        %804 = vmatprep.subr.bf16.mxu0 0
        %805 = vmatpush1.bf16.msra.mxu0 0
        %806 = vmatprep.mubr.bf16.mxu0 0
        %807 = vmatmul.mubr.bf16.gmra.mrb[0].mxu0 %v769
        %v808 = vpop.f32.mrb[0].mxu0
        %v809 = vadd.f32 0.0, %v808
        %v810 = vpop.f32.mrb[0].mxu0
        %v811 = vpop.f32.mrb[0].mxu0
        %v812 = vadd.f32 0.0, %v811
        %v813 = vpop.f32.mrb[0].mxu0
        %814 = vdwg.mxu0
        %v815 = vadd.f32 %v772, %v809
        %v816 = vadd.f32 %v773, %v812
        %v817 = vsub.f32 %v723, %v767
        %v818 = vsub.f32 %v723, %v768
        %v819 = vmul.f32 %v817, %v743
        %v820 = vmul.f32 %v818, %v744
        %v821 = vmul.f32 %v733, %v753
        %v822 = vmul.f32 %v733, %v754
        %v823 = vsub.f32 %v819, %v821
        %v824 = vsub.f32 %v820, %v822
        %v825 = vadd.f32 %v823, %v815
        %v826 = vadd.f32 %v824, %v816
        %v827 = vmul.f32 %v825, 0.01
        %v828 = vmul.f32 %v826, 0.01
        %v829 = vadd.f32 %v743, %v827
        %v830 = vadd.f32 %v744, %v828
        %v831 = vmul.f32 %v733, %v743
        %v832 = vmul.f32 %v733, %v744
        %v833 = vmul.f32 %v817, %v753
        %v834 = vmul.f32 %v818, %v754
        %v835 = vadd.f32 %v831, %v833
        %v836 = vadd.f32 %v832, %v834
        %v837 = vmul.f32 %v835, 0.01
        %v838 = vmul.f32 %v836, 0.01
        %v839 = vadd.f32 %v753, %v837
        %v840 = vadd.f32 %v754, %v838
        %v841 = vadd.f32 %v767, 1.0
        %v842 = vadd.f32 %v768, 1.0
        %v843 = vsub.f32 %v829, %v841
        %v844 = vsub.f32 %v830, %v842
        %vm845 = vcmp.gt.f32.partialorder %v843, 0.0
        %vm846 = vcmp.gt.f32.partialorder %v844, 0.0
        %v847 = vsel %vm845, 1, 0
        %v848 = vsel %vm846, 1, 0
        %v849 = vcvt.s32.f32 %v847
        %v850 = vcvt.s32.f32 %v848
        %v851 = vmul.f32 %v767, 0.9
        %v852 = vmul.f32 %v768, 0.9
        %v853 = vadd.f32 %v851, %v849
        %v854 = vadd.f32 %v852, %v850
        %v855 = vpack.c.bf16 %v850, %v849
        %s856 = scalar_lea.vmem [#allocation9], 8
        %857 = vst [vmem:[%s856] sm:$0xff] %v855
        %s858 = scalar_lea.vmem [#allocation8], 32
        %v859 = vld [vmem:[%s858] sm:$0xff]
        %v860 = vld [vmem:[%s858 + $0x8] sm:$0xff]
        %861 = vmatprep.subr.bf16.mxu0 0
        %862 = vmatpush1.bf16.msra.mxu0 %v660
        %863 = vmatprep.subr.bf16.mxu0 0
        %864 = vmatpush1.bf16.msra.mxu0 %v661
        %865 = vmatprep.subr.bf16.mxu0 0
        %866 = vmatpush1.bf16.msra.mxu0 %v662
        %867 = vmatprep.subr.bf16.mxu0 0
        %868 = vmatpush1.bf16.msra.mxu0 %v663
        %869 = vmatprep.subr.bf16.mxu0 0
        %870 = vmatpush1.bf16.msra.mxu0 %v664
        %871 = vmatprep.subr.bf16.mxu0 0
        %872 = vmatpush1.bf16.msra.mxu0 %v665
        %873 = vmatprep.subr.bf16.mxu0 0
        %874 = vmatpush1.bf16.msra.mxu0 %v666
        %875 = vmatprep.subr.bf16.mxu0 0
        %876 = vmatpush1.bf16.msra.mxu0 %v667
        %877 = vmatprep.subr.bf16.mxu0 0
        %878 = vmatpush1.bf16.msra.mxu0 0
        %879 = vmatprep.subr.bf16.mxu0 0
        %880 = vmatpush1.bf16.msra.mxu0 0
        %881 = vmatprep.subr.bf16.mxu0 0
        %882 = vmatpush1.bf16.msra.mxu0 0
        %883 = vmatprep.subr.bf16.mxu0 0
        %884 = vmatpush1.bf16.msra.mxu0 0
        %885 = vmatprep.subr.bf16.mxu0 0
        %886 = vmatpush1.bf16.msra.mxu0 0
        %887 = vmatprep.subr.bf16.mxu0 0
        %888 = vmatpush1.bf16.msra.mxu0 0
        %889 = vmatprep.subr.bf16.mxu0 0
        %890 = vmatpush1.bf16.msra.mxu0 0
        %891 = vmatprep.subr.bf16.mxu0 0
        %892 = vmatpush1.bf16.msra.mxu0 0
        %893 = vmatprep.mubr.bf16.mxu0 0
        %894 = vmatmul.mubr.bf16.gmra.mrb[0].mxu0 %v855
        %v895 = vpop.f32.mrb[0].mxu0
        %v896 = vadd.f32 0.0, %v895
        %v897 = vpop.f32.mrb[0].mxu0
        %v898 = vpop.f32.mrb[0].mxu0
        %v899 = vadd.f32 0.0, %v898
        %v900 = vpop.f32.mrb[0].mxu0
        %901 = vdwg.mxu0
        %v902 = vadd.f32 %v859, %v896
        %v903 = vadd.f32 %v860, %v899
        %v904 = vsub.f32 %v723, %v853
        %v905 = vsub.f32 %v723, %v854
        %v906 = vmul.f32 %v904, %v829
        %v907 = vmul.f32 %v905, %v830
        %v908 = vmul.f32 %v733, %v839
        %v909 = vmul.f32 %v733, %v840
        %v910 = vsub.f32 %v906, %v908
        %v911 = vsub.f32 %v907, %v909
        %v912 = vadd.f32 %v910, %v902
        %v913 = vadd.f32 %v911, %v903
        %v914 = vmul.f32 %v912, 0.01
        %v915 = vmul.f32 %v913, 0.01
        %v916 = vadd.f32 %v829, %v914
        %v917 = vadd.f32 %v830, %v915
        %v918 = vmul.f32 %v733, %v829
        %v919 = vmul.f32 %v733, %v830
        %v920 = vmul.f32 %v904, %v839
        %v921 = vmul.f32 %v905, %v840
        %v922 = vadd.f32 %v918, %v920
        %v923 = vadd.f32 %v919, %v921
        %v924 = vmul.f32 %v922, 0.01
        %v925 = vmul.f32 %v923, 0.01
        %v926 = vadd.f32 %v839, %v924
        %v927 = vadd.f32 %v840, %v925
        %v928 = vadd.f32 %v853, 1.0
        %v929 = vadd.f32 %v854, 1.0
        %v930 = vsub.f32 %v916, %v928
        %v931 = vsub.f32 %v917, %v929
        %vm932 = vcmp.gt.f32.partialorder %v930, 0.0
        %vm933 = vcmp.gt.f32.partialorder %v931, 0.0
        %v934 = vsel %vm932, 1, 0
        %v935 = vsel %vm933, 1, 0
        %v936 = vcvt.s32.f32 %v934
        %v937 = vcvt.s32.f32 %v935
        %v938 = vmul.f32 %v853, 0.9
        %v939 = vmul.f32 %v854, 0.9
        %v940 = vadd.f32 %v938, %v936
        %v941 = vadd.f32 %v939, %v937
        %v942 = vpack.c.bf16 %v937, %v936
        %s943 = scalar_lea.vmem [#allocation9], 16
        %944 = vst [vmem:[%s943] sm:$0xff] %v942
        %s945 = scalar_lea.vmem [#allocation8], 48
        %v946 = vld [vmem:[%s945] sm:$0xff]
        %v947 = vld [vmem:[%s945 + $0x8] sm:$0xff]
        %948 = vmatprep.subr.bf16.mxu0 0
        %949 = vmatpush1.bf16.msra.mxu0 %v660
        %950 = vmatprep.subr.bf16.mxu0 0
        %951 = vmatpush1.bf16.msra.mxu0 %v661
        %952 = vmatprep.subr.bf16.mxu0 0
        %953 = vmatpush1.bf16.msra.mxu0 %v662
        %954 = vmatprep.subr.bf16.mxu0 0
        %955 = vmatpush1.bf16.msra.mxu0 %v663
        %956 = vmatprep.subr.bf16.mxu0 0
        %957 = vmatpush1.bf16.msra.mxu0 %v664
        %958 = vmatprep.subr.bf16.mxu0 0
        %959 = vmatpush1.bf16.msra.mxu0 %v665
        %960 = vmatprep.subr.bf16.mxu0 0
        %961 = vmatpush1.bf16.msra.mxu0 %v666
        %962 = vmatprep.subr.bf16.mxu0 0
        %963 = vmatpush1.bf16.msra.mxu0 %v667
        %964 = vmatprep.subr.bf16.mxu0 0
        %965 = vmatpush1.bf16.msra.mxu0 0
        %966 = vmatprep.subr.bf16.mxu0 0
        %967 = vmatpush1.bf16.msra.mxu0 0
        %968 = vmatprep.subr.bf16.mxu0 0
        %969 = vmatpush1.bf16.msra.mxu0 0
        %970 = vmatprep.subr.bf16.mxu0 0
        %971 = vmatpush1.bf16.msra.mxu0 0
        %972 = vmatprep.subr.bf16.mxu0 0
        %973 = vmatpush1.bf16.msra.mxu0 0
        %974 = vmatprep.subr.bf16.mxu0 0
        %975 = vmatpush1.bf16.msra.mxu0 0
        %976 = vmatprep.subr.bf16.mxu0 0
        %977 = vmatpush1.bf16.msra.mxu0 0
        %978 = vmatprep.subr.bf16.mxu0 0
        %979 = vmatpush1.bf16.msra.mxu0 0
        %980 = vmatprep.mubr.bf16.mxu0 0
        %981 = vmatmul.mubr.bf16.gmra.mrb[0].mxu0 %v942
        %v982 = vpop.f32.mrb[0].mxu0
        %v983 = vadd.f32 0.0, %v982
        %v984 = vpop.f32.mrb[0].mxu0
        %v985 = vpop.f32.mrb[0].mxu0
        %v986 = vadd.f32 0.0, %v985
        %v987 = vpop.f32.mrb[0].mxu0
        %988 = vdwg.mxu0
        %v989 = vadd.f32 %v946, %v983
        %v990 = vadd.f32 %v947, %v986
        %v991 = vsub.f32 %v723, %v940
        %v992 = vsub.f32 %v723, %v941
        %v993 = vmul.f32 %v991, %v916
        %v994 = vmul.f32 %v992, %v917
        %v995 = vmul.f32 %v733, %v926
        %v996 = vmul.f32 %v733, %v927
        %v997 = vsub.f32 %v993, %v995
        %v998 = vsub.f32 %v994, %v996
        %v999 = vadd.f32 %v997, %v989
        %v1000 = vadd.f32 %v998, %v990
        %v1001 = vmul.f32 %v999, 0.01
        %v1002 = vmul.f32 %v1000, 0.01
        %v1003 = vadd.f32 %v916, %v1001
        %v1004 = vadd.f32 %v917, %v1002
        %v1005 = vmul.f32 %v733, %v916
        %v1006 = vmul.f32 %v733, %v917
        %v1007 = vmul.f32 %v991, %v926
        %v1008 = vmul.f32 %v992, %v927
        %v1009 = vadd.f32 %v1005, %v1007
        %v1010 = vadd.f32 %v1006, %v1008
        %v1011 = vmul.f32 %v1009, 0.01
        %v1012 = vmul.f32 %v1010, 0.01
        %v1013 = vadd.f32 %v926, %v1011
        %v1014 = vadd.f32 %v927, %v1012
        %v1015 = vadd.f32 %v940, 1.0
        %v1016 = vadd.f32 %v941, 1.0
        %v1017 = vsub.f32 %v1003, %v1015
        %v1018 = vsub.f32 %v1004, %v1016
        %vm1019 = vcmp.gt.f32.partialorder %v1017, 0.0
        %vm1020 = vcmp.gt.f32.partialorder %v1018, 0.0
        %v1021 = vsel %vm1019, 1, 0
        %v1022 = vsel %vm1020, 1, 0
        %v1023 = vcvt.s32.f32 %v1021
        %v1024 = vcvt.s32.f32 %v1022
        %v1025 = vmul.f32 %v940, 0.9
        %v1026 = vmul.f32 %v941, 0.9
        %v1027 = vadd.f32 %v1025, %v1023
        %v1028 = vadd.f32 %v1026, %v1024
        %v1029 = vpack.c.bf16 %v1024, %v1023
        %s1030 = scalar_lea.vmem [#allocation9], 24
        %1031 = vst [vmem:[%s1030] sm:$0xff] %v1029
        %1032 = vst [vmem:[#allocation2] sm:$0xff] %v1029
        %1033 = vst [vmem:[#allocation3] sm:$0xff] %v1003
        %1034 = vst [vmem:[#allocation3 + $0x8] sm:$0xff] %v1004
        %1035 = vst [vmem:[#allocation4] sm:$0xff] %v1013
        %1036 = vst [vmem:[#allocation4 + $0x8] sm:$0xff] %v1014
        %1037 = vst [vmem:[#allocation5] sm:$0xff] %v1027
        %1038 = vst [vmem:[#allocation5 + $0x8] sm:$0xff] %v1028
        %v1039 = vld [vmem:[#allocation9] sm:$0xff]
        %v1040 = vld [vmem:[#allocation9 + $0x8] sm:$0xff]
        %v1041 = vld [vmem:[#allocation9 + $0x10] sm:$0xff]
        %v1042 = vld [vmem:[#allocation9 + $0x18] sm:$0xff]
        %v1043 = vld [vmem:[%s3] sm:$0xf]
        %v1044 = vld [vmem:[%s3 + $0x4] sm:$0xf]
        %v1045 = vld [vmem:[%s3 + $0x8] sm:$0xf]
        %v1046 = vld [vmem:[%s3 + $0xc] sm:$0xf]
        %v1047 = vld [vmem:[%s3 + $0x10] sm:$0xf]
        %v1048 = vld [vmem:[%s3 + $0x14] sm:$0xf]
        %v1049 = vld [vmem:[%s3 + $0x18] sm:$0xf]
        %v1050 = vld [vmem:[%s3 + $0x1c] sm:$0xf]
        %v1051 = vld [vmem:[%s3 + $0x20] sm:$0xf]
        %v1052 = vld [vmem:[%s3 + $0x24] sm:$0xf]
        %v1053 = vld [vmem:[%s3 + $0x28] sm:$0xf]
        %v1054 = vld [vmem:[%s3 + $0x2c] sm:$0xf]
        %v1055 = vld [vmem:[%s3 + $0x30] sm:$0xf]
        %v1056 = vld [vmem:[%s3 + $0x34] sm:$0xf]
        %v1057 = vld [vmem:[%s3 + $0x38] sm:$0xf]
        %v1058 = vld [vmem:[%s3 + $0x3c] sm:$0xf]
        %v1075 = vunpack.c.l.b16 %v1043
        %v1076 = vunpack.c.l.b16 %v1044
        %v1077 = vunpack.c.l.b16 %v1045
        %v1078 = vunpack.c.l.b16 %v1046
        %v1079 = vunpack.c.l.b16 %v1047
        %v1080 = vunpack.c.l.b16 %v1048
        %v1081 = vunpack.c.l.b16 %v1049
        %v1082 = vunpack.c.l.b16 %v1050
        %v1083 = vunpack.c.l.b16 %v1051
        %v1084 = vunpack.c.l.b16 %v1052
        %v1085 = vunpack.c.l.b16 %v1053
        %v1086 = vunpack.c.l.b16 %v1054
        %v1087 = vunpack.c.l.b16 %v1055
        %v1088 = vunpack.c.l.b16 %v1056
        %v1089 = vunpack.c.l.b16 %v1057
        %v1090 = vunpack.c.l.b16 %v1058
        %v1091 = vpack.c.b16 %v1076, %v1075
        %v1092 = vpack.c.b16 %v1078, %v1077
        %v1093 = vpack.c.b16 %v1080, %v1079
        %v1094 = vpack.c.b16 %v1082, %v1081
        %v1095 = vpack.c.b16 %v1084, %v1083
        %v1096 = vpack.c.b16 %v1086, %v1085
        %v1097 = vpack.c.b16 %v1088, %v1087
        %v1098 = vpack.c.b16 %v1090, %v1089
        %1107 = vmatprep.subr.bf16.mxu0 0
        %1108 = vmatpush1.bf16.msra.mxu0 %v1091
        %1109 = vmatprep.subr.bf16.mxu0 0
        %1110 = vmatpush1.bf16.msra.mxu0 %v1092
        %1111 = vmatprep.subr.bf16.mxu0 0
        %1112 = vmatpush1.bf16.msra.mxu0 %v1093
        %1113 = vmatprep.subr.bf16.mxu0 0
        %1114 = vmatpush1.bf16.msra.mxu0 %v1094
        %1115 = vmatprep.subr.bf16.mxu0 0
        %1116 = vmatpush1.bf16.msra.mxu0 %v1095
        %1117 = vmatprep.subr.bf16.mxu0 0
        %1118 = vmatpush1.bf16.msra.mxu0 %v1096
        %1119 = vmatprep.subr.bf16.mxu0 0
        %1120 = vmatpush1.bf16.msra.mxu0 %v1097
        %1121 = vmatprep.subr.bf16.mxu0 0
        %1122 = vmatpush1.bf16.msra.mxu0 %v1098
        %1123 = vmatprep.subr.bf16.mxu0 0
        %1124 = vmatpush1.bf16.msra.mxu0 0
        %1125 = vmatprep.subr.bf16.mxu0 0
        %1126 = vmatpush1.bf16.msra.mxu0 0
        %1127 = vmatprep.subr.bf16.mxu0 0
        %1128 = vmatpush1.bf16.msra.mxu0 0
        %1129 = vmatprep.subr.bf16.mxu0 0
        %1130 = vmatpush1.bf16.msra.mxu0 0
        %1131 = vmatprep.subr.bf16.mxu0 0
        %1132 = vmatpush1.bf16.msra.mxu0 0
        %1133 = vmatprep.subr.bf16.mxu0 0
        %1134 = vmatpush1.bf16.msra.mxu0 0
        %1135 = vmatprep.subr.bf16.mxu0 0
        %1136 = vmatpush1.bf16.msra.mxu0 0
        %1137 = vmatprep.subr.bf16.mxu0 0
        %1138 = vmatpush1.bf16.msra.mxu0 0
        %1139 = vmatprep.mubr.bf16.mxu0 0
        %1140 = vmatmul.mubr.bf16.gmra.mrb[0].mxu0 %v1039
        %v1141 = vpop.f32.mrb[0].mxu0
        %v1142 = vadd.f32 0.0, %v1141
        %v1143 = vpop.f32.mrb[0].mxu0
        %v1144 = vpop.f32.mrb[0].mxu0
        %v1145 = vadd.f32 0.0, %v1144
        %v1146 = vpop.f32.mrb[0].mxu0
        %1147 = vmatprep.mubr.bf16.mxu0 0
        %1148 = vmatmul.mubr.bf16.gmra.mrb[0].mxu0 %v1040
        %v1149 = vpop.f32.mrb[0].mxu0
        %v1150 = vadd.f32 0.0, %v1149
        %v1151 = vpop.f32.mrb[0].mxu0
        %v1152 = vpop.f32.mrb[0].mxu0
        %v1153 = vadd.f32 0.0, %v1152
        %v1154 = vpop.f32.mrb[0].mxu0
        %1155 = vmatprep.mubr.bf16.mxu0 0
        %1156 = vmatmul.mubr.bf16.gmra.mrb[0].mxu0 %v1041
        %v1157 = vpop.f32.mrb[0].mxu0
        %v1158 = vadd.f32 0.0, %v1157
        %v1159 = vpop.f32.mrb[0].mxu0
        %v1160 = vpop.f32.mrb[0].mxu0
        %v1161 = vadd.f32 0.0, %v1160
        %v1162 = vpop.f32.mrb[0].mxu0
        %1163 = vmatprep.mubr.bf16.mxu0 0
        %1164 = vmatmul.mubr.bf16.gmra.mrb[0].mxu0 %v1042
        %v1165 = vpop.f32.mrb[0].mxu0
        %v1166 = vadd.f32 0.0, %v1165
        %v1167 = vpop.f32.mrb[0].mxu0
        %v1168 = vpop.f32.mrb[0].mxu0
        %v1169 = vadd.f32 0.0, %v1168
        %v1170 = vpop.f32.mrb[0].mxu0
        %1171 = vdwg.mxu0
        %1172 = vst [vmem:[%s409] sm:$0xff] %v1142
        %1173 = vst [vmem:[%s409 + $0x8] sm:$0xff] %v1145
        %1174 = vst [vmem:[%s409 + $0x10] sm:$0xff] %v1150
        %1175 = vst [vmem:[%s409 + $0x18] sm:$0xff] %v1153
        %1176 = vst [vmem:[%s409 + $0x20] sm:$0xff] %v1158
        %1177 = vst [vmem:[%s409 + $0x28] sm:$0xff] %v1161
        %1178 = vst [vmem:[%s409 + $0x30] sm:$0xff] %v1166
        %1179 = vst [vmem:[%s409 + $0x38] sm:$0xff] %v1169
        %v1180 = vld [vmem:[#allocation6] sm:$0xff]
        %v1181 = vld [vmem:[#allocation6 + $0x8] sm:$0xff]
        %v1182 = vld [vmem:[#allocation7] sm:$0xff]
        %v1183 = vld [vmem:[#allocation7 + $0x8] sm:$0xff]
        %v1185 = vlaneseq
        %v1186 = vshrl.u32 %v1185, 7
        %v1187 = vsub.s32 0, %v1186
        %v1188 = vrot.slane %v469, %v1187
        %v1190 = vmul.f32 %v1188, %v1180
        %v1191 = vmul.f32 %v1188, %v1181
        %v1192 = vld [vmem:[%s409] sm:$0xff]
        %v1193 = vld [vmem:[%s409 + $0x8] sm:$0xff]
        %v1195 = vlaneseq
        %v1196 = vshrl.u32 %v1195, 7
        %v1197 = vsub.s32 0, %v1196
        %v1198 = vrot.slane %v470, %v1197
        %v1200 = vmul.f32 %v1198, %v1192
        %v1201 = vmul.f32 %v1198, %v1193
        %v1202 = vadd.f32 %v1190, %v1200
        %v1203 = vadd.f32 %v1191, %v1201
        %1204 = vst [vmem:[%s409] sm:$0xff] %v1202
        %1205 = vst [vmem:[%s409 + $0x8] sm:$0xff] %v1203
        %v1206 = vld [vmem:[#allocation9] sm:$0xff]
        %v1207 = vunpack.c.l.bf16 %v1206
        %v1208 = vunpack.c.h.bf16 %v1206
        %v1209 = vadd.f32 %v1182, %v1207
        %v1210 = vadd.f32 %v1183, %v1208
        %v1211 = vmul.f32 %v1188, %v1202
        %v1212 = vmul.f32 %v1188, %v1203
        %s1213 = scalar_lea.vmem %s409, 16 [#allocation10]
        %v1214 = vld [vmem:[%s1213] sm:$0xff]
        %v1215 = vld [vmem:[%s1213 + $0x8] sm:$0xff]
        %v1216 = vmul.f32 %v1198, %v1214
        %v1217 = vmul.f32 %v1198, %v1215
        %v1218 = vadd.f32 %v1211, %v1216
        %v1219 = vadd.f32 %v1212, %v1217
        %1220 = vst [vmem:[%s1213] sm:$0xff] %v1218
        %1221 = vst [vmem:[%s1213 + $0x8] sm:$0xff] %v1219
        %v1222 = vld [vmem:[%s856] sm:$0xff]
        %v1223 = vunpack.c.l.bf16 %v1222
        %v1224 = vunpack.c.h.bf16 %v1222
        %v1225 = vadd.f32 %v1209, %v1223
        %v1226 = vadd.f32 %v1210, %v1224
        %v1227 = vmul.f32 %v1188, %v1218
        %v1228 = vmul.f32 %v1188, %v1219
        %s1229 = scalar_lea.vmem %s409, 32 [#allocation10]
        %v1230 = vld [vmem:[%s1229] sm:$0xff]
        %v1231 = vld [vmem:[%s1229 + $0x8] sm:$0xff]
        %v1232 = vmul.f32 %v1198, %v1230
        %v1233 = vmul.f32 %v1198, %v1231
        %v1234 = vadd.f32 %v1227, %v1232
        %v1235 = vadd.f32 %v1228, %v1233
        %1236 = vst [vmem:[%s1229] sm:$0xff] %v1234
        %1237 = vst [vmem:[%s1229 + $0x8] sm:$0xff] %v1235
        %v1238 = vld [vmem:[%s943] sm:$0xff]
        %v1239 = vunpack.c.l.bf16 %v1238
        %v1240 = vunpack.c.h.bf16 %v1238
        %v1241 = vadd.f32 %v1225, %v1239
        %v1242 = vadd.f32 %v1226, %v1240
        %v1243 = vmul.f32 %v1188, %v1234
        %v1244 = vmul.f32 %v1188, %v1235
        %s1245 = scalar_lea.vmem %s409, 48 [#allocation10]
        %v1246 = vld [vmem:[%s1245] sm:$0xff]
        %v1247 = vld [vmem:[%s1245 + $0x8] sm:$0xff]
        %v1248 = vmul.f32 %v1198, %v1246
        %v1249 = vmul.f32 %v1198, %v1247
        %v1250 = vadd.f32 %v1243, %v1248
        %v1251 = vadd.f32 %v1244, %v1249
        %1252 = vst [vmem:[%s1245] sm:$0xff] %v1250
        %1253 = vst [vmem:[%s1245 + $0x8] sm:$0xff] %v1251
        %v1254 = vld [vmem:[%s1030] sm:$0xff]
        %v1255 = vunpack.c.l.bf16 %v1254
        %v1256 = vunpack.c.h.bf16 %v1254
        %v1257 = vadd.f32 %v1241, %v1255
        %v1258 = vadd.f32 %v1242, %v1256
        %1259 = vst [vmem:[#allocation6] sm:$0xff] %v1250
        %1260 = vst [vmem:[#allocation6 + $0x8] sm:$0xff] %v1251
        %1261 = vst [vmem:[#allocation7] sm:$0xff] %v1257
        %1262 = vst [vmem:[#allocation7 + $0x8] sm:$0xff] %v1258
        %p1263 = scmp.eq.s32.totalorder %s33, 1
        // Predicated region
        $region53: #{tpu_custom_call.1} parent=47 // pred_check
          %p1264 = pneg %p1263
        $region54: #{tpu_custom_call.1} parent=47 // pred_check_branch
          %1266 = sbr.rel (%p1264) target = $region56
        $region55: #{tpu_custom_call.1} parent=47 // pred_region
          %v1267 = vld [vmem:[#allocation2] sm:$0xff]
          %v1268 = vunpack.c.l.bf16 %v1267
          %v1269 = vunpack.c.h.bf16 %v1267
          %1270 = vst [vmem:[#allocation12] sm:$0xff] %v1268
          %1271 = vst [vmem:[#allocation12 + $0x8] sm:$0xff] %v1269
          %v1272 = vld [vmem:[#allocation3] sm:$0xff]
          %v1273 = vld [vmem:[#allocation3 + $0x8] sm:$0xff]
          %1274 = vst [vmem:[#allocation14] sm:$0xff] %v1272
          %1275 = vst [vmem:[#allocation14 + $0x8] sm:$0xff] %v1273
          %v1276 = vld [vmem:[#allocation6] sm:$0xff]
          %v1277 = vld [vmem:[#allocation6 + $0x8] sm:$0xff]
          %1278 = vst [vmem:[#allocation15] sm:$0xff] %v1276
          %1279 = vst [vmem:[#allocation15 + $0x8] sm:$0xff] %v1277
          %v1280 = vld [vmem:[#allocation7] sm:$0xff]
          %v1281 = vld [vmem:[#allocation7 + $0x8] sm:$0xff]
          %1282 = vst [vmem:[#allocation17] sm:$0xff] %v1280
          %1283 = vst [vmem:[#allocation17 + $0x8] sm:$0xff] %v1281
        $region56: #{tpu_custom_call.1} parent=47 // pred_fallthru
          _
        %s1284 = sand.u32 %s208, 1
        %s1285 = scalar_lea.sflag [#allocation11], %s1284
        %s1286 = sand.u32 %s208, 1
        %s1287 = smul.addr %s1286, 64
        %s1288 = scalar_lea.vmem [#allocation10], %s1287
        // Predicated region
        $region57: #{tpu_custom_call.1} parent=47 // pred_check
          %p1289 = pneg %p218
        $region58: #{tpu_custom_call.1} parent=47 // pred_check_branch
          %1291 = sbr.rel (%p1289) target = $region60
        $region59: #{tpu_custom_call.1} parent=47 // pred_region
          %s1292 = smul.u32 %s32, 2
          %s1293 = sadd.s32 %s1292, %s33
          %s1294 = smul.u32 8, %s1293
          %s1296 = ssub.s32 1024, 1024
          %1297 = vsyncadd %s1285, %s1296
          %s1298 = smul.addr %s1294, 128
          %s1299 = scalar_lea.hbm %s7, %s1298
          %s1300 = sshll.u32 %s1288, 4
          %s1301 = int_to_ptr.vmem [resolvable:$true] %s1300
          %1306 = dma.vmem_to_hbm [thread:$0]  %s1301, 1024, %s1299, %s1285, 128, 128, 8
        $region60: #{tpu_custom_call.1} parent=47 // pred_fallthru
          _
        // Predicated region
        $region61: #{tpu_custom_call.1} parent=47 // pred_check
          %p1307 = pneg %p244
        $region62: #{tpu_custom_call.1} parent=47 // pred_check_branch
          %1309 = sbr.rel (%p1307) target = $region64
        $region63: #{tpu_custom_call.1} parent=47 // pred_region
          %s1310 = smul.u32 2, %s32
          %s1312 = ssub.s32 256, 256
          %1313 = vsyncadd [#allocation13], %s1312
          %s1314 = smul.addr %s1310, 128
          %s1315 = scalar_lea.hbm %s8, %s1314
          %s1316 = sshll.u32 [#allocation12], 4
          %s1317 = int_to_ptr.vmem [resolvable:$true] %s1316
          %1322 = dma.vmem_to_hbm [thread:$0]  %s1317, 256, %s1315, [#allocation13], 128, 128, 8
        $region64: #{tpu_custom_call.1} parent=47 // pred_fallthru
          _
        // Predicated region
        $region65: #{tpu_custom_call.1} parent=47 // pred_check
          %p1323 = pneg %p270
        $region66: #{tpu_custom_call.1} parent=47 // pred_check_branch
          %1325 = sbr.rel (%p1323) target = $region68
        $region67: #{tpu_custom_call.1} parent=47 // pred_region
          %s1326 = smul.u32 2, %s32
          %s1328 = ssub.s32 256, 256
          %1329 = vsyncadd [#allocation13], %s1328
          %s1330 = smul.addr %s1326, 128
          %s1331 = scalar_lea.hbm %s9, %s1330
          %s1332 = sshll.u32 [#allocation14], 4
          %s1333 = int_to_ptr.vmem [resolvable:$true] %s1332
          %1338 = dma.vmem_to_hbm [thread:$0]  %s1333, 256, %s1331, [#allocation13], 128, 128, 8
        $region68: #{tpu_custom_call.1} parent=47 // pred_fallthru
          _
        // Predicated region
        $region69: #{tpu_custom_call.1} parent=47 // pred_check
          %p1339 = pneg %p296
        $region70: #{tpu_custom_call.1} parent=47 // pred_check_branch
          %1341 = sbr.rel (%p1339) target = $region72
        $region71: #{tpu_custom_call.1} parent=47 // pred_region
          %s1342 = smul.u32 2, %s32
          %s1344 = ssub.s32 256, 256
          %1345 = vsyncadd [#allocation16], %s1344
          %s1346 = smul.addr %s1342, 128
          %s1347 = scalar_lea.hbm %s10, %s1346
          %s1348 = sshll.u32 [#allocation15], 4
          %s1349 = int_to_ptr.vmem [resolvable:$true] %s1348
          %1354 = dma.vmem_to_hbm [thread:$0]  %s1349, 256, %s1347, [#allocation16], 128, 128, 8
        $region72: #{tpu_custom_call.1} parent=47 // pred_fallthru
          _
        // Predicated region
        $region73: #{tpu_custom_call.1} parent=47 // pred_check
          %p1355 = pneg %p322
        $region74: #{tpu_custom_call.1} parent=47 // pred_check_branch
          %1357 = sbr.rel (%p1355) target = $region76
        $region75: #{tpu_custom_call.1} parent=47 // pred_region
          %s1358 = smul.u32 2, %s32
          %s1360 = ssub.s32 256, 256
          %1361 = vsyncadd [#allocation16], %s1360
          %s1362 = smul.addr %s1358, 128
          %s1363 = scalar_lea.hbm %s11, %s1362
          %s1364 = sshll.u32 [#allocation17], 4
          %s1365 = int_to_ptr.vmem [resolvable:$true] %s1364
          %1370 = dma.vmem_to_hbm [thread:$0]  %s1365, 256, %s1363, [#allocation16], 128, 128, 8
        $region76: #{tpu_custom_call.1} parent=47 // pred_fallthru
          _
        // Predicated region
        $region77: #{tpu_custom_call.1} parent=47 // pred_check
          %p1371 = pneg %p244
        $region78: #{tpu_custom_call.1} parent=47 // pred_check_branch
          %1373 = sbr.rel (%p1371) target = $region80
        $region79: #{tpu_custom_call.1} parent=47 // pred_region
          %1374 = dma.done [#allocation13], 256
        $region80: #{tpu_custom_call.1} parent=47 // pred_fallthru
          _
        // Predicated region
        $region81: #{tpu_custom_call.1} parent=47 // pred_check
          %p1375 = pneg %p270
        $region82: #{tpu_custom_call.1} parent=47 // pred_check_branch
          %1377 = sbr.rel (%p1375) target = $region84
        $region83: #{tpu_custom_call.1} parent=47 // pred_region
          %1378 = dma.done [#allocation13], 256
        $region84: #{tpu_custom_call.1} parent=47 // pred_fallthru
          _
        // Predicated region
        $region85: #{tpu_custom_call.1} parent=47 // pred_check
          %p1379 = pneg %p296
        $region86: #{tpu_custom_call.1} parent=47 // pred_check_branch
          %1381 = sbr.rel (%p1379) target = $region88
        $region87: #{tpu_custom_call.1} parent=47 // pred_region
          %1382 = dma.done [#allocation16], 256
        $region88: #{tpu_custom_call.1} parent=47 // pred_fallthru
          _
        // Predicated region
        $region89: #{tpu_custom_call.1} parent=47 // pred_check
          %p1383 = pneg %p322
        $region90: #{tpu_custom_call.1} parent=47 // pred_check_branch
          %1385 = sbr.rel (%p1383) target = $region92
        $region91: #{tpu_custom_call.1} parent=47 // pred_region
          %1386 = dma.done [#allocation16], 256
        $region92: #{tpu_custom_call.1} parent=47 // pred_fallthru
          _
      $region48: #{tpu_custom_call.1} parent=5 // pred_fallthru
        _
      %p1387 = scmp.le.s32.totalorder 2, %s23
      // Predicated region
      $region93: #{tpu_custom_call.1} parent=5 // pred_check
        %p1388 = pneg %p1387
      $region94: #{tpu_custom_call.1} parent=5 // pred_check_branch
        %1390 = sbr.rel (%p1388) target = $region96
      $region95: #{tpu_custom_call.1} parent=5 // pred_region
        %s1391 = ssub.s32 %s23, 2
        // Predicated region
        $region97: #{tpu_custom_call.1} parent=95 // pred_check
          %p1392 = pneg %p224
        $region98: #{tpu_custom_call.1} parent=95 // pred_check_branch
          %1394 = sbr.rel (%p1392) target = $region100
        $region99: #{tpu_custom_call.1} parent=95 // pred_region
          %s1395 = sand.u32 %s209, 1
          %s1396 = scalar_lea.sflag [#allocation11], %s1395
          %s1397 = sand.u32 %s209, 1
          %s1398 = smul.addr %s1397, 64
          %s1399 = scalar_lea.vmem [#allocation10], %s1398
          %1400 = dma.done %s1396, 1024
        $region100: #{tpu_custom_call.1} parent=95 // pred_fallthru
          _
      $region96: #{tpu_custom_call.1} parent=5 // pred_fallthru
        _
    $region6: #{tpu_custom_call.1} parent=1 // loop_footer
      %s27 = sadd.s32 1, %s23
    $region7: #{tpu_custom_call.1} parent=1 // loop_footer_branch
      %22 = sbr.rel target = $region3
    $region8: #{tpu_custom_call.1} parent=1 // loop_exit
      _
    %1401 = vsyncpa [#allocation11], 1
    %s1402 = scalar_lea.sflag [#allocation11], 1
    %1403 = vsyncpa %s1402, 1
    %1404 = vsyncpa [#allocation13], 1
    %1405 = vsyncpa [#allocation16], 1

</llo_original>
